<compile_context>
chip_gen: v6e
topology: v6e:2x2x1
jax: 0.10.0
libtpu: 0.0.40
codegen_flags: <defaults>
</compile_context>

<pallas_src>
import functools

import jax
import jax.numpy as jnp
from jax.experimental import pallas as pl
from jax.experimental.pallas import tpu as pltpu

GLOBAL_PARAMS = 31            # hidden width from the PyTorch module
LAYERS = 30                   # number of tanh-activated linears
NUM_LINEAR = LAYERS + 1       # 31 linear layers total (last one has no tanh)
NG = 4                        # batch groups packed along the 128 lanes
G = 32                        # lanes per group (31 real + 1 zero pad)
PAD = NG * G                  # 128-wide lane-aligned activation layout


def mlp_kernel(x_ref, w0_ref, w_ref, b_ref, o_ref):
    """Whole 31-layer MLP on one packed batch tile.

    x_ref : (TB, NG*d_in)    packed inputs (4 samples per row, one per lane group)
    w0_ref: (NG*d_in, 128)   block-structured first-layer weight
    w_ref : (30, 128, 128)   block-diagonal stacked weights for layers 1..30
    b_ref : (31, 1, 128)     lane-tiled biases for all 31 layers
    o_ref : (TB, 128)        packed outputs (group g lanes [g*32, g*32+d_out))
    """
    # Layer 0: real-K dot, one weight push, one bias broadcast, one tanh.
    h = jnp.dot(x_ref[...], w0_ref[...], preferred_element_type=jnp.float32)
    h = jnp.tanh(h + b_ref[0])

    # Fully unrolled static layer loop: static leading-axis weight slices,
    # exactly one (TB,128)x(128,128) dot (one RHS push) per layer.
    for layer in range(1, NUM_LINEAR):
        h = jnp.dot(h, w_ref[layer - 1], preferred_element_type=jnp.float32)
        h = h + b_ref[layer]
        if layer < NUM_LINEAR - 1:      # tanh on all but the final linear
            h = jnp.tanh(h)

    o_ref[...] = h


def pack_params(w0, b0, wh, bh, wl, bl):
    """Zero-pad and block-diagonal-pack all 31 layers into lane-aligned slabs."""
    H = GLOBAL_PARAMS
    d_in = w0.shape[0]
    d_out = wl.shape[1]
    assert d_out <= G, "output width must fit in one 32-lane group"

    # Pad input features to a sublane-friendly multiple of 8.
    d_in_p = max(8, -(-d_in // 8) * 8)

    # First layer: block g maps input lanes [g*d_in_p, (g+1)*d_in_p) of the
    # packed input row to output lanes [g*G, g*G + H).
    W0 = jnp.zeros((NG * d_in_p, PAD), jnp.float32)
    for g in range(NG):
        W0 = W0.at[g * d_in_p:g * d_in_p + d_in, g * G:g * G + H].set(w0)

    # Layers 1..30: block-diagonal 128x128 (four copies of the 32-padded block).
    W = jnp.zeros((NUM_LINEAR - 1, PAD, PAD), jnp.float32)
    for g in range(NG):
        s = g * G
        W = W.at[:LAYERS - 1, s:s + H, s:s + H].set(wh)          # 29 hidden layers
        W = W.at[LAYERS - 1, s:s + H, s:s + d_out].set(wl)       # final linear

    # Biases: pad each layer's bias to 32 lanes, tile 4x along the 128 lanes.
    Bias = jnp.zeros((NUM_LINEAR, 1, PAD), jnp.float32)
    for g in range(NG):
        s = g * G
        Bias = Bias.at[0, 0, s:s + H].set(b0)
        Bias = Bias.at[1:LAYERS, 0, s:s + H].set(bh)
        Bias = Bias.at[LAYERS, 0, s:s + d_out].set(bl)

    return W0, W, Bias, d_in_p


def mlp_forward(x, w0, b0, wh, bh, wl, bl, *, tile_rows=256):
    """x: (B, d_in) -> (B, d_out), matching the PyTorch Net forward."""
    B, d_in = x.shape
    d_out = wl.shape[1]

    W0, W, Bias, d_in_p = pack_params(w0, b0, wh, bh, wl, bl)

    # Pack 4 samples per activation row (one per 32-lane group).
    rows = -(-B // NG)
    tile_rows = max(8, (tile_rows // 8) * 8)
    tile = min(tile_rows, -(-rows // 8) * 8)          # clamp for small batches
    rows_pad = -(-rows // tile) * tile
    # NOTE(v7x): for real batch sizes keep rows_pad // tile >= 2 so both
    # TensorCores get grid steps under dimension_semantics=("parallel",).

    xb = jnp.zeros((rows_pad * NG, d_in_p), jnp.float32).at[:B, :d_in].set(x)
    x_packed = xb.reshape(rows_pad, NG * d_in_p)

    # Explicit VMEM budget: double-buffered weights/bias + in/out tiles + headroom.
    vmem_bytes = 2 * 4 * (W.size + W0.size + Bias.size
                          + tile * (NG * d_in_p) + tile * PAD) + (8 << 20)
    vmem_bytes = int(min(max(vmem_bytes, 32 << 20), 48 << 20))

    grid = (rows_pad // tile,)
    out_packed = pl.pallas_call(
        mlp_kernel,
        out_shape=jax.ShapeDtypeStruct((rows_pad, PAD), jnp.float32),
        grid_spec=pltpu.PrefetchScalarGridSpec(
            num_scalar_prefetch=0,
            grid=grid,
            in_specs=[
                # Packed batch tile: auto double-buffered over the grid.
                pl.BlockSpec((tile, NG * d_in_p), lambda i: (i, 0)),
                # Grid-invariant weight/bias slabs (constant index -> DMA'd once).
                pl.BlockSpec(W0.shape, lambda i: (0, 0)),
                pl.BlockSpec(W.shape, lambda i: (0, 0, 0)),
                pl.BlockSpec(Bias.shape, lambda i: (0, 0, 0)),
            ],
            out_specs=pl.BlockSpec((tile, PAD), lambda i: (i, 0)),
        ),
        compiler_params=pltpu.CompilerParams(
            dimension_semantics=("parallel",),
            vmem_limit_bytes=vmem_bytes),
    )(x_packed, W0, W, Bias)

    # Unpack: split the 128 lanes back into 4 groups of 32 -> flat batch.
    out_full = out_packed.reshape(rows_pad, NG, G).reshape(rows_pad * NG, G)
    return out_full[:B, :d_out]


def make_params(key, input_params, output_params):
    H = GLOBAL_PARAMS
    ks = jax.random.split(key, 6)

    # Deterministic synthetic init (uniform, roughly torch's fan-in scaling).
    def u(k, shape, fan_in):
        bound = 1.0 / jnp.sqrt(jnp.float32(fan_in))
        return jax.random.uniform(k, shape, jnp.float32, -bound, bound)

    w0 = u(ks[0], (input_params, H), input_params)
    b0 = u(ks[1], (H,), input_params)
    wh = u(ks[2], (LAYERS - 1, H, H), H)
    bh = u(ks[3], (LAYERS - 1, H), H)
    wl = u(ks[4], (H, output_params), H)
    bl = u(ks[5], (output_params,), H)
    return w0, b0, wh, bh, wl, bl


def reference_forward(x, w0, b0, wh, bh, wl, bl):
    dot = functools.partial(jnp.matmul, precision=jax.lax.Precision.HIGHEST)
    h = jnp.tanh(dot(x, w0) + b0)
    for i in range(wh.shape[0]):
        h = jnp.tanh(dot(h, wh[i]) + bh[i])
    return dot(h, wl) + bl


if __name__ == "__main__":
    input_params = 16
    output_params = 8
    batch = 16   # packs into 4 lane-groups -> 4 rows, padded to one (8, 128) tile

    key = jax.random.PRNGKey(0)
    kx, kp = jax.random.split(key)
    x = jax.random.normal(kx, (batch, input_params), jnp.float32)
    params = make_params(kp, input_params, output_params)

    out = mlp_forward(x, *params)
    out = jax.block_until_ready(out)

    ref = reference_forward(x, *params)
    assert out.shape == (batch, output_params)
    assert jnp.allclose(out, ref, atol=1e-4, rtol=1e-4), float(
        jnp.max(jnp.abs(out - ref)))

    print("KERNEL_OK")
</pallas_src>

<mosaic_0001>
module attributes {stable_mosaic.version = 11 : i64} {
  func.func @mlp_kernel(%arg0: i32, %arg1: memref<8x64xf32, #tpu.memory_space<vmem>>, %arg2: memref<64x128xf32, #tpu.memory_space<vmem>>, %arg3: memref<30x128x128xf32, #tpu.memory_space<vmem>>, %arg4: memref<31x1x128xf32, #tpu.memory_space<vmem>>, %arg5: memref<8x128xf32, #tpu.memory_space<vmem>>) attributes {dimension_semantics = [#tpu.dimension_semantics<parallel>], iteration_bounds = array<i64: 1>, scalar_prefetch = 0 : i64, scratch_operands = 0 : i64, tpu.core_type = #tpu.core_type<tc>, window_params = [{transform_indices = @transform_0, window_bounds = array<i64: 8, 64>}, {pipeline_mode = #tpu.pipeline_mode<synchronous>, transform_indices = @transform_1, window_bounds = array<i64: 64, 128>}, {pipeline_mode = #tpu.pipeline_mode<synchronous>, transform_indices = @transform_2, window_bounds = array<i64: 30, 128, 128>}, {pipeline_mode = #tpu.pipeline_mode<synchronous>, transform_indices = @transform_3, window_bounds = array<i64: 31, 1, 128>}, {transform_indices = @transform_4, window_bounds = array<i64: 8, 128>}]} {
    %c0 = arith.constant 0 : index
    %c0_0 = arith.constant 0 : index
    %0 = vector.load %arg1[%c0, %c0_0] : memref<8x64xf32, #tpu.memory_space<vmem>>, vector<8x64xf32>
    %c0_1 = arith.constant 0 : index
    %c0_2 = arith.constant 0 : index
    %1 = vector.load %arg2[%c0_1, %c0_2] : memref<64x128xf32, #tpu.memory_space<vmem>>, vector<64x128xf32>
    %cst = arith.constant dense<0.000000e+00> : vector<8x128xf32>
    %2 = tpu.matmul %0, %1, %cst {dimension_numbers = #tpu.dot_dimension_numbers<[1], [0], [0], [1], [0, 0, 1, 1], [], []>} : vector<8x64xf32>, vector<64x128xf32>, vector<8x128xf32> -> vector<8x128xf32>
    %c0_3 = arith.constant 0 : index
    %c0_4 = arith.constant 0 : index
    %c0_5 = arith.constant 0 : index
    %3 = vector.load %arg4[%c0_3, %c0_4, %c0_5] : memref<31x1x128xf32, #tpu.memory_space<vmem>>, vector<1x1x128xf32>
    %4 = vector.shape_cast %3 : vector<1x1x128xf32> to vector<1x128xf32>
    %5 = vector.broadcast %4 : vector<1x128xf32> to vector<8x128xf32>
    %6 = arith.addf %2, %5 : vector<8x128xf32>
    %7 = math.tanh %6 : vector<8x128xf32>
    %c0_6 = arith.constant 0 : index
    %c0_7 = arith.constant 0 : index
    %c0_8 = arith.constant 0 : index
    %8 = vector.load %arg3[%c0_6, %c0_7, %c0_8] : memref<30x128x128xf32, #tpu.memory_space<vmem>>, vector<1x128x128xf32>
    %9 = vector.shape_cast %8 : vector<1x128x128xf32> to vector<128x128xf32>
    %cst_9 = arith.constant dense<0.000000e+00> : vector<8x128xf32>
    %10 = tpu.matmul %7, %9, %cst_9 {dimension_numbers = #tpu.dot_dimension_numbers<[1], [0], [0], [1], [0, 0, 1, 1], [], []>} : vector<8x128xf32>, vector<128x128xf32>, vector<8x128xf32> -> vector<8x128xf32>
    %c1 = arith.constant 1 : index
    %c0_10 = arith.constant 0 : index
    %c0_11 = arith.constant 0 : index
    %11 = vector.load %arg4[%c1, %c0_10, %c0_11] : memref<31x1x128xf32, #tpu.memory_space<vmem>>, vector<1x1x128xf32>
    %12 = vector.shape_cast %11 : vector<1x1x128xf32> to vector<1x128xf32>
    %13 = vector.broadcast %12 : vector<1x128xf32> to vector<8x128xf32>
    %14 = arith.addf %10, %13 : vector<8x128xf32>
    %15 = math.tanh %14 : vector<8x128xf32>
    %c1_12 = arith.constant 1 : index
    %c0_13 = arith.constant 0 : index
    %c0_14 = arith.constant 0 : index
    %16 = vector.load %arg3[%c1_12, %c0_13, %c0_14] : memref<30x128x128xf32, #tpu.memory_space<vmem>>, vector<1x128x128xf32>
    %17 = vector.shape_cast %16 : vector<1x128x128xf32> to vector<128x128xf32>
    %cst_15 = arith.constant dense<0.000000e+00> : vector<8x128xf32>
    %18 = tpu.matmul %15, %17, %cst_15 {dimension_numbers = #tpu.dot_dimension_numbers<[1], [0], [0], [1], [0, 0, 1, 1], [], []>} : vector<8x128xf32>, vector<128x128xf32>, vector<8x128xf32> -> vector<8x128xf32>
    %c2 = arith.constant 2 : index
    %c0_16 = arith.constant 0 : index
    %c0_17 = arith.constant 0 : index
    %19 = vector.load %arg4[%c2, %c0_16, %c0_17] : memref<31x1x128xf32, #tpu.memory_space<vmem>>, vector<1x1x128xf32>
    %20 = vector.shape_cast %19 : vector<1x1x128xf32> to vector<1x128xf32>
    %21 = vector.broadcast %20 : vector<1x128xf32> to vector<8x128xf32>
    %22 = arith.addf %18, %21 : vector<8x128xf32>
    %23 = math.tanh %22 : vector<8x128xf32>
    %c2_18 = arith.constant 2 : index
    %c0_19 = arith.constant 0 : index
    %c0_20 = arith.constant 0 : index
    %24 = vector.load %arg3[%c2_18, %c0_19, %c0_20] : memref<30x128x128xf32, #tpu.memory_space<vmem>>, vector<1x128x128xf32>
    %25 = vector.shape_cast %24 : vector<1x128x128xf32> to vector<128x128xf32>
    %cst_21 = arith.constant dense<0.000000e+00> : vector<8x128xf32>
    %26 = tpu.matmul %23, %25, %cst_21 {dimension_numbers = #tpu.dot_dimension_numbers<[1], [0], [0], [1], [0, 0, 1, 1], [], []>} : vector<8x128xf32>, vector<128x128xf32>, vector<8x128xf32> -> vector<8x128xf32>
    %c3 = arith.constant 3 : index
    %c0_22 = arith.constant 0 : index
    %c0_23 = arith.constant 0 : index
    %27 = vector.load %arg4[%c3, %c0_22, %c0_23] : memref<31x1x128xf32, #tpu.memory_space<vmem>>, vector<1x1x128xf32>
    %28 = vector.shape_cast %27 : vector<1x1x128xf32> to vector<1x128xf32>
    %29 = vector.broadcast %28 : vector<1x128xf32> to vector<8x128xf32>
    %30 = arith.addf %26, %29 : vector<8x128xf32>
    %31 = math.tanh %30 : vector<8x128xf32>
    %c3_24 = arith.constant 3 : index
    %c0_25 = arith.constant 0 : index
    %c0_26 = arith.constant 0 : index
    %32 = vector.load %arg3[%c3_24, %c0_25, %c0_26] : memref<30x128x128xf32, #tpu.memory_space<vmem>>, vector<1x128x128xf32>
    %33 = vector.shape_cast %32 : vector<1x128x128xf32> to vector<128x128xf32>
    %cst_27 = arith.constant dense<0.000000e+00> : vector<8x128xf32>
    %34 = tpu.matmul %31, %33, %cst_27 {dimension_numbers = #tpu.dot_dimension_numbers<[1], [0], [0], [1], [0, 0, 1, 1], [], []>} : vector<8x128xf32>, vector<128x128xf32>, vector<8x128xf32> -> vector<8x128xf32>
    %c4 = arith.constant 4 : index
    %c0_28 = arith.constant 0 : index
    %c0_29 = arith.constant 0 : index
    %35 = vector.load %arg4[%c4, %c0_28, %c0_29] : memref<31x1x128xf32, #tpu.memory_space<vmem>>, vector<1x1x128xf32>
    %36 = vector.shape_cast %35 : vector<1x1x128xf32> to vector<1x128xf32>
    %37 = vector.broadcast %36 : vector<1x128xf32> to vector<8x128xf32>
    %38 = arith.addf %34, %37 : vector<8x128xf32>
    %39 = math.tanh %38 : vector<8x128xf32>
    %c4_30 = arith.constant 4 : index
    %c0_31 = arith.constant 0 : index
    %c0_32 = arith.constant 0 : index
    %40 = vector.load %arg3[%c4_30, %c0_31, %c0_32] : memref<30x128x128xf32, #tpu.memory_space<vmem>>, vector<1x128x128xf32>
    %41 = vector.shape_cast %40 : vector<1x128x128xf32> to vector<128x128xf32>
    %cst_33 = arith.constant dense<0.000000e+00> : vector<8x128xf32>
    %42 = tpu.matmul %39, %41, %cst_33 {dimension_numbers = #tpu.dot_dimension_numbers<[1], [0], [0], [1], [0, 0, 1, 1], [], []>} : vector<8x128xf32>, vector<128x128xf32>, vector<8x128xf32> -> vector<8x128xf32>
    %c5 = arith.constant 5 : index
    %c0_34 = arith.constant 0 : index
    %c0_35 = arith.constant 0 : index
    %43 = vector.load %arg4[%c5, %c0_34, %c0_35] : memref<31x1x128xf32, #tpu.memory_space<vmem>>, vector<1x1x128xf32>
    %44 = vector.shape_cast %43 : vector<1x1x128xf32> to vector<1x128xf32>
    %45 = vector.broadcast %44 : vector<1x128xf32> to vector<8x128xf32>
    %46 = arith.addf %42, %45 : vector<8x128xf32>
    %47 = math.tanh %46 : vector<8x128xf32>
    %c5_36 = arith.constant 5 : index
    %c0_37 = arith.constant 0 : index
    %c0_38 = arith.constant 0 : index
    %48 = vector.load %arg3[%c5_36, %c0_37, %c0_38] : memref<30x128x128xf32, #tpu.memory_space<vmem>>, vector<1x128x128xf32>
    %49 = vector.shape_cast %48 : vector<1x128x128xf32> to vector<128x128xf32>
    %cst_39 = arith.constant dense<0.000000e+00> : vector<8x128xf32>
    %50 = tpu.matmul %47, %49, %cst_39 {dimension_numbers = #tpu.dot_dimension_numbers<[1], [0], [0], [1], [0, 0, 1, 1], [], []>} : vector<8x128xf32>, vector<128x128xf32>, vector<8x128xf32> -> vector<8x128xf32>
    %c6 = arith.constant 6 : index
    %c0_40 = arith.constant 0 : index
    %c0_41 = arith.constant 0 : index
    %51 = vector.load %arg4[%c6, %c0_40, %c0_41] : memref<31x1x128xf32, #tpu.memory_space<vmem>>, vector<1x1x128xf32>
    %52 = vector.shape_cast %51 : vector<1x1x128xf32> to vector<1x128xf32>
    %53 = vector.broadcast %52 : vector<1x128xf32> to vector<8x128xf32>
    %54 = arith.addf %50, %53 : vector<8x128xf32>
    %55 = math.tanh %54 : vector<8x128xf32>
    %c6_42 = arith.constant 6 : index
    %c0_43 = arith.constant 0 : index
    %c0_44 = arith.constant 0 : index
    %56 = vector.load %arg3[%c6_42, %c0_43, %c0_44] : memref<30x128x128xf32, #tpu.memory_space<vmem>>, vector<1x128x128xf32>
    %57 = vector.shape_cast %56 : vector<1x128x128xf32> to vector<128x128xf32>
    %cst_45 = arith.constant dense<0.000000e+00> : vector<8x128xf32>
    %58 = tpu.matmul %55, %57, %cst_45 {dimension_numbers = #tpu.dot_dimension_numbers<[1], [0], [0], [1], [0, 0, 1, 1], [], []>} : vector<8x128xf32>, vector<128x128xf32>, vector<8x128xf32> -> vector<8x128xf32>
    %c7 = arith.constant 7 : index
    %c0_46 = arith.constant 0 : index
    %c0_47 = arith.constant 0 : index
    %59 = vector.load %arg4[%c7, %c0_46, %c0_47] : memref<31x1x128xf32, #tpu.memory_space<vmem>>, vector<1x1x128xf32>
    %60 = vector.shape_cast %59 : vector<1x1x128xf32> to vector<1x128xf32>
    %61 = vector.broadcast %60 : vector<1x128xf32> to vector<8x128xf32>
    %62 = arith.addf %58, %61 : vector<8x128xf32>
    %63 = math.tanh %62 : vector<8x128xf32>
    %c7_48 = arith.constant 7 : index
    %c0_49 = arith.constant 0 : index
    %c0_50 = arith.constant 0 : index
    %64 = vector.load %arg3[%c7_48, %c0_49, %c0_50] : memref<30x128x128xf32, #tpu.memory_space<vmem>>, vector<1x128x128xf32>
    %65 = vector.shape_cast %64 : vector<1x128x128xf32> to vector<128x128xf32>
    %cst_51 = arith.constant dense<0.000000e+00> : vector<8x128xf32>
    %66 = tpu.matmul %63, %65, %cst_51 {dimension_numbers = #tpu.dot_dimension_numbers<[1], [0], [0], [1], [0, 0, 1, 1], [], []>} : vector<8x128xf32>, vector<128x128xf32>, vector<8x128xf32> -> vector<8x128xf32>
    %c8 = arith.constant 8 : index
    %c0_52 = arith.constant 0 : index
    %c0_53 = arith.constant 0 : index
    %67 = vector.load %arg4[%c8, %c0_52, %c0_53] : memref<31x1x128xf32, #tpu.memory_space<vmem>>, vector<1x1x128xf32>
    %68 = vector.shape_cast %67 : vector<1x1x128xf32> to vector<1x128xf32>
    %69 = vector.broadcast %68 : vector<1x128xf32> to vector<8x128xf32>
    %70 = arith.addf %66, %69 : vector<8x128xf32>
    %71 = math.tanh %70 : vector<8x128xf32>
    %c8_54 = arith.constant 8 : index
    %c0_55 = arith.constant 0 : index
    %c0_56 = arith.constant 0 : index
    %72 = vector.load %arg3[%c8_54, %c0_55, %c0_56] : memref<30x128x128xf32, #tpu.memory_space<vmem>>, vector<1x128x128xf32>
    %73 = vector.shape_cast %72 : vector<1x128x128xf32> to vector<128x128xf32>
    %cst_57 = arith.constant dense<0.000000e+00> : vector<8x128xf32>
    %74 = tpu.matmul %71, %73, %cst_57 {dimension_numbers = #tpu.dot_dimension_numbers<[1], [0], [0], [1], [0, 0, 1, 1], [], []>} : vector<8x128xf32>, vector<128x128xf32>, vector<8x128xf32> -> vector<8x128xf32>
    %c9 = arith.constant 9 : index
    %c0_58 = arith.constant 0 : index
    %c0_59 = arith.constant 0 : index
    %75 = vector.load %arg4[%c9, %c0_58, %c0_59] : memref<31x1x128xf32, #tpu.memory_space<vmem>>, vector<1x1x128xf32>
    %76 = vector.shape_cast %75 : vector<1x1x128xf32> to vector<1x128xf32>
    %77 = vector.broadcast %76 : vector<1x128xf32> to vector<8x128xf32>
    %78 = arith.addf %74, %77 : vector<8x128xf32>
    %79 = math.tanh %78 : vector<8x128xf32>
    %c9_60 = arith.constant 9 : index
    %c0_61 = arith.constant 0 : index
    %c0_62 = arith.constant 0 : index
    %80 = vector.load %arg3[%c9_60, %c0_61, %c0_62] : memref<30x128x128xf32, #tpu.memory_space<vmem>>, vector<1x128x128xf32>
    %81 = vector.shape_cast %80 : vector<1x128x128xf32> to vector<128x128xf32>
    %cst_63 = arith.constant dense<0.000000e+00> : vector<8x128xf32>
    %82 = tpu.matmul %79, %81, %cst_63 {dimension_numbers = #tpu.dot_dimension_numbers<[1], [0], [0], [1], [0, 0, 1, 1], [], []>} : vector<8x128xf32>, vector<128x128xf32>, vector<8x128xf32> -> vector<8x128xf32>
    %c10 = arith.constant 10 : index
    %c0_64 = arith.constant 0 : index
    %c0_65 = arith.constant 0 : index
    %83 = vector.load %arg4[%c10, %c0_64, %c0_65] : memref<31x1x128xf32, #tpu.memory_space<vmem>>, vector<1x1x128xf32>
    %84 = vector.shape_cast %83 : vector<1x1x128xf32> to vector<1x128xf32>
    %85 = vector.broadcast %84 : vector<1x128xf32> to vector<8x128xf32>
    %86 = arith.addf %82, %85 : vector<8x128xf32>
    %87 = math.tanh %86 : vector<8x128xf32>
    %c10_66 = arith.constant 10 : index
    %c0_67 = arith.constant 0 : index
    %c0_68 = arith.constant 0 : index
    %88 = vector.load %arg3[%c10_66, %c0_67, %c0_68] : memref<30x128x128xf32, #tpu.memory_space<vmem>>, vector<1x128x128xf32>
    %89 = vector.shape_cast %88 : vector<1x128x128xf32> to vector<128x128xf32>
    %cst_69 = arith.constant dense<0.000000e+00> : vector<8x128xf32>
    %90 = tpu.matmul %87, %89, %cst_69 {dimension_numbers = #tpu.dot_dimension_numbers<[1], [0], [0], [1], [0, 0, 1, 1], [], []>} : vector<8x128xf32>, vector<128x128xf32>, vector<8x128xf32> -> vector<8x128xf32>
    %c11 = arith.constant 11 : index
    %c0_70 = arith.constant 0 : index
    %c0_71 = arith.constant 0 : index
    %91 = vector.load %arg4[%c11, %c0_70, %c0_71] : memref<31x1x128xf32, #tpu.memory_space<vmem>>, vector<1x1x128xf32>
    %92 = vector.shape_cast %91 : vector<1x1x128xf32> to vector<1x128xf32>
    %93 = vector.broadcast %92 : vector<1x128xf32> to vector<8x128xf32>
    %94 = arith.addf %90, %93 : vector<8x128xf32>
    %95 = math.tanh %94 : vector<8x128xf32>
    %c11_72 = arith.constant 11 : index
    %c0_73 = arith.constant 0 : index
    %c0_74 = arith.constant 0 : index
    %96 = vector.load %arg3[%c11_72, %c0_73, %c0_74] : memref<30x128x128xf32, #tpu.memory_space<vmem>>, vector<1x128x128xf32>
    %97 = vector.shape_cast %96 : vector<1x128x128xf32> to vector<128x128xf32>
    %cst_75 = arith.constant dense<0.000000e+00> : vector<8x128xf32>
    %98 = tpu.matmul %95, %97, %cst_75 {dimension_numbers = #tpu.dot_dimension_numbers<[1], [0], [0], [1], [0, 0, 1, 1], [], []>} : vector<8x128xf32>, vector<128x128xf32>, vector<8x128xf32> -> vector<8x128xf32>
    %c12 = arith.constant 12 : index
    %c0_76 = arith.constant 0 : index
    %c0_77 = arith.constant 0 : index
    %99 = vector.load %arg4[%c12, %c0_76, %c0_77] : memref<31x1x128xf32, #tpu.memory_space<vmem>>, vector<1x1x128xf32>
    %100 = vector.shape_cast %99 : vector<1x1x128xf32> to vector<1x128xf32>
    %101 = vector.broadcast %100 : vector<1x128xf32> to vector<8x128xf32>
    %102 = arith.addf %98, %101 : vector<8x128xf32>
    %103 = math.tanh %102 : vector<8x128xf32>
    %c12_78 = arith.constant 12 : index
    %c0_79 = arith.constant 0 : index
    %c0_80 = arith.constant 0 : index
    %104 = vector.load %arg3[%c12_78, %c0_79, %c0_80] : memref<30x128x128xf32, #tpu.memory_space<vmem>>, vector<1x128x128xf32>
    %105 = vector.shape_cast %104 : vector<1x128x128xf32> to vector<128x128xf32>
    %cst_81 = arith.constant dense<0.000000e+00> : vector<8x128xf32>
    %106 = tpu.matmul %103, %105, %cst_81 {dimension_numbers = #tpu.dot_dimension_numbers<[1], [0], [0], [1], [0, 0, 1, 1], [], []>} : vector<8x128xf32>, vector<128x128xf32>, vector<8x128xf32> -> vector<8x128xf32>
    %c13 = arith.constant 13 : index
    %c0_82 = arith.constant 0 : index
    %c0_83 = arith.constant 0 : index
    %107 = vector.load %arg4[%c13, %c0_82, %c0_83] : memref<31x1x128xf32, #tpu.memory_space<vmem>>, vector<1x1x128xf32>
    %108 = vector.shape_cast %107 : vector<1x1x128xf32> to vector<1x128xf32>
    %109 = vector.broadcast %108 : vector<1x128xf32> to vector<8x128xf32>
    %110 = arith.addf %106, %109 : vector<8x128xf32>
    %111 = math.tanh %110 : vector<8x128xf32>
    %c13_84 = arith.constant 13 : index
    %c0_85 = arith.constant 0 : index
    %c0_86 = arith.constant 0 : index
    %112 = vector.load %arg3[%c13_84, %c0_85, %c0_86] : memref<30x128x128xf32, #tpu.memory_space<vmem>>, vector<1x128x128xf32>
    %113 = vector.shape_cast %112 : vector<1x128x128xf32> to vector<128x128xf32>
    %cst_87 = arith.constant dense<0.000000e+00> : vector<8x128xf32>
    %114 = tpu.matmul %111, %113, %cst_87 {dimension_numbers = #tpu.dot_dimension_numbers<[1], [0], [0], [1], [0, 0, 1, 1], [], []>} : vector<8x128xf32>, vector<128x128xf32>, vector<8x128xf32> -> vector<8x128xf32>
    %c14 = arith.constant 14 : index
    %c0_88 = arith.constant 0 : index
    %c0_89 = arith.constant 0 : index
    %115 = vector.load %arg4[%c14, %c0_88, %c0_89] : memref<31x1x128xf32, #tpu.memory_space<vmem>>, vector<1x1x128xf32>
    %116 = vector.shape_cast %115 : vector<1x1x128xf32> to vector<1x128xf32>
    %117 = vector.broadcast %116 : vector<1x128xf32> to vector<8x128xf32>
    %118 = arith.addf %114, %117 : vector<8x128xf32>
    %119 = math.tanh %118 : vector<8x128xf32>
    %c14_90 = arith.constant 14 : index
    %c0_91 = arith.constant 0 : index
    %c0_92 = arith.constant 0 : index
    %120 = vector.load %arg3[%c14_90, %c0_91, %c0_92] : memref<30x128x128xf32, #tpu.memory_space<vmem>>, vector<1x128x128xf32>
    %121 = vector.shape_cast %120 : vector<1x128x128xf32> to vector<128x128xf32>
    %cst_93 = arith.constant dense<0.000000e+00> : vector<8x128xf32>
    %122 = tpu.matmul %119, %121, %cst_93 {dimension_numbers = #tpu.dot_dimension_numbers<[1], [0], [0], [1], [0, 0, 1, 1], [], []>} : vector<8x128xf32>, vector<128x128xf32>, vector<8x128xf32> -> vector<8x128xf32>
    %c15 = arith.constant 15 : index
    %c0_94 = arith.constant 0 : index
    %c0_95 = arith.constant 0 : index
    %123 = vector.load %arg4[%c15, %c0_94, %c0_95] : memref<31x1x128xf32, #tpu.memory_space<vmem>>, vector<1x1x128xf32>
    %124 = vector.shape_cast %123 : vector<1x1x128xf32> to vector<1x128xf32>
    %125 = vector.broadcast %124 : vector<1x128xf32> to vector<8x128xf32>
    %126 = arith.addf %122, %125 : vector<8x128xf32>
    %127 = math.tanh %126 : vector<8x128xf32>
    %c15_96 = arith.constant 15 : index
    %c0_97 = arith.constant 0 : index
    %c0_98 = arith.constant 0 : index
    %128 = vector.load %arg3[%c15_96, %c0_97, %c0_98] : memref<30x128x128xf32, #tpu.memory_space<vmem>>, vector<1x128x128xf32>
    %129 = vector.shape_cast %128 : vector<1x128x128xf32> to vector<128x128xf32>
    %cst_99 = arith.constant dense<0.000000e+00> : vector<8x128xf32>
    %130 = tpu.matmul %127, %129, %cst_99 {dimension_numbers = #tpu.dot_dimension_numbers<[1], [0], [0], [1], [0, 0, 1, 1], [], []>} : vector<8x128xf32>, vector<128x128xf32>, vector<8x128xf32> -> vector<8x128xf32>
    %c16 = arith.constant 16 : index
    %c0_100 = arith.constant 0 : index
    %c0_101 = arith.constant 0 : index
    %131 = vector.load %arg4[%c16, %c0_100, %c0_101] : memref<31x1x128xf32, #tpu.memory_space<vmem>>, vector<1x1x128xf32>
    %132 = vector.shape_cast %131 : vector<1x1x128xf32> to vector<1x128xf32>
    %133 = vector.broadcast %132 : vector<1x128xf32> to vector<8x128xf32>
    %134 = arith.addf %130, %133 : vector<8x128xf32>
    %135 = math.tanh %134 : vector<8x128xf32>
    %c16_102 = arith.constant 16 : index
    %c0_103 = arith.constant 0 : index
    %c0_104 = arith.constant 0 : index
    %136 = vector.load %arg3[%c16_102, %c0_103, %c0_104] : memref<30x128x128xf32, #tpu.memory_space<vmem>>, vector<1x128x128xf32>
    %137 = vector.shape_cast %136 : vector<1x128x128xf32> to vector<128x128xf32>
    %cst_105 = arith.constant dense<0.000000e+00> : vector<8x128xf32>
    %138 = tpu.matmul %135, %137, %cst_105 {dimension_numbers = #tpu.dot_dimension_numbers<[1], [0], [0], [1], [0, 0, 1, 1], [], []>} : vector<8x128xf32>, vector<128x128xf32>, vector<8x128xf32> -> vector<8x128xf32>
    %c17 = arith.constant 17 : index
    %c0_106 = arith.constant 0 : index
    %c0_107 = arith.constant 0 : index
    %139 = vector.load %arg4[%c17, %c0_106, %c0_107] : memref<31x1x128xf32, #tpu.memory_space<vmem>>, vector<1x1x128xf32>
    %140 = vector.shape_cast %139 : vector<1x1x128xf32> to vector<1x128xf32>
    %141 = vector.broadcast %140 : vector<1x128xf32> to vector<8x128xf32>
    %142 = arith.addf %138, %141 : vector<8x128xf32>
    %143 = math.tanh %142 : vector<8x128xf32>
    %c17_108 = arith.constant 17 : index
    %c0_109 = arith.constant 0 : index
    %c0_110 = arith.constant 0 : index
    %144 = vector.load %arg3[%c17_108, %c0_109, %c0_110] : memref<30x128x128xf32, #tpu.memory_space<vmem>>, vector<1x128x128xf32>
    %145 = vector.shape_cast %144 : vector<1x128x128xf32> to vector<128x128xf32>
    %cst_111 = arith.constant dense<0.000000e+00> : vector<8x128xf32>
    %146 = tpu.matmul %143, %145, %cst_111 {dimension_numbers = #tpu.dot_dimension_numbers<[1], [0], [0], [1], [0, 0, 1, 1], [], []>} : vector<8x128xf32>, vector<128x128xf32>, vector<8x128xf32> -> vector<8x128xf32>
    %c18 = arith.constant 18 : index
    %c0_112 = arith.constant 0 : index
    %c0_113 = arith.constant 0 : index
    %147 = vector.load %arg4[%c18, %c0_112, %c0_113] : memref<31x1x128xf32, #tpu.memory_space<vmem>>, vector<1x1x128xf32>
    %148 = vector.shape_cast %147 : vector<1x1x128xf32> to vector<1x128xf32>
    %149 = vector.broadcast %148 : vector<1x128xf32> to vector<8x128xf32>
    %150 = arith.addf %146, %149 : vector<8x128xf32>
    %151 = math.tanh %150 : vector<8x128xf32>
    %c18_114 = arith.constant 18 : index
    %c0_115 = arith.constant 0 : index
    %c0_116 = arith.constant 0 : index
    %152 = vector.load %arg3[%c18_114, %c0_115, %c0_116] : memref<30x128x128xf32, #tpu.memory_space<vmem>>, vector<1x128x128xf32>
    %153 = vector.shape_cast %152 : vector<1x128x128xf32> to vector<128x128xf32>
    %cst_117 = arith.constant dense<0.000000e+00> : vector<8x128xf32>
    %154 = tpu.matmul %151, %153, %cst_117 {dimension_numbers = #tpu.dot_dimension_numbers<[1], [0], [0], [1], [0, 0, 1, 1], [], []>} : vector<8x128xf32>, vector<128x128xf32>, vector<8x128xf32> -> vector<8x128xf32>
    %c19 = arith.constant 19 : index
    %c0_118 = arith.constant 0 : index
    %c0_119 = arith.constant 0 : index
    %155 = vector.load %arg4[%c19, %c0_118, %c0_119] : memref<31x1x128xf32, #tpu.memory_space<vmem>>, vector<1x1x128xf32>
    %156 = vector.shape_cast %155 : vector<1x1x128xf32> to vector<1x128xf32>
    %157 = vector.broadcast %156 : vector<1x128xf32> to vector<8x128xf32>
    %158 = arith.addf %154, %157 : vector<8x128xf32>
    %159 = math.tanh %158 : vector<8x128xf32>
    %c19_120 = arith.constant 19 : index
    %c0_121 = arith.constant 0 : index
    %c0_122 = arith.constant 0 : index
    %160 = vector.load %arg3[%c19_120, %c0_121, %c0_122] : memref<30x128x128xf32, #tpu.memory_space<vmem>>, vector<1x128x128xf32>
    %161 = vector.shape_cast %160 : vector<1x128x128xf32> to vector<128x128xf32>
    %cst_123 = arith.constant dense<0.000000e+00> : vector<8x128xf32>
    %162 = tpu.matmul %159, %161, %cst_123 {dimension_numbers = #tpu.dot_dimension_numbers<[1], [0], [0], [1], [0, 0, 1, 1], [], []>} : vector<8x128xf32>, vector<128x128xf32>, vector<8x128xf32> -> vector<8x128xf32>
    %c20 = arith.constant 20 : index
    %c0_124 = arith.constant 0 : index
    %c0_125 = arith.constant 0 : index
    %163 = vector.load %arg4[%c20, %c0_124, %c0_125] : memref<31x1x128xf32, #tpu.memory_space<vmem>>, vector<1x1x128xf32>
    %164 = vector.shape_cast %163 : vector<1x1x128xf32> to vector<1x128xf32>
    %165 = vector.broadcast %164 : vector<1x128xf32> to vector<8x128xf32>
    %166 = arith.addf %162, %165 : vector<8x128xf32>
    %167 = math.tanh %166 : vector<8x128xf32>
    %c20_126 = arith.constant 20 : index
    %c0_127 = arith.constant 0 : index
    %c0_128 = arith.constant 0 : index
    %168 = vector.load %arg3[%c20_126, %c0_127, %c0_128] : memref<30x128x128xf32, #tpu.memory_space<vmem>>, vector<1x128x128xf32>
    %169 = vector.shape_cast %168 : vector<1x128x128xf32> to vector<128x128xf32>
    %cst_129 = arith.constant dense<0.000000e+00> : vector<8x128xf32>
    %170 = tpu.matmul %167, %169, %cst_129 {dimension_numbers = #tpu.dot_dimension_numbers<[1], [0], [0], [1], [0, 0, 1, 1], [], []>} : vector<8x128xf32>, vector<128x128xf32>, vector<8x128xf32> -> vector<8x128xf32>
    %c21 = arith.constant 21 : index
    %c0_130 = arith.constant 0 : index
    %c0_131 = arith.constant 0 : index
    %171 = vector.load %arg4[%c21, %c0_130, %c0_131] : memref<31x1x128xf32, #tpu.memory_space<vmem>>, vector<1x1x128xf32>
    %172 = vector.shape_cast %171 : vector<1x1x128xf32> to vector<1x128xf32>
    %173 = vector.broadcast %172 : vector<1x128xf32> to vector<8x128xf32>
    %174 = arith.addf %170, %173 : vector<8x128xf32>
    %175 = math.tanh %174 : vector<8x128xf32>
    %c21_132 = arith.constant 21 : index
    %c0_133 = arith.constant 0 : index
    %c0_134 = arith.constant 0 : index
    %176 = vector.load %arg3[%c21_132, %c0_133, %c0_134] : memref<30x128x128xf32, #tpu.memory_space<vmem>>, vector<1x128x128xf32>
    %177 = vector.shape_cast %176 : vector<1x128x128xf32> to vector<128x128xf32>
    %cst_135 = arith.constant dense<0.000000e+00> : vector<8x128xf32>
    %178 = tpu.matmul %175, %177, %cst_135 {dimension_numbers = #tpu.dot_dimension_numbers<[1], [0], [0], [1], [0, 0, 1, 1], [], []>} : vector<8x128xf32>, vector<128x128xf32>, vector<8x128xf32> -> vector<8x128xf32>
    %c22 = arith.constant 22 : index
    %c0_136 = arith.constant 0 : index
    %c0_137 = arith.constant 0 : index
    %179 = vector.load %arg4[%c22, %c0_136, %c0_137] : memref<31x1x128xf32, #tpu.memory_space<vmem>>, vector<1x1x128xf32>
    %180 = vector.shape_cast %179 : vector<1x1x128xf32> to vector<1x128xf32>
    %181 = vector.broadcast %180 : vector<1x128xf32> to vector<8x128xf32>
    %182 = arith.addf %178, %181 : vector<8x128xf32>
    %183 = math.tanh %182 : vector<8x128xf32>
    %c22_138 = arith.constant 22 : index
    %c0_139 = arith.constant 0 : index
    %c0_140 = arith.constant 0 : index
    %184 = vector.load %arg3[%c22_138, %c0_139, %c0_140] : memref<30x128x128xf32, #tpu.memory_space<vmem>>, vector<1x128x128xf32>
    %185 = vector.shape_cast %184 : vector<1x128x128xf32> to vector<128x128xf32>
    %cst_141 = arith.constant dense<0.000000e+00> : vector<8x128xf32>
    %186 = tpu.matmul %183, %185, %cst_141 {dimension_numbers = #tpu.dot_dimension_numbers<[1], [0], [0], [1], [0, 0, 1, 1], [], []>} : vector<8x128xf32>, vector<128x128xf32>, vector<8x128xf32> -> vector<8x128xf32>
    %c23 = arith.constant 23 : index
    %c0_142 = arith.constant 0 : index
    %c0_143 = arith.constant 0 : index
    %187 = vector.load %arg4[%c23, %c0_142, %c0_143] : memref<31x1x128xf32, #tpu.memory_space<vmem>>, vector<1x1x128xf32>
    %188 = vector.shape_cast %187 : vector<1x1x128xf32> to vector<1x128xf32>
    %189 = vector.broadcast %188 : vector<1x128xf32> to vector<8x128xf32>
    %190 = arith.addf %186, %189 : vector<8x128xf32>
    %191 = math.tanh %190 : vector<8x128xf32>
    %c23_144 = arith.constant 23 : index
    %c0_145 = arith.constant 0 : index
    %c0_146 = arith.constant 0 : index
    %192 = vector.load %arg3[%c23_144, %c0_145, %c0_146] : memref<30x128x128xf32, #tpu.memory_space<vmem>>, vector<1x128x128xf32>
    %193 = vector.shape_cast %192 : vector<1x128x128xf32> to vector<128x128xf32>
    %cst_147 = arith.constant dense<0.000000e+00> : vector<8x128xf32>
    %194 = tpu.matmul %191, %193, %cst_147 {dimension_numbers = #tpu.dot_dimension_numbers<[1], [0], [0], [1], [0, 0, 1, 1], [], []>} : vector<8x128xf32>, vector<128x128xf32>, vector<8x128xf32> -> vector<8x128xf32>
    %c24 = arith.constant 24 : index
    %c0_148 = arith.constant 0 : index
    %c0_149 = arith.constant 0 : index
    %195 = vector.load %arg4[%c24, %c0_148, %c0_149] : memref<31x1x128xf32, #tpu.memory_space<vmem>>, vector<1x1x128xf32>
    %196 = vector.shape_cast %195 : vector<1x1x128xf32> to vector<1x128xf32>
    %197 = vector.broadcast %196 : vector<1x128xf32> to vector<8x128xf32>
    %198 = arith.addf %194, %197 : vector<8x128xf32>
    %199 = math.tanh %198 : vector<8x128xf32>
    %c24_150 = arith.constant 24 : index
    %c0_151 = arith.constant 0 : index
    %c0_152 = arith.constant 0 : index
    %200 = vector.load %arg3[%c24_150, %c0_151, %c0_152] : memref<30x128x128xf32, #tpu.memory_space<vmem>>, vector<1x128x128xf32>
    %201 = vector.shape_cast %200 : vector<1x128x128xf32> to vector<128x128xf32>
    %cst_153 = arith.constant dense<0.000000e+00> : vector<8x128xf32>
    %202 = tpu.matmul %199, %201, %cst_153 {dimension_numbers = #tpu.dot_dimension_numbers<[1], [0], [0], [1], [0, 0, 1, 1], [], []>} : vector<8x128xf32>, vector<128x128xf32>, vector<8x128xf32> -> vector<8x128xf32>
    %c25 = arith.constant 25 : index
    %c0_154 = arith.constant 0 : index
    %c0_155 = arith.constant 0 : index
    %203 = vector.load %arg4[%c25, %c0_154, %c0_155] : memref<31x1x128xf32, #tpu.memory_space<vmem>>, vector<1x1x128xf32>
    %204 = vector.shape_cast %203 : vector<1x1x128xf32> to vector<1x128xf32>
    %205 = vector.broadcast %204 : vector<1x128xf32> to vector<8x128xf32>
    %206 = arith.addf %202, %205 : vector<8x128xf32>
    %207 = math.tanh %206 : vector<8x128xf32>
    %c25_156 = arith.constant 25 : index
    %c0_157 = arith.constant 0 : index
    %c0_158 = arith.constant 0 : index
    %208 = vector.load %arg3[%c25_156, %c0_157, %c0_158] : memref<30x128x128xf32, #tpu.memory_space<vmem>>, vector<1x128x128xf32>
    %209 = vector.shape_cast %208 : vector<1x128x128xf32> to vector<128x128xf32>
    %cst_159 = arith.constant dense<0.000000e+00> : vector<8x128xf32>
    %210 = tpu.matmul %207, %209, %cst_159 {dimension_numbers = #tpu.dot_dimension_numbers<[1], [0], [0], [1], [0, 0, 1, 1], [], []>} : vector<8x128xf32>, vector<128x128xf32>, vector<8x128xf32> -> vector<8x128xf32>
    %c26 = arith.constant 26 : index
    %c0_160 = arith.constant 0 : index
    %c0_161 = arith.constant 0 : index
    %211 = vector.load %arg4[%c26, %c0_160, %c0_161] : memref<31x1x128xf32, #tpu.memory_space<vmem>>, vector<1x1x128xf32>
    %212 = vector.shape_cast %211 : vector<1x1x128xf32> to vector<1x128xf32>
    %213 = vector.broadcast %212 : vector<1x128xf32> to vector<8x128xf32>
    %214 = arith.addf %210, %213 : vector<8x128xf32>
    %215 = math.tanh %214 : vector<8x128xf32>
    %c26_162 = arith.constant 26 : index
    %c0_163 = arith.constant 0 : index
    %c0_164 = arith.constant 0 : index
    %216 = vector.load %arg3[%c26_162, %c0_163, %c0_164] : memref<30x128x128xf32, #tpu.memory_space<vmem>>, vector<1x128x128xf32>
    %217 = vector.shape_cast %216 : vector<1x128x128xf32> to vector<128x128xf32>
    %cst_165 = arith.constant dense<0.000000e+00> : vector<8x128xf32>
    %218 = tpu.matmul %215, %217, %cst_165 {dimension_numbers = #tpu.dot_dimension_numbers<[1], [0], [0], [1], [0, 0, 1, 1], [], []>} : vector<8x128xf32>, vector<128x128xf32>, vector<8x128xf32> -> vector<8x128xf32>
    %c27 = arith.constant 27 : index
    %c0_166 = arith.constant 0 : index
    %c0_167 = arith.constant 0 : index
    %219 = vector.load %arg4[%c27, %c0_166, %c0_167] : memref<31x1x128xf32, #tpu.memory_space<vmem>>, vector<1x1x128xf32>
    %220 = vector.shape_cast %219 : vector<1x1x128xf32> to vector<1x128xf32>
    %221 = vector.broadcast %220 : vector<1x128xf32> to vector<8x128xf32>
    %222 = arith.addf %218, %221 : vector<8x128xf32>
    %223 = math.tanh %222 : vector<8x128xf32>
    %c27_168 = arith.constant 27 : index
    %c0_169 = arith.constant 0 : index
    %c0_170 = arith.constant 0 : index
    %224 = vector.load %arg3[%c27_168, %c0_169, %c0_170] : memref<30x128x128xf32, #tpu.memory_space<vmem>>, vector<1x128x128xf32>
    %225 = vector.shape_cast %224 : vector<1x128x128xf32> to vector<128x128xf32>
    %cst_171 = arith.constant dense<0.000000e+00> : vector<8x128xf32>
    %226 = tpu.matmul %223, %225, %cst_171 {dimension_numbers = #tpu.dot_dimension_numbers<[1], [0], [0], [1], [0, 0, 1, 1], [], []>} : vector<8x128xf32>, vector<128x128xf32>, vector<8x128xf32> -> vector<8x128xf32>
    %c28 = arith.constant 28 : index
    %c0_172 = arith.constant 0 : index
    %c0_173 = arith.constant 0 : index
    %227 = vector.load %arg4[%c28, %c0_172, %c0_173] : memref<31x1x128xf32, #tpu.memory_space<vmem>>, vector<1x1x128xf32>
    %228 = vector.shape_cast %227 : vector<1x1x128xf32> to vector<1x128xf32>
    %229 = vector.broadcast %228 : vector<1x128xf32> to vector<8x128xf32>
    %230 = arith.addf %226, %229 : vector<8x128xf32>
    %231 = math.tanh %230 : vector<8x128xf32>
    %c28_174 = arith.constant 28 : index
    %c0_175 = arith.constant 0 : index
    %c0_176 = arith.constant 0 : index
    %232 = vector.load %arg3[%c28_174, %c0_175, %c0_176] : memref<30x128x128xf32, #tpu.memory_space<vmem>>, vector<1x128x128xf32>
    %233 = vector.shape_cast %232 : vector<1x128x128xf32> to vector<128x128xf32>
    %cst_177 = arith.constant dense<0.000000e+00> : vector<8x128xf32>
    %234 = tpu.matmul %231, %233, %cst_177 {dimension_numbers = #tpu.dot_dimension_numbers<[1], [0], [0], [1], [0, 0, 1, 1], [], []>} : vector<8x128xf32>, vector<128x128xf32>, vector<8x128xf32> -> vector<8x128xf32>
    %c29 = arith.constant 29 : index
    %c0_178 = arith.constant 0 : index
    %c0_179 = arith.constant 0 : index
    %235 = vector.load %arg4[%c29, %c0_178, %c0_179] : memref<31x1x128xf32, #tpu.memory_space<vmem>>, vector<1x1x128xf32>
    %236 = vector.shape_cast %235 : vector<1x1x128xf32> to vector<1x128xf32>
    %237 = vector.broadcast %236 : vector<1x128xf32> to vector<8x128xf32>
    %238 = arith.addf %234, %237 : vector<8x128xf32>
    %239 = math.tanh %238 : vector<8x128xf32>
    %c29_180 = arith.constant 29 : index
    %c0_181 = arith.constant 0 : index
    %c0_182 = arith.constant 0 : index
    %240 = vector.load %arg3[%c29_180, %c0_181, %c0_182] : memref<30x128x128xf32, #tpu.memory_space<vmem>>, vector<1x128x128xf32>
    %241 = vector.shape_cast %240 : vector<1x128x128xf32> to vector<128x128xf32>
    %cst_183 = arith.constant dense<0.000000e+00> : vector<8x128xf32>
    %242 = tpu.matmul %239, %241, %cst_183 {dimension_numbers = #tpu.dot_dimension_numbers<[1], [0], [0], [1], [0, 0, 1, 1], [], []>} : vector<8x128xf32>, vector<128x128xf32>, vector<8x128xf32> -> vector<8x128xf32>
    %c30 = arith.constant 30 : index
    %c0_184 = arith.constant 0 : index
    %c0_185 = arith.constant 0 : index
    %243 = vector.load %arg4[%c30, %c0_184, %c0_185] : memref<31x1x128xf32, #tpu.memory_space<vmem>>, vector<1x1x128xf32>
    %244 = vector.shape_cast %243 : vector<1x1x128xf32> to vector<1x128xf32>
    %245 = vector.broadcast %244 : vector<1x128xf32> to vector<8x128xf32>
    %246 = arith.addf %242, %245 : vector<8x128xf32>
    %c0_186 = arith.constant 0 : index
    %c0_187 = arith.constant 0 : index
    %247 = vector.load %arg5[%c0_186, %c0_187] : memref<8x128xf32, #tpu.memory_space<vmem>>, vector<8x128xf32>
    tpu.vector_store %arg5[%c0_186, %c0_187], %246 {strides = array<i32>} : memref<8x128xf32, #tpu.memory_space<vmem>>, vector<8x128xf32>,
    return
  }
  func.func @transform_0(%arg0: i32) -> (i32, i32) {
    %c0_i32 = arith.constant 0 : i32
    %c0_i32_0 = arith.constant 0 : i32
    return %arg0, %c0_i32 : i32, i32
  }
  func.func @transform_1(%arg0: i32) -> (i32, i32) {
    %c0_i32 = arith.constant 0 : i32
    %c0_i32_0 = arith.constant 0 : i32
    %c0_i32_1 = arith.constant 0 : i32
    return %c0_i32, %c0_i32_0 : i32, i32
  }
  func.func @transform_2(%arg0: i32) -> (i32, i32, i32) {
    %c0_i32 = arith.constant 0 : i32
    %c0_i32_0 = arith.constant 0 : i32
    %c0_i32_1 = arith.constant 0 : i32
    %c0_i32_2 = arith.constant 0 : i32
    return %c0_i32, %c0_i32_0, %c0_i32_1 : i32, i32, i32
  }
  func.func @transform_3(%arg0: i32) -> (i32, i32, i32) {
    %c0_i32 = arith.constant 0 : i32
    %c0_i32_0 = arith.constant 0 : i32
    %c0_i32_1 = arith.constant 0 : i32
    %c0_i32_2 = arith.constant 0 : i32
    return %c0_i32, %c0_i32_0, %c0_i32_1 : i32, i32, i32
  }
  func.func @transform_4(%arg0: i32) -> (i32, i32) {
    %c0_i32 = arith.constant 0 : i32
    %c0_i32_0 = arith.constant 0 : i32
    return %arg0, %c0_i32 : i32, i32
  }
}

</mosaic_0001>

<llo_original>
// kernel: tpu_custom_call.1
$region0: #{tpu_custom_call.1}
  #allocation0 [shape = 'u32[]', space=smem, size = 0x4, offset = 0x4, fixed_abs, tag = 'smem constant byte address 0x4 - core index']
  #allocation1 [shape = 'u32[144,128]{1,0:T(1,128)}', space=vmem, size = 0x12000, scoped, tag = 'internal scratch']
  %s0 = inlined_call_operand.hbm [shape: f32[8,64], index: 0, kind: input, shape index: {}]
  %s1 = inlined_call_operand.hbm [shape: f32[64,128], index: 1, kind: input, shape index: {}]
  %s2 = inlined_call_operand.hbm [shape: f32[30,128,128], index: 2, kind: input, shape index: {}]
  %s3 = inlined_call_operand.hbm [shape: f32[31,1,128], index: 3, kind: input, shape index: {}]
  %s4 = inlined_call_operand.hbm [shape: f32[8,128], index: 4, kind: output, shape index: {}]
  %s5 = sld [smem:[#allocation0]]
  $region42: #{tpu_custom_call.1} parent=0
    _
  %s7 = ssub.s32 1, %s5
  %s8 = scalar_select 0, %s7, %s5
  $region1: #{tpu_custom_call.1} parent=0
    #allocation2 [shape = 'u8[4096]{0}', space=vmem, size = 0x1000, scoped, tag = 'input window, operand 0, single buffered']
    #allocation3 [shape = 's32[1]{0}', space=sflag, size = 0x4, scoped, tag = 'scoped memory for tpu_custom_call.1']
    #allocation4 [shape = 's32[1]{0}', space=sflag, size = 0x4, scoped, tag = 'scoped memory for tpu_custom_call.1']
    #allocation5 [shape = 'u8[32768]{0}', space=vmem, size = 0x8000, scoped, tag = 'input window, operand 1, single buffered']
    #allocation6 [shape = 's32[1]{0}', space=sflag, size = 0x4, scoped, tag = 'scoped memory for tpu_custom_call.1']
    #allocation7 [shape = 'u8[1966080]{0}', space=vmem, size = 0x1e0000, scoped, tag = 'input window, operand 2, single buffered']
    #allocation8 [shape = 'u8[15872]{0}', space=vmem, size = 0x4000, scoped, tag = 'input window, operand 3, single buffered']
    #allocation9 [shape = 's32[1]{0}', space=sflag, size = 0x4, scoped, tag = 'scoped memory for tpu_custom_call.1']
    #allocation10 [shape = 'u8[4096]{0}', space=vmem, size = 0x1000, scoped, tag = 'output window, operand 0, single buffered']
    %9 = vsyncpa [#allocation3], 0
    %10 = vsyncpa [#allocation6], 0
    %11 = vsyncpa [#allocation9], 0
    %12 = vsyncpa [#allocation4], 0
    // Predicated region
    $region2: #{tpu_custom_call.1} parent=1 // pred_check
      _
    $region3: #{tpu_custom_call.1} parent=1 // pred_check_branch
      %14 = sbr.rel (0) target = $region5
    $region4: #{tpu_custom_call.1} parent=1 // pred_region
      %s16 = ssub.s32 128, 128
      %17 = vsyncadd [#allocation3], %s16
      %s19 = sshll.u32 [#allocation2], 4
      %s20 = int_to_ptr.vmem [resolvable:$true] %s19
      %22 = dma.hbm_to_vmem [thread:$0]  %s0, 128, %s20, [#allocation3]
    $region5: #{tpu_custom_call.1} parent=1 // pred_fallthru
      _
    // Predicated region
    $region6: #{tpu_custom_call.1} parent=1 // pred_check
      _
    $region7: #{tpu_custom_call.1} parent=1 // pred_check_branch
      %24 = sbr.rel (0) target = $region9
    $region8: #{tpu_custom_call.1} parent=1 // pred_region
      %s26 = ssub.s32 1024, 1024
      %27 = vsyncadd [#allocation6], %s26
      %s28 = sshll.u32 [#allocation5], 4
      %s29 = int_to_ptr.vmem [resolvable:$true] %s28
      %34 = dma.hbm_to_vmem [thread:$0]  %s1, 1024, %s29, [#allocation6], 128, 128, 8
    $region9: #{tpu_custom_call.1} parent=1 // pred_fallthru
      _
    // Predicated region
    $region10: #{tpu_custom_call.1} parent=1 // pred_check
      _
    $region11: #{tpu_custom_call.1} parent=1 // pred_check_branch
      %36 = sbr.rel (0) target = $region13
    $region12: #{tpu_custom_call.1} parent=1 // pred_region
      %s38 = ssub.s32 61440, 61440
      %39 = vsyncadd [#allocation6], %s38
      %s40 = sshll.u32 [#allocation7], 4
      %s41 = int_to_ptr.vmem [resolvable:$true] %s40
      %46 = dma.hbm_to_vmem [thread:$0]  %s2, 61440, %s41, [#allocation6], 128, 128, 8
    $region13: #{tpu_custom_call.1} parent=1 // pred_fallthru
      _
    // Predicated region
    $region14: #{tpu_custom_call.1} parent=1 // pred_check
      _
    $region15: #{tpu_custom_call.1} parent=1 // pred_check_branch
      %48 = sbr.rel (0) target = $region17
    $region16: #{tpu_custom_call.1} parent=1 // pred_region
      %s50 = ssub.s32 496, 496
      %51 = vsyncadd [#allocation9], %s50
      %s52 = sshll.u32 [#allocation8], 4
      %s53 = int_to_ptr.vmem [resolvable:$true] %s52
      %58 = dma.hbm_to_vmem [thread:$0]  %s3, 496, %s53, [#allocation9], 16, 16, 1
    $region17: #{tpu_custom_call.1} parent=1 // pred_fallthru
      _
    // Predicated region
    $region18: #{tpu_custom_call.1} parent=1 // pred_check
      _
    $region19: #{tpu_custom_call.1} parent=1 // pred_check_branch
      %60 = sbr.rel (0) target = $region21
    $region20: #{tpu_custom_call.1} parent=1 // pred_region
      %61 = dma.done [#allocation3], 128
    $region21: #{tpu_custom_call.1} parent=1 // pred_fallthru
      _
    // Predicated region
    $region22: #{tpu_custom_call.1} parent=1 // pred_check
      _
    $region23: #{tpu_custom_call.1} parent=1 // pred_check_branch
      %63 = sbr.rel (0) target = $region25
    $region24: #{tpu_custom_call.1} parent=1 // pred_region
      %64 = dma.done [#allocation6], 1024
    $region25: #{tpu_custom_call.1} parent=1 // pred_fallthru
      _
    // Predicated region
    $region26: #{tpu_custom_call.1} parent=1 // pred_check
      _
    $region27: #{tpu_custom_call.1} parent=1 // pred_check_branch
      %66 = sbr.rel (0) target = $region29
    $region28: #{tpu_custom_call.1} parent=1 // pred_region
      %67 = dma.done [#allocation6], 61440
    $region29: #{tpu_custom_call.1} parent=1 // pred_fallthru
      _
    // Predicated region
    $region30: #{tpu_custom_call.1} parent=1 // pred_check
      _
    $region31: #{tpu_custom_call.1} parent=1 // pred_check_branch
      %69 = sbr.rel (0) target = $region33
    $region32: #{tpu_custom_call.1} parent=1 // pred_region
      %70 = dma.done [#allocation9], 496
    $region33: #{tpu_custom_call.1} parent=1 // pred_fallthru
      _
    %v71 = vld [vmem:[#allocation2] sm:$0xff]
    %v72 = vld [vmem:[#allocation5] sm:$0xff]
    %v73 = vld [vmem:[#allocation5 + $0x8] sm:$0xff]
    %v74 = vld [vmem:[#allocation5 + $0x10] sm:$0xff]
    %v75 = vld [vmem:[#allocation5 + $0x18] sm:$0xff]
    %v76 = vld [vmem:[#allocation5 + $0x20] sm:$0xff]
    %v77 = vld [vmem:[#allocation5 + $0x28] sm:$0xff]
    %v78 = vld [vmem:[#allocation5 + $0x30] sm:$0xff]
    %v79 = vld [vmem:[#allocation5 + $0x38] sm:$0xff]
    %v80 = vld [vmem:[#allocation8] sm:$0x1]
    %v82 = vlaneseq
    %v83 = vshrl.u32 %v82, 7
    %v84 = vsub.s32 0, %v83
    %v85 = vrot.slane %v80, %v84
    %vm87 = vcmask 523264
    %v89 = vsel %vm87, %v71, 0
    %91 = vmatprep.subr.mxu0 0.0
    %92 = vmatpush1.msra.mxu0 0.0
    %93 = vmatprep.subr.mxu0 0.0
    %94 = vmatpush1.msra.mxu0 0.0
    %95 = vmatprep.subr.mxu0 0.0
    %96 = vmatpush1.msra.mxu0 0.0
    %97 = vmatprep.subr.mxu0 0.0
    %98 = vmatpush1.msra.mxu0 0.0
    %99 = vmatprep.subr.mxu0 0.0
    %100 = vmatpush1.msra.mxu0 0.0
    %101 = vmatprep.subr.mxu0 0.0
    %102 = vmatpush1.msra.mxu0 0.0
    %103 = vmatprep.subr.mxu0 0.0
    %104 = vmatpush1.msra.mxu0 0.0
    %105 = vmatprep.subr.mxu0 0.0
    %106 = vmatpush1.msra.mxu0 0.0
    %107 = vmatprep.subr.mxu0 0.0
    %108 = vmatpush1.msra.mxu0 %v79
    %109 = vmatprep.subr.mxu0 0.0
    %110 = vmatpush1.msra.mxu0 %v78
    %111 = vmatprep.subr.mxu0 0.0
    %112 = vmatpush1.msra.mxu0 %v77
    %113 = vmatprep.subr.mxu0 0.0
    %114 = vmatpush1.msra.mxu0 %v76
    %115 = vmatprep.subr.mxu0 0.0
    %116 = vmatpush1.msra.mxu0 %v75
    %117 = vmatprep.subr.mxu0 0.0
    %118 = vmatpush1.msra.mxu0 %v74
    %119 = vmatprep.subr.mxu0 0.0
    %120 = vmatpush1.msra.mxu0 %v73
    %121 = vmatprep.subr.mxu0 0.0
    %122 = vmatpush1.msra.mxu0 %v72
    %123 = vmatprep.subr.mxu0 0.0
    %124 = vmatpush2.msra.mxu0 0.0
    %125 = vmatprep.subr.mxu0 0.0
    %126 = vmatpush2.msra.mxu0 0.0
    %127 = vmatprep.subr.mxu0 0.0
    %128 = vmatpush2.msra.mxu0 0.0
    %129 = vmatprep.subr.mxu0 0.0
    %130 = vmatpush2.msra.mxu0 0.0
    %131 = vmatprep.subr.mxu0 0.0
    %132 = vmatpush2.msra.mxu0 0.0
    %133 = vmatprep.subr.mxu0 0.0
    %134 = vmatpush2.msra.mxu0 0.0
    %135 = vmatprep.subr.mxu0 0.0
    %136 = vmatpush2.msra.mxu0 0.0
    %137 = vmatprep.subr.mxu0 0.0
    %138 = vmatpush2.msra.mxu0 0.0
    %139 = vmatprep.subr.mxu0 0.0
    %140 = vmatpush2.msra.mxu0 0.0
    %141 = vmatprep.subr.mxu0 0.0
    %142 = vmatpush2.msra.mxu0 0.0
    %143 = vmatprep.subr.mxu0 0.0
    %144 = vmatpush2.msra.mxu0 0.0
    %145 = vmatprep.subr.mxu0 0.0
    %146 = vmatpush2.msra.mxu0 0.0
    %147 = vmatprep.subr.mxu0 0.0
    %148 = vmatpush2.msra.mxu0 0.0
    %149 = vmatprep.subr.mxu0 0.0
    %150 = vmatpush2.msra.mxu0 0.0
    %151 = vmatprep.subr.mxu0 0.0
    %152 = vmatpush2.msra.mxu0 0.0
    %153 = vmatprep.subr.mxu0 0.0
    %154 = vmatpush2.msra.mxu0 0.0
    %155 = vmatprep.mubr.f32.mxu0 0.0
    %156 = vmatmul.mubr.f32.gmra.mxu0 %v89
    %v157 = vpop.f32.mrf.mxu0
    %v158 = vadd.f32 %v85, %v157
    %v159 = vpop.f32.mrf.mxu0
    %160 = vdwg.mxu0
    %v161 = vtanh.pop %v158
    %v162 = vld [vmem:[#allocation7] sm:$0xff]
    %v163 = vld [vmem:[#allocation7 + $0x8] sm:$0xff]
    %v164 = vld [vmem:[#allocation7 + $0x10] sm:$0xff]
    %v165 = vld [vmem:[#allocation7 + $0x18] sm:$0xff]
    %v166 = vld [vmem:[#allocation7 + $0x20] sm:$0xff]
    %v167 = vld [vmem:[#allocation7 + $0x28] sm:$0xff]
    %v168 = vld [vmem:[#allocation7 + $0x30] sm:$0xff]
    %v169 = vld [vmem:[#allocation7 + $0x38] sm:$0xff]
    %v170 = vld [vmem:[#allocation7 + $0x40] sm:$0xff]
    %v171 = vld [vmem:[#allocation7 + $0x48] sm:$0xff]
    %v172 = vld [vmem:[#allocation7 + $0x50] sm:$0xff]
    %v173 = vld [vmem:[#allocation7 + $0x58] sm:$0xff]
    %v174 = vld [vmem:[#allocation7 + $0x60] sm:$0xff]
    %v175 = vld [vmem:[#allocation7 + $0x68] sm:$0xff]
    %v176 = vld [vmem:[#allocation7 + $0x70] sm:$0xff]
    %v177 = vld [vmem:[#allocation7 + $0x78] sm:$0xff]
    %s178 = scalar_lea.vmem [#allocation8], 1
    %v179 = vld [vmem:[%s178] sm:$0x1]
    %v181 = vlaneseq
    %v182 = vshrl.u32 %v181, 7
    %v183 = vsub.s32 0, %v182
    %v184 = vrot.slane %v179, %v183
    %186 = vmatprep.subr.mxu0 0.0
    %187 = vmatpush1.msra.mxu0 %v177
    %188 = vmatprep.subr.mxu0 0.0
    %189 = vmatpush1.msra.mxu0 %v176
    %190 = vmatprep.subr.mxu0 0.0
    %191 = vmatpush1.msra.mxu0 %v175
    %192 = vmatprep.subr.mxu0 0.0
    %193 = vmatpush1.msra.mxu0 %v174
    %194 = vmatprep.subr.mxu0 0.0
    %195 = vmatpush1.msra.mxu0 %v173
    %196 = vmatprep.subr.mxu0 0.0
    %197 = vmatpush1.msra.mxu0 %v172
    %198 = vmatprep.subr.mxu0 0.0
    %199 = vmatpush1.msra.mxu0 %v171
    %200 = vmatprep.subr.mxu0 0.0
    %201 = vmatpush1.msra.mxu0 %v170
    %202 = vmatprep.subr.mxu0 0.0
    %203 = vmatpush1.msra.mxu0 %v169
    %204 = vmatprep.subr.mxu0 0.0
    %205 = vmatpush1.msra.mxu0 %v168
    %206 = vmatprep.subr.mxu0 0.0
    %207 = vmatpush1.msra.mxu0 %v167
    %208 = vmatprep.subr.mxu0 0.0
    %209 = vmatpush1.msra.mxu0 %v166
    %210 = vmatprep.subr.mxu0 0.0
    %211 = vmatpush1.msra.mxu0 %v165
    %212 = vmatprep.subr.mxu0 0.0
    %213 = vmatpush1.msra.mxu0 %v164
    %214 = vmatprep.subr.mxu0 0.0
    %215 = vmatpush1.msra.mxu0 %v163
    %216 = vmatprep.subr.mxu0 0.0
    %217 = vmatpush1.msra.mxu0 %v162
    %218 = vmatprep.subr.mxu0 0.0
    %219 = vmatpush2.msra.mxu0 0.0
    %220 = vmatprep.subr.mxu0 0.0
    %221 = vmatpush2.msra.mxu0 0.0
    %222 = vmatprep.subr.mxu0 0.0
    %223 = vmatpush2.msra.mxu0 0.0
    %224 = vmatprep.subr.mxu0 0.0
    %225 = vmatpush2.msra.mxu0 0.0
    %226 = vmatprep.subr.mxu0 0.0
    %227 = vmatpush2.msra.mxu0 0.0
    %228 = vmatprep.subr.mxu0 0.0
    %229 = vmatpush2.msra.mxu0 0.0
    %230 = vmatprep.subr.mxu0 0.0
    %231 = vmatpush2.msra.mxu0 0.0
    %232 = vmatprep.subr.mxu0 0.0
    %233 = vmatpush2.msra.mxu0 0.0
    %234 = vmatprep.subr.mxu0 0.0
    %235 = vmatpush2.msra.mxu0 0.0
    %236 = vmatprep.subr.mxu0 0.0
    %237 = vmatpush2.msra.mxu0 0.0
    %238 = vmatprep.subr.mxu0 0.0
    %239 = vmatpush2.msra.mxu0 0.0
    %240 = vmatprep.subr.mxu0 0.0
    %241 = vmatpush2.msra.mxu0 0.0
    %242 = vmatprep.subr.mxu0 0.0
    %243 = vmatpush2.msra.mxu0 0.0
    %244 = vmatprep.subr.mxu0 0.0
    %245 = vmatpush2.msra.mxu0 0.0
    %246 = vmatprep.subr.mxu0 0.0
    %247 = vmatpush2.msra.mxu0 0.0
    %248 = vmatprep.subr.mxu0 0.0
    %249 = vmatpush2.msra.mxu0 0.0
    %250 = vmatprep.mubr.f32.mxu0 0.0
    %251 = vmatmul.mubr.f32.gmra.mxu0 %v161
    %v252 = vpop.f32.mrf.mxu0
    %v253 = vadd.f32 %v184, %v252
    %v254 = vpop.f32.mrf.mxu0
    %255 = vdwg.mxu0
    %v256 = vtanh.pop %v253
    %s257 = scalar_lea.vmem [#allocation7], 128
    %v258 = vld [vmem:[%s257] sm:$0xff]
    %v259 = vld [vmem:[%s257 + $0x8] sm:$0xff]
    %v260 = vld [vmem:[%s257 + $0x10] sm:$0xff]
    %v261 = vld [vmem:[%s257 + $0x18] sm:$0xff]
    %v262 = vld [vmem:[%s257 + $0x20] sm:$0xff]
    %v263 = vld [vmem:[%s257 + $0x28] sm:$0xff]
    %v264 = vld [vmem:[%s257 + $0x30] sm:$0xff]
    %v265 = vld [vmem:[%s257 + $0x38] sm:$0xff]
    %v266 = vld [vmem:[%s257 + $0x40] sm:$0xff]
    %v267 = vld [vmem:[%s257 + $0x48] sm:$0xff]
    %v268 = vld [vmem:[%s257 + $0x50] sm:$0xff]
    %v269 = vld [vmem:[%s257 + $0x58] sm:$0xff]
    %v270 = vld [vmem:[%s257 + $0x60] sm:$0xff]
    %v271 = vld [vmem:[%s257 + $0x68] sm:$0xff]
    %v272 = vld [vmem:[%s257 + $0x70] sm:$0xff]
    %v273 = vld [vmem:[%s257 + $0x78] sm:$0xff]
    %s274 = scalar_lea.vmem [#allocation8], 2
    %v275 = vld [vmem:[%s274] sm:$0x1]
    %v277 = vlaneseq
    %v278 = vshrl.u32 %v277, 7
    %v279 = vsub.s32 0, %v278
    %v280 = vrot.slane %v275, %v279
    %282 = vmatprep.subr.mxu0 0.0
    %283 = vmatpush1.msra.mxu0 %v273
    %284 = vmatprep.subr.mxu0 0.0
    %285 = vmatpush1.msra.mxu0 %v272
    %286 = vmatprep.subr.mxu0 0.0
    %287 = vmatpush1.msra.mxu0 %v271
    %288 = vmatprep.subr.mxu0 0.0
    %289 = vmatpush1.msra.mxu0 %v270
    %290 = vmatprep.subr.mxu0 0.0
    %291 = vmatpush1.msra.mxu0 %v269
    %292 = vmatprep.subr.mxu0 0.0
    %293 = vmatpush1.msra.mxu0 %v268
    %294 = vmatprep.subr.mxu0 0.0
    %295 = vmatpush1.msra.mxu0 %v267
    %296 = vmatprep.subr.mxu0 0.0
    %297 = vmatpush1.msra.mxu0 %v266
    %298 = vmatprep.subr.mxu0 0.0
    %299 = vmatpush1.msra.mxu0 %v265
    %300 = vmatprep.subr.mxu0 0.0
    %301 = vmatpush1.msra.mxu0 %v264
    %302 = vmatprep.subr.mxu0 0.0
    %303 = vmatpush1.msra.mxu0 %v263
    %304 = vmatprep.subr.mxu0 0.0
    %305 = vmatpush1.msra.mxu0 %v262
    %306 = vmatprep.subr.mxu0 0.0
    %307 = vmatpush1.msra.mxu0 %v261
    %308 = vmatprep.subr.mxu0 0.0
    %309 = vmatpush1.msra.mxu0 %v260
    %310 = vmatprep.subr.mxu0 0.0
    %311 = vmatpush1.msra.mxu0 %v259
    %312 = vmatprep.subr.mxu0 0.0
    %313 = vmatpush1.msra.mxu0 %v258
    %314 = vmatprep.subr.mxu0 0.0
    %315 = vmatpush2.msra.mxu0 0.0
    %316 = vmatprep.subr.mxu0 0.0
    %317 = vmatpush2.msra.mxu0 0.0
    %318 = vmatprep.subr.mxu0 0.0
    %319 = vmatpush2.msra.mxu0 0.0
    %320 = vmatprep.subr.mxu0 0.0
    %321 = vmatpush2.msra.mxu0 0.0
    %322 = vmatprep.subr.mxu0 0.0
    %323 = vmatpush2.msra.mxu0 0.0
    %324 = vmatprep.subr.mxu0 0.0
    %325 = vmatpush2.msra.mxu0 0.0
    %326 = vmatprep.subr.mxu0 0.0
    %327 = vmatpush2.msra.mxu0 0.0
    %328 = vmatprep.subr.mxu0 0.0
    %329 = vmatpush2.msra.mxu0 0.0
    %330 = vmatprep.subr.mxu0 0.0
    %331 = vmatpush2.msra.mxu0 0.0
    %332 = vmatprep.subr.mxu0 0.0
    %333 = vmatpush2.msra.mxu0 0.0
    %334 = vmatprep.subr.mxu0 0.0
    %335 = vmatpush2.msra.mxu0 0.0
    %336 = vmatprep.subr.mxu0 0.0
    %337 = vmatpush2.msra.mxu0 0.0
    %338 = vmatprep.subr.mxu0 0.0
    %339 = vmatpush2.msra.mxu0 0.0
    %340 = vmatprep.subr.mxu0 0.0
    %341 = vmatpush2.msra.mxu0 0.0
    %342 = vmatprep.subr.mxu0 0.0
    %343 = vmatpush2.msra.mxu0 0.0
    %344 = vmatprep.subr.mxu0 0.0
    %345 = vmatpush2.msra.mxu0 0.0
    %346 = vmatprep.mubr.f32.mxu0 0.0
    %347 = vmatmul.mubr.f32.gmra.mxu0 %v256
    %v348 = vpop.f32.mrf.mxu0
    %v349 = vadd.f32 %v280, %v348
    %v350 = vpop.f32.mrf.mxu0
    %351 = vdwg.mxu0
    %v352 = vtanh.pop %v349
    %s353 = scalar_lea.vmem [#allocation7], 256
    %v354 = vld [vmem:[%s353] sm:$0xff]
    %v355 = vld [vmem:[%s353 + $0x8] sm:$0xff]
    %v356 = vld [vmem:[%s353 + $0x10] sm:$0xff]
    %v357 = vld [vmem:[%s353 + $0x18] sm:$0xff]
    %v358 = vld [vmem:[%s353 + $0x20] sm:$0xff]
    %v359 = vld [vmem:[%s353 + $0x28] sm:$0xff]
    %v360 = vld [vmem:[%s353 + $0x30] sm:$0xff]
    %v361 = vld [vmem:[%s353 + $0x38] sm:$0xff]
    %v362 = vld [vmem:[%s353 + $0x40] sm:$0xff]
    %v363 = vld [vmem:[%s353 + $0x48] sm:$0xff]
    %v364 = vld [vmem:[%s353 + $0x50] sm:$0xff]
    %v365 = vld [vmem:[%s353 + $0x58] sm:$0xff]
    %v366 = vld [vmem:[%s353 + $0x60] sm:$0xff]
    %v367 = vld [vmem:[%s353 + $0x68] sm:$0xff]
    %v368 = vld [vmem:[%s353 + $0x70] sm:$0xff]
    %v369 = vld [vmem:[%s353 + $0x78] sm:$0xff]
    %s370 = scalar_lea.vmem [#allocation8], 3
    %v371 = vld [vmem:[%s370] sm:$0x1]
    %v373 = vlaneseq
    %v374 = vshrl.u32 %v373, 7
    %v375 = vsub.s32 0, %v374
    %v376 = vrot.slane %v371, %v375
    %378 = vmatprep.subr.mxu0 0.0
    %379 = vmatpush1.msra.mxu0 %v369
    %380 = vmatprep.subr.mxu0 0.0
    %381 = vmatpush1.msra.mxu0 %v368
    %382 = vmatprep.subr.mxu0 0.0
    %383 = vmatpush1.msra.mxu0 %v367
    %384 = vmatprep.subr.mxu0 0.0
    %385 = vmatpush1.msra.mxu0 %v366
    %386 = vmatprep.subr.mxu0 0.0
    %387 = vmatpush1.msra.mxu0 %v365
    %388 = vmatprep.subr.mxu0 0.0
    %389 = vmatpush1.msra.mxu0 %v364
    %390 = vmatprep.subr.mxu0 0.0
    %391 = vmatpush1.msra.mxu0 %v363
    %392 = vmatprep.subr.mxu0 0.0
    %393 = vmatpush1.msra.mxu0 %v362
    %394 = vmatprep.subr.mxu0 0.0
    %395 = vmatpush1.msra.mxu0 %v361
    %396 = vmatprep.subr.mxu0 0.0
    %397 = vmatpush1.msra.mxu0 %v360
    %398 = vmatprep.subr.mxu0 0.0
    %399 = vmatpush1.msra.mxu0 %v359
    %400 = vmatprep.subr.mxu0 0.0
    %401 = vmatpush1.msra.mxu0 %v358
    %402 = vmatprep.subr.mxu0 0.0
    %403 = vmatpush1.msra.mxu0 %v357
    %404 = vmatprep.subr.mxu0 0.0
    %405 = vmatpush1.msra.mxu0 %v356
    %406 = vmatprep.subr.mxu0 0.0
    %407 = vmatpush1.msra.mxu0 %v355
    %408 = vmatprep.subr.mxu0 0.0
    %409 = vmatpush1.msra.mxu0 %v354
    %410 = vmatprep.subr.mxu0 0.0
    %411 = vmatpush2.msra.mxu0 0.0
    %412 = vmatprep.subr.mxu0 0.0
    %413 = vmatpush2.msra.mxu0 0.0
    %414 = vmatprep.subr.mxu0 0.0
    %415 = vmatpush2.msra.mxu0 0.0
    %416 = vmatprep.subr.mxu0 0.0
    %417 = vmatpush2.msra.mxu0 0.0
    %418 = vmatprep.subr.mxu0 0.0
    %419 = vmatpush2.msra.mxu0 0.0
    %420 = vmatprep.subr.mxu0 0.0
    %421 = vmatpush2.msra.mxu0 0.0
    %422 = vmatprep.subr.mxu0 0.0
    %423 = vmatpush2.msra.mxu0 0.0
    %424 = vmatprep.subr.mxu0 0.0
    %425 = vmatpush2.msra.mxu0 0.0
    %426 = vmatprep.subr.mxu0 0.0
    %427 = vmatpush2.msra.mxu0 0.0
    %428 = vmatprep.subr.mxu0 0.0
    %429 = vmatpush2.msra.mxu0 0.0
    %430 = vmatprep.subr.mxu0 0.0
    %431 = vmatpush2.msra.mxu0 0.0
    %432 = vmatprep.subr.mxu0 0.0
    %433 = vmatpush2.msra.mxu0 0.0
    %434 = vmatprep.subr.mxu0 0.0
    %435 = vmatpush2.msra.mxu0 0.0
    %436 = vmatprep.subr.mxu0 0.0
    %437 = vmatpush2.msra.mxu0 0.0
    %438 = vmatprep.subr.mxu0 0.0
    %439 = vmatpush2.msra.mxu0 0.0
    %440 = vmatprep.subr.mxu0 0.0
    %441 = vmatpush2.msra.mxu0 0.0
    %442 = vmatprep.mubr.f32.mxu0 0.0
    %443 = vmatmul.mubr.f32.gmra.mxu0 %v352
    %v444 = vpop.f32.mrf.mxu0
    %v445 = vadd.f32 %v376, %v444
    %v446 = vpop.f32.mrf.mxu0
    %447 = vdwg.mxu0
    %v448 = vtanh.pop %v445
    %s449 = scalar_lea.vmem [#allocation7], 384
    %v450 = vld [vmem:[%s449] sm:$0xff]
    %v451 = vld [vmem:[%s449 + $0x8] sm:$0xff]
    %v452 = vld [vmem:[%s449 + $0x10] sm:$0xff]
    %v453 = vld [vmem:[%s449 + $0x18] sm:$0xff]
    %v454 = vld [vmem:[%s449 + $0x20] sm:$0xff]
    %v455 = vld [vmem:[%s449 + $0x28] sm:$0xff]
    %v456 = vld [vmem:[%s449 + $0x30] sm:$0xff]
    %v457 = vld [vmem:[%s449 + $0x38] sm:$0xff]
    %v458 = vld [vmem:[%s449 + $0x40] sm:$0xff]
    %v459 = vld [vmem:[%s449 + $0x48] sm:$0xff]
    %v460 = vld [vmem:[%s449 + $0x50] sm:$0xff]
    %v461 = vld [vmem:[%s449 + $0x58] sm:$0xff]
    %v462 = vld [vmem:[%s449 + $0x60] sm:$0xff]
    %v463 = vld [vmem:[%s449 + $0x68] sm:$0xff]
    %v464 = vld [vmem:[%s449 + $0x70] sm:$0xff]
    %v465 = vld [vmem:[%s449 + $0x78] sm:$0xff]
    %s466 = scalar_lea.vmem [#allocation8], 4
    %v467 = vld [vmem:[%s466] sm:$0x1]
    %v469 = vlaneseq
    %v470 = vshrl.u32 %v469, 7
    %v471 = vsub.s32 0, %v470
    %v472 = vrot.slane %v467, %v471
    %474 = vmatprep.subr.mxu0 0.0
    %475 = vmatpush1.msra.mxu0 %v465
    %476 = vmatprep.subr.mxu0 0.0
    %477 = vmatpush1.msra.mxu0 %v464
    %478 = vmatprep.subr.mxu0 0.0
    %479 = vmatpush1.msra.mxu0 %v463
    %480 = vmatprep.subr.mxu0 0.0
    %481 = vmatpush1.msra.mxu0 %v462
    %482 = vmatprep.subr.mxu0 0.0
    %483 = vmatpush1.msra.mxu0 %v461
    %484 = vmatprep.subr.mxu0 0.0
    %485 = vmatpush1.msra.mxu0 %v460
    %486 = vmatprep.subr.mxu0 0.0
    %487 = vmatpush1.msra.mxu0 %v459
    %488 = vmatprep.subr.mxu0 0.0
    %489 = vmatpush1.msra.mxu0 %v458
    %490 = vmatprep.subr.mxu0 0.0
    %491 = vmatpush1.msra.mxu0 %v457
    %492 = vmatprep.subr.mxu0 0.0
    %493 = vmatpush1.msra.mxu0 %v456
    %494 = vmatprep.subr.mxu0 0.0
    %495 = vmatpush1.msra.mxu0 %v455
    %496 = vmatprep.subr.mxu0 0.0
    %497 = vmatpush1.msra.mxu0 %v454
    %498 = vmatprep.subr.mxu0 0.0
    %499 = vmatpush1.msra.mxu0 %v453
    %500 = vmatprep.subr.mxu0 0.0
    %501 = vmatpush1.msra.mxu0 %v452
    %502 = vmatprep.subr.mxu0 0.0
    %503 = vmatpush1.msra.mxu0 %v451
    %504 = vmatprep.subr.mxu0 0.0
    %505 = vmatpush1.msra.mxu0 %v450
    %506 = vmatprep.subr.mxu0 0.0
    %507 = vmatpush2.msra.mxu0 0.0
    %508 = vmatprep.subr.mxu0 0.0
    %509 = vmatpush2.msra.mxu0 0.0
    %510 = vmatprep.subr.mxu0 0.0
    %511 = vmatpush2.msra.mxu0 0.0
    %512 = vmatprep.subr.mxu0 0.0
    %513 = vmatpush2.msra.mxu0 0.0
    %514 = vmatprep.subr.mxu0 0.0
    %515 = vmatpush2.msra.mxu0 0.0
    %516 = vmatprep.subr.mxu0 0.0
    %517 = vmatpush2.msra.mxu0 0.0
    %518 = vmatprep.subr.mxu0 0.0
    %519 = vmatpush2.msra.mxu0 0.0
    %520 = vmatprep.subr.mxu0 0.0
    %521 = vmatpush2.msra.mxu0 0.0
    %522 = vmatprep.subr.mxu0 0.0
    %523 = vmatpush2.msra.mxu0 0.0
    %524 = vmatprep.subr.mxu0 0.0
    %525 = vmatpush2.msra.mxu0 0.0
    %526 = vmatprep.subr.mxu0 0.0
    %527 = vmatpush2.msra.mxu0 0.0
    %528 = vmatprep.subr.mxu0 0.0
    %529 = vmatpush2.msra.mxu0 0.0
    %530 = vmatprep.subr.mxu0 0.0
    %531 = vmatpush2.msra.mxu0 0.0
    %532 = vmatprep.subr.mxu0 0.0
    %533 = vmatpush2.msra.mxu0 0.0
    %534 = vmatprep.subr.mxu0 0.0
    %535 = vmatpush2.msra.mxu0 0.0
    %536 = vmatprep.subr.mxu0 0.0
    %537 = vmatpush2.msra.mxu0 0.0
    %538 = vmatprep.mubr.f32.mxu0 0.0
    %539 = vmatmul.mubr.f32.gmra.mxu0 %v448
    %v540 = vpop.f32.mrf.mxu0
    %v541 = vadd.f32 %v472, %v540
    %v542 = vpop.f32.mrf.mxu0
    %543 = vdwg.mxu0
    %v544 = vtanh.pop %v541
    %s545 = scalar_lea.vmem [#allocation7], 512
    %v546 = vld [vmem:[%s545] sm:$0xff]
    %v547 = vld [vmem:[%s545 + $0x8] sm:$0xff]
    %v548 = vld [vmem:[%s545 + $0x10] sm:$0xff]
    %v549 = vld [vmem:[%s545 + $0x18] sm:$0xff]
    %v550 = vld [vmem:[%s545 + $0x20] sm:$0xff]
    %v551 = vld [vmem:[%s545 + $0x28] sm:$0xff]
    %v552 = vld [vmem:[%s545 + $0x30] sm:$0xff]
    %v553 = vld [vmem:[%s545 + $0x38] sm:$0xff]
    %v554 = vld [vmem:[%s545 + $0x40] sm:$0xff]
    %v555 = vld [vmem:[%s545 + $0x48] sm:$0xff]
    %v556 = vld [vmem:[%s545 + $0x50] sm:$0xff]
    %v557 = vld [vmem:[%s545 + $0x58] sm:$0xff]
    %v558 = vld [vmem:[%s545 + $0x60] sm:$0xff]
    %v559 = vld [vmem:[%s545 + $0x68] sm:$0xff]
    %v560 = vld [vmem:[%s545 + $0x70] sm:$0xff]
    %v561 = vld [vmem:[%s545 + $0x78] sm:$0xff]
    %s562 = scalar_lea.vmem [#allocation8], 5
    %v563 = vld [vmem:[%s562] sm:$0x1]
    %v565 = vlaneseq
    %v566 = vshrl.u32 %v565, 7
    %v567 = vsub.s32 0, %v566
    %v568 = vrot.slane %v563, %v567
    %570 = vmatprep.subr.mxu0 0.0
    %571 = vmatpush1.msra.mxu0 %v561
    %572 = vmatprep.subr.mxu0 0.0
    %573 = vmatpush1.msra.mxu0 %v560
    %574 = vmatprep.subr.mxu0 0.0
    %575 = vmatpush1.msra.mxu0 %v559
    %576 = vmatprep.subr.mxu0 0.0
    %577 = vmatpush1.msra.mxu0 %v558
    %578 = vmatprep.subr.mxu0 0.0
    %579 = vmatpush1.msra.mxu0 %v557
    %580 = vmatprep.subr.mxu0 0.0
    %581 = vmatpush1.msra.mxu0 %v556
    %582 = vmatprep.subr.mxu0 0.0
    %583 = vmatpush1.msra.mxu0 %v555
    %584 = vmatprep.subr.mxu0 0.0
    %585 = vmatpush1.msra.mxu0 %v554
    %586 = vmatprep.subr.mxu0 0.0
    %587 = vmatpush1.msra.mxu0 %v553
    %588 = vmatprep.subr.mxu0 0.0
    %589 = vmatpush1.msra.mxu0 %v552
    %590 = vmatprep.subr.mxu0 0.0
    %591 = vmatpush1.msra.mxu0 %v551
    %592 = vmatprep.subr.mxu0 0.0
    %593 = vmatpush1.msra.mxu0 %v550
    %594 = vmatprep.subr.mxu0 0.0
    %595 = vmatpush1.msra.mxu0 %v549
    %596 = vmatprep.subr.mxu0 0.0
    %597 = vmatpush1.msra.mxu0 %v548
    %598 = vmatprep.subr.mxu0 0.0
    %599 = vmatpush1.msra.mxu0 %v547
    %600 = vmatprep.subr.mxu0 0.0
    %601 = vmatpush1.msra.mxu0 %v546
    %602 = vmatprep.subr.mxu0 0.0
    %603 = vmatpush2.msra.mxu0 0.0
    %604 = vmatprep.subr.mxu0 0.0
    %605 = vmatpush2.msra.mxu0 0.0
    %606 = vmatprep.subr.mxu0 0.0
    %607 = vmatpush2.msra.mxu0 0.0
    %608 = vmatprep.subr.mxu0 0.0
    %609 = vmatpush2.msra.mxu0 0.0
    %610 = vmatprep.subr.mxu0 0.0
    %611 = vmatpush2.msra.mxu0 0.0
    %612 = vmatprep.subr.mxu0 0.0
    %613 = vmatpush2.msra.mxu0 0.0
    %614 = vmatprep.subr.mxu0 0.0
    %615 = vmatpush2.msra.mxu0 0.0
    %616 = vmatprep.subr.mxu0 0.0
    %617 = vmatpush2.msra.mxu0 0.0
    %618 = vmatprep.subr.mxu0 0.0
    %619 = vmatpush2.msra.mxu0 0.0
    %620 = vmatprep.subr.mxu0 0.0
    %621 = vmatpush2.msra.mxu0 0.0
    %622 = vmatprep.subr.mxu0 0.0
    %623 = vmatpush2.msra.mxu0 0.0
    %624 = vmatprep.subr.mxu0 0.0
    %625 = vmatpush2.msra.mxu0 0.0
    %626 = vmatprep.subr.mxu0 0.0
    %627 = vmatpush2.msra.mxu0 0.0
    %628 = vmatprep.subr.mxu0 0.0
    %629 = vmatpush2.msra.mxu0 0.0
    %630 = vmatprep.subr.mxu0 0.0
    %631 = vmatpush2.msra.mxu0 0.0
    %632 = vmatprep.subr.mxu0 0.0
    %633 = vmatpush2.msra.mxu0 0.0
    %634 = vmatprep.mubr.f32.mxu0 0.0
    %635 = vmatmul.mubr.f32.gmra.mxu0 %v544
    %v636 = vpop.f32.mrf.mxu0
    %v637 = vadd.f32 %v568, %v636
    %v638 = vpop.f32.mrf.mxu0
    %639 = vdwg.mxu0
    %v640 = vtanh.pop %v637
    %s641 = scalar_lea.vmem [#allocation7], 640
    %v642 = vld [vmem:[%s641] sm:$0xff]
    %v643 = vld [vmem:[%s641 + $0x8] sm:$0xff]
    %v644 = vld [vmem:[%s641 + $0x10] sm:$0xff]
    %v645 = vld [vmem:[%s641 + $0x18] sm:$0xff]
    %v646 = vld [vmem:[%s641 + $0x20] sm:$0xff]
    %v647 = vld [vmem:[%s641 + $0x28] sm:$0xff]
    %v648 = vld [vmem:[%s641 + $0x30] sm:$0xff]
    %v649 = vld [vmem:[%s641 + $0x38] sm:$0xff]
    %v650 = vld [vmem:[%s641 + $0x40] sm:$0xff]
    %v651 = vld [vmem:[%s641 + $0x48] sm:$0xff]
    %v652 = vld [vmem:[%s641 + $0x50] sm:$0xff]
    %v653 = vld [vmem:[%s641 + $0x58] sm:$0xff]
    %v654 = vld [vmem:[%s641 + $0x60] sm:$0xff]
    %v655 = vld [vmem:[%s641 + $0x68] sm:$0xff]
    %v656 = vld [vmem:[%s641 + $0x70] sm:$0xff]
    %v657 = vld [vmem:[%s641 + $0x78] sm:$0xff]
    %s658 = scalar_lea.vmem [#allocation8], 6
    %v659 = vld [vmem:[%s658] sm:$0x1]
    %v661 = vlaneseq
    %v662 = vshrl.u32 %v661, 7
    %v663 = vsub.s32 0, %v662
    %v664 = vrot.slane %v659, %v663
    %666 = vmatprep.subr.mxu0 0.0
    %667 = vmatpush1.msra.mxu0 %v657
    %668 = vmatprep.subr.mxu0 0.0
    %669 = vmatpush1.msra.mxu0 %v656
    %670 = vmatprep.subr.mxu0 0.0
    %671 = vmatpush1.msra.mxu0 %v655
    %672 = vmatprep.subr.mxu0 0.0
    %673 = vmatpush1.msra.mxu0 %v654
    %674 = vmatprep.subr.mxu0 0.0
    %675 = vmatpush1.msra.mxu0 %v653
    %676 = vmatprep.subr.mxu0 0.0
    %677 = vmatpush1.msra.mxu0 %v652
    %678 = vmatprep.subr.mxu0 0.0
    %679 = vmatpush1.msra.mxu0 %v651
    %680 = vmatprep.subr.mxu0 0.0
    %681 = vmatpush1.msra.mxu0 %v650
    %682 = vmatprep.subr.mxu0 0.0
    %683 = vmatpush1.msra.mxu0 %v649
    %684 = vmatprep.subr.mxu0 0.0
    %685 = vmatpush1.msra.mxu0 %v648
    %686 = vmatprep.subr.mxu0 0.0
    %687 = vmatpush1.msra.mxu0 %v647
    %688 = vmatprep.subr.mxu0 0.0
    %689 = vmatpush1.msra.mxu0 %v646
    %690 = vmatprep.subr.mxu0 0.0
    %691 = vmatpush1.msra.mxu0 %v645
    %692 = vmatprep.subr.mxu0 0.0
    %693 = vmatpush1.msra.mxu0 %v644
    %694 = vmatprep.subr.mxu0 0.0
    %695 = vmatpush1.msra.mxu0 %v643
    %696 = vmatprep.subr.mxu0 0.0
    %697 = vmatpush1.msra.mxu0 %v642
    %698 = vmatprep.subr.mxu0 0.0
    %699 = vmatpush2.msra.mxu0 0.0
    %700 = vmatprep.subr.mxu0 0.0
    %701 = vmatpush2.msra.mxu0 0.0
    %702 = vmatprep.subr.mxu0 0.0
    %703 = vmatpush2.msra.mxu0 0.0
    %704 = vmatprep.subr.mxu0 0.0
    %705 = vmatpush2.msra.mxu0 0.0
    %706 = vmatprep.subr.mxu0 0.0
    %707 = vmatpush2.msra.mxu0 0.0
    %708 = vmatprep.subr.mxu0 0.0
    %709 = vmatpush2.msra.mxu0 0.0
    %710 = vmatprep.subr.mxu0 0.0
    %711 = vmatpush2.msra.mxu0 0.0
    %712 = vmatprep.subr.mxu0 0.0
    %713 = vmatpush2.msra.mxu0 0.0
    %714 = vmatprep.subr.mxu0 0.0
    %715 = vmatpush2.msra.mxu0 0.0
    %716 = vmatprep.subr.mxu0 0.0
    %717 = vmatpush2.msra.mxu0 0.0
    %718 = vmatprep.subr.mxu0 0.0
    %719 = vmatpush2.msra.mxu0 0.0
    %720 = vmatprep.subr.mxu0 0.0
    %721 = vmatpush2.msra.mxu0 0.0
    %722 = vmatprep.subr.mxu0 0.0
    %723 = vmatpush2.msra.mxu0 0.0
    %724 = vmatprep.subr.mxu0 0.0
    %725 = vmatpush2.msra.mxu0 0.0
    %726 = vmatprep.subr.mxu0 0.0
    %727 = vmatpush2.msra.mxu0 0.0
    %728 = vmatprep.subr.mxu0 0.0
    %729 = vmatpush2.msra.mxu0 0.0
    %730 = vmatprep.mubr.f32.mxu0 0.0
    %731 = vmatmul.mubr.f32.gmra.mxu0 %v640
    %v732 = vpop.f32.mrf.mxu0
    %v733 = vadd.f32 %v664, %v732
    %v734 = vpop.f32.mrf.mxu0
    %735 = vdwg.mxu0
    %v736 = vtanh.pop %v733
    %s737 = scalar_lea.vmem [#allocation7], 768
    %v738 = vld [vmem:[%s737] sm:$0xff]
    %v739 = vld [vmem:[%s737 + $0x8] sm:$0xff]
    %v740 = vld [vmem:[%s737 + $0x10] sm:$0xff]
    %v741 = vld [vmem:[%s737 + $0x18] sm:$0xff]
    %v742 = vld [vmem:[%s737 + $0x20] sm:$0xff]
    %v743 = vld [vmem:[%s737 + $0x28] sm:$0xff]
    %v744 = vld [vmem:[%s737 + $0x30] sm:$0xff]
    %v745 = vld [vmem:[%s737 + $0x38] sm:$0xff]
    %v746 = vld [vmem:[%s737 + $0x40] sm:$0xff]
    %v747 = vld [vmem:[%s737 + $0x48] sm:$0xff]
    %v748 = vld [vmem:[%s737 + $0x50] sm:$0xff]
    %v749 = vld [vmem:[%s737 + $0x58] sm:$0xff]
    %v750 = vld [vmem:[%s737 + $0x60] sm:$0xff]
    %v751 = vld [vmem:[%s737 + $0x68] sm:$0xff]
    %v752 = vld [vmem:[%s737 + $0x70] sm:$0xff]
    %v753 = vld [vmem:[%s737 + $0x78] sm:$0xff]
    %s754 = scalar_lea.vmem [#allocation8], 7
    %v755 = vld [vmem:[%s754] sm:$0x1]
    %v757 = vlaneseq
    %v758 = vshrl.u32 %v757, 7
    %v759 = vsub.s32 0, %v758
    %v760 = vrot.slane %v755, %v759
    %762 = vmatprep.subr.mxu0 0.0
    %763 = vmatpush1.msra.mxu0 %v753
    %764 = vmatprep.subr.mxu0 0.0
    %765 = vmatpush1.msra.mxu0 %v752
    %766 = vmatprep.subr.mxu0 0.0
    %767 = vmatpush1.msra.mxu0 %v751
    %768 = vmatprep.subr.mxu0 0.0
    %769 = vmatpush1.msra.mxu0 %v750
    %770 = vmatprep.subr.mxu0 0.0
    %771 = vmatpush1.msra.mxu0 %v749
    %772 = vmatprep.subr.mxu0 0.0
    %773 = vmatpush1.msra.mxu0 %v748
    %774 = vmatprep.subr.mxu0 0.0
    %775 = vmatpush1.msra.mxu0 %v747
    %776 = vmatprep.subr.mxu0 0.0
    %777 = vmatpush1.msra.mxu0 %v746
    %778 = vmatprep.subr.mxu0 0.0
    %779 = vmatpush1.msra.mxu0 %v745
    %780 = vmatprep.subr.mxu0 0.0
    %781 = vmatpush1.msra.mxu0 %v744
    %782 = vmatprep.subr.mxu0 0.0
    %783 = vmatpush1.msra.mxu0 %v743
    %784 = vmatprep.subr.mxu0 0.0
    %785 = vmatpush1.msra.mxu0 %v742
    %786 = vmatprep.subr.mxu0 0.0
    %787 = vmatpush1.msra.mxu0 %v741
    %788 = vmatprep.subr.mxu0 0.0
    %789 = vmatpush1.msra.mxu0 %v740
    %790 = vmatprep.subr.mxu0 0.0
    %791 = vmatpush1.msra.mxu0 %v739
    %792 = vmatprep.subr.mxu0 0.0
    %793 = vmatpush1.msra.mxu0 %v738
    %794 = vmatprep.subr.mxu0 0.0
    %795 = vmatpush2.msra.mxu0 0.0
    %796 = vmatprep.subr.mxu0 0.0
    %797 = vmatpush2.msra.mxu0 0.0
    %798 = vmatprep.subr.mxu0 0.0
    %799 = vmatpush2.msra.mxu0 0.0
    %800 = vmatprep.subr.mxu0 0.0
    %801 = vmatpush2.msra.mxu0 0.0
    %802 = vmatprep.subr.mxu0 0.0
    %803 = vmatpush2.msra.mxu0 0.0
    %804 = vmatprep.subr.mxu0 0.0
    %805 = vmatpush2.msra.mxu0 0.0
    %806 = vmatprep.subr.mxu0 0.0
    %807 = vmatpush2.msra.mxu0 0.0
    %808 = vmatprep.subr.mxu0 0.0
    %809 = vmatpush2.msra.mxu0 0.0
    %810 = vmatprep.subr.mxu0 0.0
    %811 = vmatpush2.msra.mxu0 0.0
    %812 = vmatprep.subr.mxu0 0.0
    %813 = vmatpush2.msra.mxu0 0.0
    %814 = vmatprep.subr.mxu0 0.0
    %815 = vmatpush2.msra.mxu0 0.0
    %816 = vmatprep.subr.mxu0 0.0
    %817 = vmatpush2.msra.mxu0 0.0
    %818 = vmatprep.subr.mxu0 0.0
    %819 = vmatpush2.msra.mxu0 0.0
    %820 = vmatprep.subr.mxu0 0.0
    %821 = vmatpush2.msra.mxu0 0.0
    %822 = vmatprep.subr.mxu0 0.0
    %823 = vmatpush2.msra.mxu0 0.0
    %824 = vmatprep.subr.mxu0 0.0
    %825 = vmatpush2.msra.mxu0 0.0
    %826 = vmatprep.mubr.f32.mxu0 0.0
    %827 = vmatmul.mubr.f32.gmra.mxu0 %v736
    %v828 = vpop.f32.mrf.mxu0
    %v829 = vadd.f32 %v760, %v828
    %v830 = vpop.f32.mrf.mxu0
    %831 = vdwg.mxu0
    %v832 = vtanh.pop %v829
    %s833 = scalar_lea.vmem [#allocation7], 896
    %v834 = vld [vmem:[%s833] sm:$0xff]
    %v835 = vld [vmem:[%s833 + $0x8] sm:$0xff]
    %v836 = vld [vmem:[%s833 + $0x10] sm:$0xff]
    %v837 = vld [vmem:[%s833 + $0x18] sm:$0xff]
    %v838 = vld [vmem:[%s833 + $0x20] sm:$0xff]
    %v839 = vld [vmem:[%s833 + $0x28] sm:$0xff]
    %v840 = vld [vmem:[%s833 + $0x30] sm:$0xff]
    %v841 = vld [vmem:[%s833 + $0x38] sm:$0xff]
    %v842 = vld [vmem:[%s833 + $0x40] sm:$0xff]
    %v843 = vld [vmem:[%s833 + $0x48] sm:$0xff]
    %v844 = vld [vmem:[%s833 + $0x50] sm:$0xff]
    %v845 = vld [vmem:[%s833 + $0x58] sm:$0xff]
    %v846 = vld [vmem:[%s833 + $0x60] sm:$0xff]
    %v847 = vld [vmem:[%s833 + $0x68] sm:$0xff]
    %v848 = vld [vmem:[%s833 + $0x70] sm:$0xff]
    %v849 = vld [vmem:[%s833 + $0x78] sm:$0xff]
    %s850 = scalar_lea.vmem [#allocation8], 8
    %v851 = vld [vmem:[%s850] sm:$0x1]
    %v853 = vlaneseq
    %v854 = vshrl.u32 %v853, 7
    %v855 = vsub.s32 0, %v854
    %v856 = vrot.slane %v851, %v855
    %858 = vmatprep.subr.mxu0 0.0
    %859 = vmatpush1.msra.mxu0 %v849
    %860 = vmatprep.subr.mxu0 0.0
    %861 = vmatpush1.msra.mxu0 %v848
    %862 = vmatprep.subr.mxu0 0.0
    %863 = vmatpush1.msra.mxu0 %v847
    %864 = vmatprep.subr.mxu0 0.0
    %865 = vmatpush1.msra.mxu0 %v846
    %866 = vmatprep.subr.mxu0 0.0
    %867 = vmatpush1.msra.mxu0 %v845
    %868 = vmatprep.subr.mxu0 0.0
    %869 = vmatpush1.msra.mxu0 %v844
    %870 = vmatprep.subr.mxu0 0.0
    %871 = vmatpush1.msra.mxu0 %v843
    %872 = vmatprep.subr.mxu0 0.0
    %873 = vmatpush1.msra.mxu0 %v842
    %874 = vmatprep.subr.mxu0 0.0
    %875 = vmatpush1.msra.mxu0 %v841
    %876 = vmatprep.subr.mxu0 0.0
    %877 = vmatpush1.msra.mxu0 %v840
    %878 = vmatprep.subr.mxu0 0.0
    %879 = vmatpush1.msra.mxu0 %v839
    %880 = vmatprep.subr.mxu0 0.0
    %881 = vmatpush1.msra.mxu0 %v838
    %882 = vmatprep.subr.mxu0 0.0
    %883 = vmatpush1.msra.mxu0 %v837
    %884 = vmatprep.subr.mxu0 0.0
    %885 = vmatpush1.msra.mxu0 %v836
    %886 = vmatprep.subr.mxu0 0.0
    %887 = vmatpush1.msra.mxu0 %v835
    %888 = vmatprep.subr.mxu0 0.0
    %889 = vmatpush1.msra.mxu0 %v834
    %890 = vmatprep.subr.mxu0 0.0
    %891 = vmatpush2.msra.mxu0 0.0
    %892 = vmatprep.subr.mxu0 0.0
    %893 = vmatpush2.msra.mxu0 0.0
    %894 = vmatprep.subr.mxu0 0.0
    %895 = vmatpush2.msra.mxu0 0.0
    %896 = vmatprep.subr.mxu0 0.0
    %897 = vmatpush2.msra.mxu0 0.0
    %898 = vmatprep.subr.mxu0 0.0
    %899 = vmatpush2.msra.mxu0 0.0
    %900 = vmatprep.subr.mxu0 0.0
    %901 = vmatpush2.msra.mxu0 0.0
    %902 = vmatprep.subr.mxu0 0.0
    %903 = vmatpush2.msra.mxu0 0.0
    %904 = vmatprep.subr.mxu0 0.0
    %905 = vmatpush2.msra.mxu0 0.0
    %906 = vmatprep.subr.mxu0 0.0
    %907 = vmatpush2.msra.mxu0 0.0
    %908 = vmatprep.subr.mxu0 0.0
    %909 = vmatpush2.msra.mxu0 0.0
    %910 = vmatprep.subr.mxu0 0.0
    %911 = vmatpush2.msra.mxu0 0.0
    %912 = vmatprep.subr.mxu0 0.0
    %913 = vmatpush2.msra.mxu0 0.0
    %914 = vmatprep.subr.mxu0 0.0
    %915 = vmatpush2.msra.mxu0 0.0
    %916 = vmatprep.subr.mxu0 0.0
    %917 = vmatpush2.msra.mxu0 0.0
    %918 = vmatprep.subr.mxu0 0.0
    %919 = vmatpush2.msra.mxu0 0.0
    %920 = vmatprep.subr.mxu0 0.0
    %921 = vmatpush2.msra.mxu0 0.0
    %922 = vmatprep.mubr.f32.mxu0 0.0
    %923 = vmatmul.mubr.f32.gmra.mxu0 %v832
    %v924 = vpop.f32.mrf.mxu0
    %v925 = vadd.f32 %v856, %v924
    %v926 = vpop.f32.mrf.mxu0
    %927 = vdwg.mxu0
    %v928 = vtanh.pop %v925
    %s929 = scalar_lea.vmem [#allocation7], 1024
    %v930 = vld [vmem:[%s929] sm:$0xff]
    %v931 = vld [vmem:[%s929 + $0x8] sm:$0xff]
    %v932 = vld [vmem:[%s929 + $0x10] sm:$0xff]
    %v933 = vld [vmem:[%s929 + $0x18] sm:$0xff]
    %v934 = vld [vmem:[%s929 + $0x20] sm:$0xff]
    %v935 = vld [vmem:[%s929 + $0x28] sm:$0xff]
    %v936 = vld [vmem:[%s929 + $0x30] sm:$0xff]
    %v937 = vld [vmem:[%s929 + $0x38] sm:$0xff]
    %v938 = vld [vmem:[%s929 + $0x40] sm:$0xff]
    %v939 = vld [vmem:[%s929 + $0x48] sm:$0xff]
    %v940 = vld [vmem:[%s929 + $0x50] sm:$0xff]
    %v941 = vld [vmem:[%s929 + $0x58] sm:$0xff]
    %v942 = vld [vmem:[%s929 + $0x60] sm:$0xff]
    %v943 = vld [vmem:[%s929 + $0x68] sm:$0xff]
    %v944 = vld [vmem:[%s929 + $0x70] sm:$0xff]
    %v945 = vld [vmem:[%s929 + $0x78] sm:$0xff]
    %s946 = scalar_lea.vmem [#allocation8], 9
    %v947 = vld [vmem:[%s946] sm:$0x1]
    %v949 = vlaneseq
    %v950 = vshrl.u32 %v949, 7
    %v951 = vsub.s32 0, %v950
    %v952 = vrot.slane %v947, %v951
    %954 = vmatprep.subr.mxu0 0.0
    %955 = vmatpush1.msra.mxu0 %v945
    %956 = vmatprep.subr.mxu0 0.0
    %957 = vmatpush1.msra.mxu0 %v944
    %958 = vmatprep.subr.mxu0 0.0
    %959 = vmatpush1.msra.mxu0 %v943
    %960 = vmatprep.subr.mxu0 0.0
    %961 = vmatpush1.msra.mxu0 %v942
    %962 = vmatprep.subr.mxu0 0.0
    %963 = vmatpush1.msra.mxu0 %v941
    %964 = vmatprep.subr.mxu0 0.0
    %965 = vmatpush1.msra.mxu0 %v940
    %966 = vmatprep.subr.mxu0 0.0
    %967 = vmatpush1.msra.mxu0 %v939
    %968 = vmatprep.subr.mxu0 0.0
    %969 = vmatpush1.msra.mxu0 %v938
    %970 = vmatprep.subr.mxu0 0.0
    %971 = vmatpush1.msra.mxu0 %v937
    %972 = vmatprep.subr.mxu0 0.0
    %973 = vmatpush1.msra.mxu0 %v936
    %974 = vmatprep.subr.mxu0 0.0
    %975 = vmatpush1.msra.mxu0 %v935
    %976 = vmatprep.subr.mxu0 0.0
    %977 = vmatpush1.msra.mxu0 %v934
    %978 = vmatprep.subr.mxu0 0.0
    %979 = vmatpush1.msra.mxu0 %v933
    %980 = vmatprep.subr.mxu0 0.0
    %981 = vmatpush1.msra.mxu0 %v932
    %982 = vmatprep.subr.mxu0 0.0
    %983 = vmatpush1.msra.mxu0 %v931
    %984 = vmatprep.subr.mxu0 0.0
    %985 = vmatpush1.msra.mxu0 %v930
    %986 = vmatprep.subr.mxu0 0.0
    %987 = vmatpush2.msra.mxu0 0.0
    %988 = vmatprep.subr.mxu0 0.0
    %989 = vmatpush2.msra.mxu0 0.0
    %990 = vmatprep.subr.mxu0 0.0
    %991 = vmatpush2.msra.mxu0 0.0
    %992 = vmatprep.subr.mxu0 0.0
    %993 = vmatpush2.msra.mxu0 0.0
    %994 = vmatprep.subr.mxu0 0.0
    %995 = vmatpush2.msra.mxu0 0.0
    %996 = vmatprep.subr.mxu0 0.0
    %997 = vmatpush2.msra.mxu0 0.0
    %998 = vmatprep.subr.mxu0 0.0
    %999 = vmatpush2.msra.mxu0 0.0
    %1000 = vmatprep.subr.mxu0 0.0
    %1001 = vmatpush2.msra.mxu0 0.0
    %1002 = vmatprep.subr.mxu0 0.0
    %1003 = vmatpush2.msra.mxu0 0.0
    %1004 = vmatprep.subr.mxu0 0.0
    %1005 = vmatpush2.msra.mxu0 0.0
    %1006 = vmatprep.subr.mxu0 0.0
    %1007 = vmatpush2.msra.mxu0 0.0
    %1008 = vmatprep.subr.mxu0 0.0
    %1009 = vmatpush2.msra.mxu0 0.0
    %1010 = vmatprep.subr.mxu0 0.0
    %1011 = vmatpush2.msra.mxu0 0.0
    %1012 = vmatprep.subr.mxu0 0.0
    %1013 = vmatpush2.msra.mxu0 0.0
    %1014 = vmatprep.subr.mxu0 0.0
    %1015 = vmatpush2.msra.mxu0 0.0
    %1016 = vmatprep.subr.mxu0 0.0
    %1017 = vmatpush2.msra.mxu0 0.0
    %1018 = vmatprep.mubr.f32.mxu0 0.0
    %1019 = vmatmul.mubr.f32.gmra.mxu0 %v928
    %v1020 = vpop.f32.mrf.mxu0
    %v1021 = vadd.f32 %v952, %v1020
    %v1022 = vpop.f32.mrf.mxu0
    %1023 = vdwg.mxu0
    %v1024 = vtanh.pop %v1021
    %s1025 = scalar_lea.vmem [#allocation7], 1152
    %v1026 = vld [vmem:[%s1025] sm:$0xff]
    %v1027 = vld [vmem:[%s1025 + $0x8] sm:$0xff]
    %v1028 = vld [vmem:[%s1025 + $0x10] sm:$0xff]
    %v1029 = vld [vmem:[%s1025 + $0x18] sm:$0xff]
    %v1030 = vld [vmem:[%s1025 + $0x20] sm:$0xff]
    %v1031 = vld [vmem:[%s1025 + $0x28] sm:$0xff]
    %v1032 = vld [vmem:[%s1025 + $0x30] sm:$0xff]
    %v1033 = vld [vmem:[%s1025 + $0x38] sm:$0xff]
    %v1034 = vld [vmem:[%s1025 + $0x40] sm:$0xff]
    %v1035 = vld [vmem:[%s1025 + $0x48] sm:$0xff]
    %v1036 = vld [vmem:[%s1025 + $0x50] sm:$0xff]
    %v1037 = vld [vmem:[%s1025 + $0x58] sm:$0xff]
    %v1038 = vld [vmem:[%s1025 + $0x60] sm:$0xff]
    %v1039 = vld [vmem:[%s1025 + $0x68] sm:$0xff]
    %v1040 = vld [vmem:[%s1025 + $0x70] sm:$0xff]
    %v1041 = vld [vmem:[%s1025 + $0x78] sm:$0xff]
    %s1042 = scalar_lea.vmem [#allocation8], 10
    %v1043 = vld [vmem:[%s1042] sm:$0x1]
    %v1045 = vlaneseq
    %v1046 = vshrl.u32 %v1045, 7
    %v1047 = vsub.s32 0, %v1046
    %v1048 = vrot.slane %v1043, %v1047
    %1050 = vmatprep.subr.mxu0 0.0
    %1051 = vmatpush1.msra.mxu0 %v1041
    %1052 = vmatprep.subr.mxu0 0.0
    %1053 = vmatpush1.msra.mxu0 %v1040
    %1054 = vmatprep.subr.mxu0 0.0
    %1055 = vmatpush1.msra.mxu0 %v1039
    %1056 = vmatprep.subr.mxu0 0.0
    %1057 = vmatpush1.msra.mxu0 %v1038
    %1058 = vmatprep.subr.mxu0 0.0
    %1059 = vmatpush1.msra.mxu0 %v1037
    %1060 = vmatprep.subr.mxu0 0.0
    %1061 = vmatpush1.msra.mxu0 %v1036
    %1062 = vmatprep.subr.mxu0 0.0
    %1063 = vmatpush1.msra.mxu0 %v1035
    %1064 = vmatprep.subr.mxu0 0.0
    %1065 = vmatpush1.msra.mxu0 %v1034
    %1066 = vmatprep.subr.mxu0 0.0
    %1067 = vmatpush1.msra.mxu0 %v1033
    %1068 = vmatprep.subr.mxu0 0.0
    %1069 = vmatpush1.msra.mxu0 %v1032
    %1070 = vmatprep.subr.mxu0 0.0
    %1071 = vmatpush1.msra.mxu0 %v1031
    %1072 = vmatprep.subr.mxu0 0.0
    %1073 = vmatpush1.msra.mxu0 %v1030
    %1074 = vmatprep.subr.mxu0 0.0
    %1075 = vmatpush1.msra.mxu0 %v1029
    %1076 = vmatprep.subr.mxu0 0.0
    %1077 = vmatpush1.msra.mxu0 %v1028
    %1078 = vmatprep.subr.mxu0 0.0
    %1079 = vmatpush1.msra.mxu0 %v1027
    %1080 = vmatprep.subr.mxu0 0.0
    %1081 = vmatpush1.msra.mxu0 %v1026
    %1082 = vmatprep.subr.mxu0 0.0
    %1083 = vmatpush2.msra.mxu0 0.0
    %1084 = vmatprep.subr.mxu0 0.0
    %1085 = vmatpush2.msra.mxu0 0.0
    %1086 = vmatprep.subr.mxu0 0.0
    %1087 = vmatpush2.msra.mxu0 0.0
    %1088 = vmatprep.subr.mxu0 0.0
    %1089 = vmatpush2.msra.mxu0 0.0
    %1090 = vmatprep.subr.mxu0 0.0
    %1091 = vmatpush2.msra.mxu0 0.0
    %1092 = vmatprep.subr.mxu0 0.0
    %1093 = vmatpush2.msra.mxu0 0.0
    %1094 = vmatprep.subr.mxu0 0.0
    %1095 = vmatpush2.msra.mxu0 0.0
    %1096 = vmatprep.subr.mxu0 0.0
    %1097 = vmatpush2.msra.mxu0 0.0
    %1098 = vmatprep.subr.mxu0 0.0
    %1099 = vmatpush2.msra.mxu0 0.0
    %1100 = vmatprep.subr.mxu0 0.0
    %1101 = vmatpush2.msra.mxu0 0.0
    %1102 = vmatprep.subr.mxu0 0.0
    %1103 = vmatpush2.msra.mxu0 0.0
    %1104 = vmatprep.subr.mxu0 0.0
    %1105 = vmatpush2.msra.mxu0 0.0
    %1106 = vmatprep.subr.mxu0 0.0
    %1107 = vmatpush2.msra.mxu0 0.0
    %1108 = vmatprep.subr.mxu0 0.0
    %1109 = vmatpush2.msra.mxu0 0.0
    %1110 = vmatprep.subr.mxu0 0.0
    %1111 = vmatpush2.msra.mxu0 0.0
    %1112 = vmatprep.subr.mxu0 0.0
    %1113 = vmatpush2.msra.mxu0 0.0
    %1114 = vmatprep.mubr.f32.mxu0 0.0
    %1115 = vmatmul.mubr.f32.gmra.mxu0 %v1024
    %v1116 = vpop.f32.mrf.mxu0
    %v1117 = vadd.f32 %v1048, %v1116
    %v1118 = vpop.f32.mrf.mxu0
    %1119 = vdwg.mxu0
    %v1120 = vtanh.pop %v1117
    %s1121 = scalar_lea.vmem [#allocation7], 1280
    %v1122 = vld [vmem:[%s1121] sm:$0xff]
    %v1123 = vld [vmem:[%s1121 + $0x8] sm:$0xff]
    %v1124 = vld [vmem:[%s1121 + $0x10] sm:$0xff]
    %v1125 = vld [vmem:[%s1121 + $0x18] sm:$0xff]
    %v1126 = vld [vmem:[%s1121 + $0x20] sm:$0xff]
    %v1127 = vld [vmem:[%s1121 + $0x28] sm:$0xff]
    %v1128 = vld [vmem:[%s1121 + $0x30] sm:$0xff]
    %v1129 = vld [vmem:[%s1121 + $0x38] sm:$0xff]
    %v1130 = vld [vmem:[%s1121 + $0x40] sm:$0xff]
    %v1131 = vld [vmem:[%s1121 + $0x48] sm:$0xff]
    %v1132 = vld [vmem:[%s1121 + $0x50] sm:$0xff]
    %v1133 = vld [vmem:[%s1121 + $0x58] sm:$0xff]
    %v1134 = vld [vmem:[%s1121 + $0x60] sm:$0xff]
    %v1135 = vld [vmem:[%s1121 + $0x68] sm:$0xff]
    %v1136 = vld [vmem:[%s1121 + $0x70] sm:$0xff]
    %v1137 = vld [vmem:[%s1121 + $0x78] sm:$0xff]
    %s1138 = scalar_lea.vmem [#allocation8], 11
    %v1139 = vld [vmem:[%s1138] sm:$0x1]
    %v1141 = vlaneseq
    %v1142 = vshrl.u32 %v1141, 7
    %v1143 = vsub.s32 0, %v1142
    %v1144 = vrot.slane %v1139, %v1143
    %1146 = vmatprep.subr.mxu0 0.0
    %1147 = vmatpush1.msra.mxu0 %v1137
    %1148 = vmatprep.subr.mxu0 0.0
    %1149 = vmatpush1.msra.mxu0 %v1136
    %1150 = vmatprep.subr.mxu0 0.0
    %1151 = vmatpush1.msra.mxu0 %v1135
    %1152 = vmatprep.subr.mxu0 0.0
    %1153 = vmatpush1.msra.mxu0 %v1134
    %1154 = vmatprep.subr.mxu0 0.0
    %1155 = vmatpush1.msra.mxu0 %v1133
    %1156 = vmatprep.subr.mxu0 0.0
    %1157 = vmatpush1.msra.mxu0 %v1132
    %1158 = vmatprep.subr.mxu0 0.0
    %1159 = vmatpush1.msra.mxu0 %v1131
    %1160 = vmatprep.subr.mxu0 0.0
    %1161 = vmatpush1.msra.mxu0 %v1130
    %1162 = vmatprep.subr.mxu0 0.0
    %1163 = vmatpush1.msra.mxu0 %v1129
    %1164 = vmatprep.subr.mxu0 0.0
    %1165 = vmatpush1.msra.mxu0 %v1128
    %1166 = vmatprep.subr.mxu0 0.0
    %1167 = vmatpush1.msra.mxu0 %v1127
    %1168 = vmatprep.subr.mxu0 0.0
    %1169 = vmatpush1.msra.mxu0 %v1126
    %1170 = vmatprep.subr.mxu0 0.0
    %1171 = vmatpush1.msra.mxu0 %v1125
    %1172 = vmatprep.subr.mxu0 0.0
    %1173 = vmatpush1.msra.mxu0 %v1124
    %1174 = vmatprep.subr.mxu0 0.0
    %1175 = vmatpush1.msra.mxu0 %v1123
    %1176 = vmatprep.subr.mxu0 0.0
    %1177 = vmatpush1.msra.mxu0 %v1122
    %1178 = vmatprep.subr.mxu0 0.0
    %1179 = vmatpush2.msra.mxu0 0.0
    %1180 = vmatprep.subr.mxu0 0.0
    %1181 = vmatpush2.msra.mxu0 0.0
    %1182 = vmatprep.subr.mxu0 0.0
    %1183 = vmatpush2.msra.mxu0 0.0
    %1184 = vmatprep.subr.mxu0 0.0
    %1185 = vmatpush2.msra.mxu0 0.0
    %1186 = vmatprep.subr.mxu0 0.0
    %1187 = vmatpush2.msra.mxu0 0.0
    %1188 = vmatprep.subr.mxu0 0.0
    %1189 = vmatpush2.msra.mxu0 0.0
    %1190 = vmatprep.subr.mxu0 0.0
    %1191 = vmatpush2.msra.mxu0 0.0
    %1192 = vmatprep.subr.mxu0 0.0
    %1193 = vmatpush2.msra.mxu0 0.0
    %1194 = vmatprep.subr.mxu0 0.0
    %1195 = vmatpush2.msra.mxu0 0.0
    %1196 = vmatprep.subr.mxu0 0.0
    %1197 = vmatpush2.msra.mxu0 0.0
    %1198 = vmatprep.subr.mxu0 0.0
    %1199 = vmatpush2.msra.mxu0 0.0
    %1200 = vmatprep.subr.mxu0 0.0
    %1201 = vmatpush2.msra.mxu0 0.0
    %1202 = vmatprep.subr.mxu0 0.0
    %1203 = vmatpush2.msra.mxu0 0.0
    %1204 = vmatprep.subr.mxu0 0.0
    %1205 = vmatpush2.msra.mxu0 0.0
    %1206 = vmatprep.subr.mxu0 0.0
    %1207 = vmatpush2.msra.mxu0 0.0
    %1208 = vmatprep.subr.mxu0 0.0
    %1209 = vmatpush2.msra.mxu0 0.0
    %1210 = vmatprep.mubr.f32.mxu0 0.0
    %1211 = vmatmul.mubr.f32.gmra.mxu0 %v1120
    %v1212 = vpop.f32.mrf.mxu0
    %v1213 = vadd.f32 %v1144, %v1212
    %v1214 = vpop.f32.mrf.mxu0
    %1215 = vdwg.mxu0
    %v1216 = vtanh.pop %v1213
    %s1217 = scalar_lea.vmem [#allocation7], 1408
    %v1218 = vld [vmem:[%s1217] sm:$0xff]
    %v1219 = vld [vmem:[%s1217 + $0x8] sm:$0xff]
    %v1220 = vld [vmem:[%s1217 + $0x10] sm:$0xff]
    %v1221 = vld [vmem:[%s1217 + $0x18] sm:$0xff]
    %v1222 = vld [vmem:[%s1217 + $0x20] sm:$0xff]
    %v1223 = vld [vmem:[%s1217 + $0x28] sm:$0xff]
    %v1224 = vld [vmem:[%s1217 + $0x30] sm:$0xff]
    %v1225 = vld [vmem:[%s1217 + $0x38] sm:$0xff]
    %v1226 = vld [vmem:[%s1217 + $0x40] sm:$0xff]
    %v1227 = vld [vmem:[%s1217 + $0x48] sm:$0xff]
    %v1228 = vld [vmem:[%s1217 + $0x50] sm:$0xff]
    %v1229 = vld [vmem:[%s1217 + $0x58] sm:$0xff]
    %v1230 = vld [vmem:[%s1217 + $0x60] sm:$0xff]
    %v1231 = vld [vmem:[%s1217 + $0x68] sm:$0xff]
    %v1232 = vld [vmem:[%s1217 + $0x70] sm:$0xff]
    %v1233 = vld [vmem:[%s1217 + $0x78] sm:$0xff]
    %s1234 = scalar_lea.vmem [#allocation8], 12
    %v1235 = vld [vmem:[%s1234] sm:$0x1]
    %v1237 = vlaneseq
    %v1238 = vshrl.u32 %v1237, 7
    %v1239 = vsub.s32 0, %v1238
    %v1240 = vrot.slane %v1235, %v1239
    %1242 = vmatprep.subr.mxu0 0.0
    %1243 = vmatpush1.msra.mxu0 %v1233
    %1244 = vmatprep.subr.mxu0 0.0
    %1245 = vmatpush1.msra.mxu0 %v1232
    %1246 = vmatprep.subr.mxu0 0.0
    %1247 = vmatpush1.msra.mxu0 %v1231
    %1248 = vmatprep.subr.mxu0 0.0
    %1249 = vmatpush1.msra.mxu0 %v1230
    %1250 = vmatprep.subr.mxu0 0.0
    %1251 = vmatpush1.msra.mxu0 %v1229
    %1252 = vmatprep.subr.mxu0 0.0
    %1253 = vmatpush1.msra.mxu0 %v1228
    %1254 = vmatprep.subr.mxu0 0.0
    %1255 = vmatpush1.msra.mxu0 %v1227
    %1256 = vmatprep.subr.mxu0 0.0
    %1257 = vmatpush1.msra.mxu0 %v1226
    %1258 = vmatprep.subr.mxu0 0.0
    %1259 = vmatpush1.msra.mxu0 %v1225
    %1260 = vmatprep.subr.mxu0 0.0
    %1261 = vmatpush1.msra.mxu0 %v1224
    %1262 = vmatprep.subr.mxu0 0.0
    %1263 = vmatpush1.msra.mxu0 %v1223
    %1264 = vmatprep.subr.mxu0 0.0
    %1265 = vmatpush1.msra.mxu0 %v1222
    %1266 = vmatprep.subr.mxu0 0.0
    %1267 = vmatpush1.msra.mxu0 %v1221
    %1268 = vmatprep.subr.mxu0 0.0
    %1269 = vmatpush1.msra.mxu0 %v1220
    %1270 = vmatprep.subr.mxu0 0.0
    %1271 = vmatpush1.msra.mxu0 %v1219
    %1272 = vmatprep.subr.mxu0 0.0
    %1273 = vmatpush1.msra.mxu0 %v1218
    %1274 = vmatprep.subr.mxu0 0.0
    %1275 = vmatpush2.msra.mxu0 0.0
    %1276 = vmatprep.subr.mxu0 0.0
    %1277 = vmatpush2.msra.mxu0 0.0
    %1278 = vmatprep.subr.mxu0 0.0
    %1279 = vmatpush2.msra.mxu0 0.0
    %1280 = vmatprep.subr.mxu0 0.0
    %1281 = vmatpush2.msra.mxu0 0.0
    %1282 = vmatprep.subr.mxu0 0.0
    %1283 = vmatpush2.msra.mxu0 0.0
    %1284 = vmatprep.subr.mxu0 0.0
    %1285 = vmatpush2.msra.mxu0 0.0
    %1286 = vmatprep.subr.mxu0 0.0
    %1287 = vmatpush2.msra.mxu0 0.0
    %1288 = vmatprep.subr.mxu0 0.0
    %1289 = vmatpush2.msra.mxu0 0.0
    %1290 = vmatprep.subr.mxu0 0.0
    %1291 = vmatpush2.msra.mxu0 0.0
    %1292 = vmatprep.subr.mxu0 0.0
    %1293 = vmatpush2.msra.mxu0 0.0
    %1294 = vmatprep.subr.mxu0 0.0
    %1295 = vmatpush2.msra.mxu0 0.0
    %1296 = vmatprep.subr.mxu0 0.0
    %1297 = vmatpush2.msra.mxu0 0.0
    %1298 = vmatprep.subr.mxu0 0.0
    %1299 = vmatpush2.msra.mxu0 0.0
    %1300 = vmatprep.subr.mxu0 0.0
    %1301 = vmatpush2.msra.mxu0 0.0
    %1302 = vmatprep.subr.mxu0 0.0
    %1303 = vmatpush2.msra.mxu0 0.0
    %1304 = vmatprep.subr.mxu0 0.0
    %1305 = vmatpush2.msra.mxu0 0.0
    %1306 = vmatprep.mubr.f32.mxu0 0.0
    %1307 = vmatmul.mubr.f32.gmra.mxu0 %v1216
    %v1308 = vpop.f32.mrf.mxu0
    %v1309 = vadd.f32 %v1240, %v1308
    %v1310 = vpop.f32.mrf.mxu0
    %1311 = vdwg.mxu0
    %v1312 = vtanh.pop %v1309
    %s1313 = scalar_lea.vmem [#allocation7], 1536
    %v1314 = vld [vmem:[%s1313] sm:$0xff]
    %v1315 = vld [vmem:[%s1313 + $0x8] sm:$0xff]
    %v1316 = vld [vmem:[%s1313 + $0x10] sm:$0xff]
    %v1317 = vld [vmem:[%s1313 + $0x18] sm:$0xff]
    %v1318 = vld [vmem:[%s1313 + $0x20] sm:$0xff]
    %v1319 = vld [vmem:[%s1313 + $0x28] sm:$0xff]
    %v1320 = vld [vmem:[%s1313 + $0x30] sm:$0xff]
    %v1321 = vld [vmem:[%s1313 + $0x38] sm:$0xff]
    %v1322 = vld [vmem:[%s1313 + $0x40] sm:$0xff]
    %v1323 = vld [vmem:[%s1313 + $0x48] sm:$0xff]
    %v1324 = vld [vmem:[%s1313 + $0x50] sm:$0xff]
    %v1325 = vld [vmem:[%s1313 + $0x58] sm:$0xff]
    %v1326 = vld [vmem:[%s1313 + $0x60] sm:$0xff]
    %v1327 = vld [vmem:[%s1313 + $0x68] sm:$0xff]
    %v1328 = vld [vmem:[%s1313 + $0x70] sm:$0xff]
    %v1329 = vld [vmem:[%s1313 + $0x78] sm:$0xff]
    %s1330 = scalar_lea.vmem [#allocation8], 13
    %v1331 = vld [vmem:[%s1330] sm:$0x1]
    %v1333 = vlaneseq
    %v1334 = vshrl.u32 %v1333, 7
    %v1335 = vsub.s32 0, %v1334
    %v1336 = vrot.slane %v1331, %v1335
    %1338 = vmatprep.subr.mxu0 0.0
    %1339 = vmatpush1.msra.mxu0 %v1329
    %1340 = vmatprep.subr.mxu0 0.0
    %1341 = vmatpush1.msra.mxu0 %v1328
    %1342 = vmatprep.subr.mxu0 0.0
    %1343 = vmatpush1.msra.mxu0 %v1327
    %1344 = vmatprep.subr.mxu0 0.0
    %1345 = vmatpush1.msra.mxu0 %v1326
    %1346 = vmatprep.subr.mxu0 0.0
    %1347 = vmatpush1.msra.mxu0 %v1325
    %1348 = vmatprep.subr.mxu0 0.0
    %1349 = vmatpush1.msra.mxu0 %v1324
    %1350 = vmatprep.subr.mxu0 0.0
    %1351 = vmatpush1.msra.mxu0 %v1323
    %1352 = vmatprep.subr.mxu0 0.0
    %1353 = vmatpush1.msra.mxu0 %v1322
    %1354 = vmatprep.subr.mxu0 0.0
    %1355 = vmatpush1.msra.mxu0 %v1321
    %1356 = vmatprep.subr.mxu0 0.0
    %1357 = vmatpush1.msra.mxu0 %v1320
    %1358 = vmatprep.subr.mxu0 0.0
    %1359 = vmatpush1.msra.mxu0 %v1319
    %1360 = vmatprep.subr.mxu0 0.0
    %1361 = vmatpush1.msra.mxu0 %v1318
    %1362 = vmatprep.subr.mxu0 0.0
    %1363 = vmatpush1.msra.mxu0 %v1317
    %1364 = vmatprep.subr.mxu0 0.0
    %1365 = vmatpush1.msra.mxu0 %v1316
    %1366 = vmatprep.subr.mxu0 0.0
    %1367 = vmatpush1.msra.mxu0 %v1315
    %1368 = vmatprep.subr.mxu0 0.0
    %1369 = vmatpush1.msra.mxu0 %v1314
    %1370 = vmatprep.subr.mxu0 0.0
    %1371 = vmatpush2.msra.mxu0 0.0
    %1372 = vmatprep.subr.mxu0 0.0
    %1373 = vmatpush2.msra.mxu0 0.0
    %1374 = vmatprep.subr.mxu0 0.0
    %1375 = vmatpush2.msra.mxu0 0.0
    %1376 = vmatprep.subr.mxu0 0.0
    %1377 = vmatpush2.msra.mxu0 0.0
    %1378 = vmatprep.subr.mxu0 0.0
    %1379 = vmatpush2.msra.mxu0 0.0
    %1380 = vmatprep.subr.mxu0 0.0
    %1381 = vmatpush2.msra.mxu0 0.0
    %1382 = vmatprep.subr.mxu0 0.0
    %1383 = vmatpush2.msra.mxu0 0.0
    %1384 = vmatprep.subr.mxu0 0.0
    %1385 = vmatpush2.msra.mxu0 0.0
    %1386 = vmatprep.subr.mxu0 0.0
    %1387 = vmatpush2.msra.mxu0 0.0
    %1388 = vmatprep.subr.mxu0 0.0
    %1389 = vmatpush2.msra.mxu0 0.0
    %1390 = vmatprep.subr.mxu0 0.0
    %1391 = vmatpush2.msra.mxu0 0.0
    %1392 = vmatprep.subr.mxu0 0.0
    %1393 = vmatpush2.msra.mxu0 0.0
    %1394 = vmatprep.subr.mxu0 0.0
    %1395 = vmatpush2.msra.mxu0 0.0
    %1396 = vmatprep.subr.mxu0 0.0
    %1397 = vmatpush2.msra.mxu0 0.0
    %1398 = vmatprep.subr.mxu0 0.0
    %1399 = vmatpush2.msra.mxu0 0.0
    %1400 = vmatprep.subr.mxu0 0.0
    %1401 = vmatpush2.msra.mxu0 0.0
    %1402 = vmatprep.mubr.f32.mxu0 0.0
    %1403 = vmatmul.mubr.f32.gmra.mxu0 %v1312
    %v1404 = vpop.f32.mrf.mxu0
    %v1405 = vadd.f32 %v1336, %v1404
    %v1406 = vpop.f32.mrf.mxu0
    %1407 = vdwg.mxu0
    %v1408 = vtanh.pop %v1405
    %s1409 = scalar_lea.vmem [#allocation7], 1664
    %v1410 = vld [vmem:[%s1409] sm:$0xff]
    %v1411 = vld [vmem:[%s1409 + $0x8] sm:$0xff]
    %v1412 = vld [vmem:[%s1409 + $0x10] sm:$0xff]
    %v1413 = vld [vmem:[%s1409 + $0x18] sm:$0xff]
    %v1414 = vld [vmem:[%s1409 + $0x20] sm:$0xff]
    %v1415 = vld [vmem:[%s1409 + $0x28] sm:$0xff]
    %v1416 = vld [vmem:[%s1409 + $0x30] sm:$0xff]
    %v1417 = vld [vmem:[%s1409 + $0x38] sm:$0xff]
    %v1418 = vld [vmem:[%s1409 + $0x40] sm:$0xff]
    %v1419 = vld [vmem:[%s1409 + $0x48] sm:$0xff]
    %v1420 = vld [vmem:[%s1409 + $0x50] sm:$0xff]
    %v1421 = vld [vmem:[%s1409 + $0x58] sm:$0xff]
    %v1422 = vld [vmem:[%s1409 + $0x60] sm:$0xff]
    %v1423 = vld [vmem:[%s1409 + $0x68] sm:$0xff]
    %v1424 = vld [vmem:[%s1409 + $0x70] sm:$0xff]
    %v1425 = vld [vmem:[%s1409 + $0x78] sm:$0xff]
    %s1426 = scalar_lea.vmem [#allocation8], 14
    %v1427 = vld [vmem:[%s1426] sm:$0x1]
    %v1429 = vlaneseq
    %v1430 = vshrl.u32 %v1429, 7
    %v1431 = vsub.s32 0, %v1430
    %v1432 = vrot.slane %v1427, %v1431
    %1434 = vmatprep.subr.mxu0 0.0
    %1435 = vmatpush1.msra.mxu0 %v1425
    %1436 = vmatprep.subr.mxu0 0.0
    %1437 = vmatpush1.msra.mxu0 %v1424
    %1438 = vmatprep.subr.mxu0 0.0
    %1439 = vmatpush1.msra.mxu0 %v1423
    %1440 = vmatprep.subr.mxu0 0.0
    %1441 = vmatpush1.msra.mxu0 %v1422
    %1442 = vmatprep.subr.mxu0 0.0
    %1443 = vmatpush1.msra.mxu0 %v1421
    %1444 = vmatprep.subr.mxu0 0.0
    %1445 = vmatpush1.msra.mxu0 %v1420
    %1446 = vmatprep.subr.mxu0 0.0
    %1447 = vmatpush1.msra.mxu0 %v1419
    %1448 = vmatprep.subr.mxu0 0.0
    %1449 = vmatpush1.msra.mxu0 %v1418
    %1450 = vmatprep.subr.mxu0 0.0
    %1451 = vmatpush1.msra.mxu0 %v1417
    %1452 = vmatprep.subr.mxu0 0.0
    %1453 = vmatpush1.msra.mxu0 %v1416
    %1454 = vmatprep.subr.mxu0 0.0
    %1455 = vmatpush1.msra.mxu0 %v1415
    %1456 = vmatprep.subr.mxu0 0.0
    %1457 = vmatpush1.msra.mxu0 %v1414
    %1458 = vmatprep.subr.mxu0 0.0
    %1459 = vmatpush1.msra.mxu0 %v1413
    %1460 = vmatprep.subr.mxu0 0.0
    %1461 = vmatpush1.msra.mxu0 %v1412
    %1462 = vmatprep.subr.mxu0 0.0
    %1463 = vmatpush1.msra.mxu0 %v1411
    %1464 = vmatprep.subr.mxu0 0.0
    %1465 = vmatpush1.msra.mxu0 %v1410
    %1466 = vmatprep.subr.mxu0 0.0
    %1467 = vmatpush2.msra.mxu0 0.0
    %1468 = vmatprep.subr.mxu0 0.0
    %1469 = vmatpush2.msra.mxu0 0.0
    %1470 = vmatprep.subr.mxu0 0.0
    %1471 = vmatpush2.msra.mxu0 0.0
    %1472 = vmatprep.subr.mxu0 0.0
    %1473 = vmatpush2.msra.mxu0 0.0
    %1474 = vmatprep.subr.mxu0 0.0
    %1475 = vmatpush2.msra.mxu0 0.0
    %1476 = vmatprep.subr.mxu0 0.0
    %1477 = vmatpush2.msra.mxu0 0.0
    %1478 = vmatprep.subr.mxu0 0.0
    %1479 = vmatpush2.msra.mxu0 0.0
    %1480 = vmatprep.subr.mxu0 0.0
    %1481 = vmatpush2.msra.mxu0 0.0
    %1482 = vmatprep.subr.mxu0 0.0
    %1483 = vmatpush2.msra.mxu0 0.0
    %1484 = vmatprep.subr.mxu0 0.0
    %1485 = vmatpush2.msra.mxu0 0.0
    %1486 = vmatprep.subr.mxu0 0.0
    %1487 = vmatpush2.msra.mxu0 0.0
    %1488 = vmatprep.subr.mxu0 0.0
    %1489 = vmatpush2.msra.mxu0 0.0
    %1490 = vmatprep.subr.mxu0 0.0
    %1491 = vmatpush2.msra.mxu0 0.0
    %1492 = vmatprep.subr.mxu0 0.0
    %1493 = vmatpush2.msra.mxu0 0.0
    %1494 = vmatprep.subr.mxu0 0.0
    %1495 = vmatpush2.msra.mxu0 0.0
    %1496 = vmatprep.subr.mxu0 0.0
    %1497 = vmatpush2.msra.mxu0 0.0
    %1498 = vmatprep.mubr.f32.mxu0 0.0
    %1499 = vmatmul.mubr.f32.gmra.mxu0 %v1408
    %v1500 = vpop.f32.mrf.mxu0
    %v1501 = vadd.f32 %v1432, %v1500
    %v1502 = vpop.f32.mrf.mxu0
    %1503 = vdwg.mxu0
    %v1504 = vtanh.pop %v1501
    %s1505 = scalar_lea.vmem [#allocation7], 1792
    %v1506 = vld [vmem:[%s1505] sm:$0xff]
    %v1507 = vld [vmem:[%s1505 + $0x8] sm:$0xff]
    %v1508 = vld [vmem:[%s1505 + $0x10] sm:$0xff]
    %v1509 = vld [vmem:[%s1505 + $0x18] sm:$0xff]
    %v1510 = vld [vmem:[%s1505 + $0x20] sm:$0xff]
    %v1511 = vld [vmem:[%s1505 + $0x28] sm:$0xff]
    %v1512 = vld [vmem:[%s1505 + $0x30] sm:$0xff]
    %v1513 = vld [vmem:[%s1505 + $0x38] sm:$0xff]
    %v1514 = vld [vmem:[%s1505 + $0x40] sm:$0xff]
    %v1515 = vld [vmem:[%s1505 + $0x48] sm:$0xff]
    %v1516 = vld [vmem:[%s1505 + $0x50] sm:$0xff]
    %v1517 = vld [vmem:[%s1505 + $0x58] sm:$0xff]
    %v1518 = vld [vmem:[%s1505 + $0x60] sm:$0xff]
    %v1519 = vld [vmem:[%s1505 + $0x68] sm:$0xff]
    %v1520 = vld [vmem:[%s1505 + $0x70] sm:$0xff]
    %v1521 = vld [vmem:[%s1505 + $0x78] sm:$0xff]
    %s1522 = scalar_lea.vmem [#allocation8], 15
    %v1523 = vld [vmem:[%s1522] sm:$0x1]
    %v1525 = vlaneseq
    %v1526 = vshrl.u32 %v1525, 7
    %v1527 = vsub.s32 0, %v1526
    %v1528 = vrot.slane %v1523, %v1527
    %1530 = vmatprep.subr.mxu0 0.0
    %1531 = vmatpush1.msra.mxu0 %v1521
    %1532 = vmatprep.subr.mxu0 0.0
    %1533 = vmatpush1.msra.mxu0 %v1520
    %1534 = vmatprep.subr.mxu0 0.0
    %1535 = vmatpush1.msra.mxu0 %v1519
    %1536 = vmatprep.subr.mxu0 0.0
    %1537 = vmatpush1.msra.mxu0 %v1518
    %1538 = vmatprep.subr.mxu0 0.0
    %1539 = vmatpush1.msra.mxu0 %v1517
    %1540 = vmatprep.subr.mxu0 0.0
    %1541 = vmatpush1.msra.mxu0 %v1516
    %1542 = vmatprep.subr.mxu0 0.0
    %1543 = vmatpush1.msra.mxu0 %v1515
    %1544 = vmatprep.subr.mxu0 0.0
    %1545 = vmatpush1.msra.mxu0 %v1514
    %1546 = vmatprep.subr.mxu0 0.0
    %1547 = vmatpush1.msra.mxu0 %v1513
    %1548 = vmatprep.subr.mxu0 0.0
    %1549 = vmatpush1.msra.mxu0 %v1512
    %1550 = vmatprep.subr.mxu0 0.0
    %1551 = vmatpush1.msra.mxu0 %v1511
    %1552 = vmatprep.subr.mxu0 0.0
    %1553 = vmatpush1.msra.mxu0 %v1510
    %1554 = vmatprep.subr.mxu0 0.0
    %1555 = vmatpush1.msra.mxu0 %v1509
    %1556 = vmatprep.subr.mxu0 0.0
    %1557 = vmatpush1.msra.mxu0 %v1508
    %1558 = vmatprep.subr.mxu0 0.0
    %1559 = vmatpush1.msra.mxu0 %v1507
    %1560 = vmatprep.subr.mxu0 0.0
    %1561 = vmatpush1.msra.mxu0 %v1506
    %1562 = vmatprep.subr.mxu0 0.0
    %1563 = vmatpush2.msra.mxu0 0.0
    %1564 = vmatprep.subr.mxu0 0.0
    %1565 = vmatpush2.msra.mxu0 0.0
    %1566 = vmatprep.subr.mxu0 0.0
    %1567 = vmatpush2.msra.mxu0 0.0
    %1568 = vmatprep.subr.mxu0 0.0
    %1569 = vmatpush2.msra.mxu0 0.0
    %1570 = vmatprep.subr.mxu0 0.0
    %1571 = vmatpush2.msra.mxu0 0.0
    %1572 = vmatprep.subr.mxu0 0.0
    %1573 = vmatpush2.msra.mxu0 0.0
    %1574 = vmatprep.subr.mxu0 0.0
    %1575 = vmatpush2.msra.mxu0 0.0
    %1576 = vmatprep.subr.mxu0 0.0
    %1577 = vmatpush2.msra.mxu0 0.0
    %1578 = vmatprep.subr.mxu0 0.0
    %1579 = vmatpush2.msra.mxu0 0.0
    %1580 = vmatprep.subr.mxu0 0.0
    %1581 = vmatpush2.msra.mxu0 0.0
    %1582 = vmatprep.subr.mxu0 0.0
    %1583 = vmatpush2.msra.mxu0 0.0
    %1584 = vmatprep.subr.mxu0 0.0
    %1585 = vmatpush2.msra.mxu0 0.0
    %1586 = vmatprep.subr.mxu0 0.0
    %1587 = vmatpush2.msra.mxu0 0.0
    %1588 = vmatprep.subr.mxu0 0.0
    %1589 = vmatpush2.msra.mxu0 0.0
    %1590 = vmatprep.subr.mxu0 0.0
    %1591 = vmatpush2.msra.mxu0 0.0
    %1592 = vmatprep.subr.mxu0 0.0
    %1593 = vmatpush2.msra.mxu0 0.0
    %1594 = vmatprep.mubr.f32.mxu0 0.0
    %1595 = vmatmul.mubr.f32.gmra.mxu0 %v1504
    %v1596 = vpop.f32.mrf.mxu0
    %v1597 = vadd.f32 %v1528, %v1596
    %v1598 = vpop.f32.mrf.mxu0
    %1599 = vdwg.mxu0
    %v1600 = vtanh.pop %v1597
    %s1601 = scalar_lea.vmem [#allocation7], 1920
    %v1602 = vld [vmem:[%s1601] sm:$0xff]
    %v1603 = vld [vmem:[%s1601 + $0x8] sm:$0xff]
    %v1604 = vld [vmem:[%s1601 + $0x10] sm:$0xff]
    %v1605 = vld [vmem:[%s1601 + $0x18] sm:$0xff]
    %v1606 = vld [vmem:[%s1601 + $0x20] sm:$0xff]
    %v1607 = vld [vmem:[%s1601 + $0x28] sm:$0xff]
    %v1608 = vld [vmem:[%s1601 + $0x30] sm:$0xff]
    %v1609 = vld [vmem:[%s1601 + $0x38] sm:$0xff]
    %v1610 = vld [vmem:[%s1601 + $0x40] sm:$0xff]
    %v1611 = vld [vmem:[%s1601 + $0x48] sm:$0xff]
    %v1612 = vld [vmem:[%s1601 + $0x50] sm:$0xff]
    %v1613 = vld [vmem:[%s1601 + $0x58] sm:$0xff]
    %v1614 = vld [vmem:[%s1601 + $0x60] sm:$0xff]
    %v1615 = vld [vmem:[%s1601 + $0x68] sm:$0xff]
    %v1616 = vld [vmem:[%s1601 + $0x70] sm:$0xff]
    %v1617 = vld [vmem:[%s1601 + $0x78] sm:$0xff]
    %s1618 = scalar_lea.vmem [#allocation8], 16
    %v1619 = vld [vmem:[%s1618] sm:$0x1]
    %v1621 = vlaneseq
    %v1622 = vshrl.u32 %v1621, 7
    %v1623 = vsub.s32 0, %v1622
    %v1624 = vrot.slane %v1619, %v1623
    %1626 = vmatprep.subr.mxu0 0.0
    %1627 = vmatpush1.msra.mxu0 %v1617
    %1628 = vmatprep.subr.mxu0 0.0
    %1629 = vmatpush1.msra.mxu0 %v1616
    %1630 = vmatprep.subr.mxu0 0.0
    %1631 = vmatpush1.msra.mxu0 %v1615
    %1632 = vmatprep.subr.mxu0 0.0
    %1633 = vmatpush1.msra.mxu0 %v1614
    %1634 = vmatprep.subr.mxu0 0.0
    %1635 = vmatpush1.msra.mxu0 %v1613
    %1636 = vmatprep.subr.mxu0 0.0
    %1637 = vmatpush1.msra.mxu0 %v1612
    %1638 = vmatprep.subr.mxu0 0.0
    %1639 = vmatpush1.msra.mxu0 %v1611
    %1640 = vmatprep.subr.mxu0 0.0
    %1641 = vmatpush1.msra.mxu0 %v1610
    %1642 = vmatprep.subr.mxu0 0.0
    %1643 = vmatpush1.msra.mxu0 %v1609
    %1644 = vmatprep.subr.mxu0 0.0
    %1645 = vmatpush1.msra.mxu0 %v1608
    %1646 = vmatprep.subr.mxu0 0.0
    %1647 = vmatpush1.msra.mxu0 %v1607
    %1648 = vmatprep.subr.mxu0 0.0
    %1649 = vmatpush1.msra.mxu0 %v1606
    %1650 = vmatprep.subr.mxu0 0.0
    %1651 = vmatpush1.msra.mxu0 %v1605
    %1652 = vmatprep.subr.mxu0 0.0
    %1653 = vmatpush1.msra.mxu0 %v1604
    %1654 = vmatprep.subr.mxu0 0.0
    %1655 = vmatpush1.msra.mxu0 %v1603
    %1656 = vmatprep.subr.mxu0 0.0
    %1657 = vmatpush1.msra.mxu0 %v1602
    %1658 = vmatprep.subr.mxu0 0.0
    %1659 = vmatpush2.msra.mxu0 0.0
    %1660 = vmatprep.subr.mxu0 0.0
    %1661 = vmatpush2.msra.mxu0 0.0
    %1662 = vmatprep.subr.mxu0 0.0
    %1663 = vmatpush2.msra.mxu0 0.0
    %1664 = vmatprep.subr.mxu0 0.0
    %1665 = vmatpush2.msra.mxu0 0.0
    %1666 = vmatprep.subr.mxu0 0.0
    %1667 = vmatpush2.msra.mxu0 0.0
    %1668 = vmatprep.subr.mxu0 0.0
    %1669 = vmatpush2.msra.mxu0 0.0
    %1670 = vmatprep.subr.mxu0 0.0
    %1671 = vmatpush2.msra.mxu0 0.0
    %1672 = vmatprep.subr.mxu0 0.0
    %1673 = vmatpush2.msra.mxu0 0.0
    %1674 = vmatprep.subr.mxu0 0.0
    %1675 = vmatpush2.msra.mxu0 0.0
    %1676 = vmatprep.subr.mxu0 0.0
    %1677 = vmatpush2.msra.mxu0 0.0
    %1678 = vmatprep.subr.mxu0 0.0
    %1679 = vmatpush2.msra.mxu0 0.0
    %1680 = vmatprep.subr.mxu0 0.0
    %1681 = vmatpush2.msra.mxu0 0.0
    %1682 = vmatprep.subr.mxu0 0.0
    %1683 = vmatpush2.msra.mxu0 0.0
    %1684 = vmatprep.subr.mxu0 0.0
    %1685 = vmatpush2.msra.mxu0 0.0
    %1686 = vmatprep.subr.mxu0 0.0
    %1687 = vmatpush2.msra.mxu0 0.0
    %1688 = vmatprep.subr.mxu0 0.0
    %1689 = vmatpush2.msra.mxu0 0.0
    %1690 = vmatprep.mubr.f32.mxu0 0.0
    %1691 = vmatmul.mubr.f32.gmra.mxu0 %v1600
    %v1692 = vpop.f32.mrf.mxu0
    %v1693 = vadd.f32 %v1624, %v1692
    %v1694 = vpop.f32.mrf.mxu0
    %1695 = vdwg.mxu0
    %v1696 = vtanh.pop %v1693
    %s1697 = scalar_lea.vmem [#allocation7], 2048
    %v1698 = vld [vmem:[%s1697] sm:$0xff]
    %v1699 = vld [vmem:[%s1697 + $0x8] sm:$0xff]
    %v1700 = vld [vmem:[%s1697 + $0x10] sm:$0xff]
    %v1701 = vld [vmem:[%s1697 + $0x18] sm:$0xff]
    %v1702 = vld [vmem:[%s1697 + $0x20] sm:$0xff]
    %v1703 = vld [vmem:[%s1697 + $0x28] sm:$0xff]
    %v1704 = vld [vmem:[%s1697 + $0x30] sm:$0xff]
    %v1705 = vld [vmem:[%s1697 + $0x38] sm:$0xff]
    %v1706 = vld [vmem:[%s1697 + $0x40] sm:$0xff]
    %v1707 = vld [vmem:[%s1697 + $0x48] sm:$0xff]
    %v1708 = vld [vmem:[%s1697 + $0x50] sm:$0xff]
    %v1709 = vld [vmem:[%s1697 + $0x58] sm:$0xff]
    %v1710 = vld [vmem:[%s1697 + $0x60] sm:$0xff]
    %v1711 = vld [vmem:[%s1697 + $0x68] sm:$0xff]
    %v1712 = vld [vmem:[%s1697 + $0x70] sm:$0xff]
    %v1713 = vld [vmem:[%s1697 + $0x78] sm:$0xff]
    %s1714 = scalar_lea.vmem [#allocation8], 17
    %v1715 = vld [vmem:[%s1714] sm:$0x1]
    %v1717 = vlaneseq
    %v1718 = vshrl.u32 %v1717, 7
    %v1719 = vsub.s32 0, %v1718
    %v1720 = vrot.slane %v1715, %v1719
    %1722 = vmatprep.subr.mxu0 0.0
    %1723 = vmatpush1.msra.mxu0 %v1713
    %1724 = vmatprep.subr.mxu0 0.0
    %1725 = vmatpush1.msra.mxu0 %v1712
    %1726 = vmatprep.subr.mxu0 0.0
    %1727 = vmatpush1.msra.mxu0 %v1711
    %1728 = vmatprep.subr.mxu0 0.0
    %1729 = vmatpush1.msra.mxu0 %v1710
    %1730 = vmatprep.subr.mxu0 0.0
    %1731 = vmatpush1.msra.mxu0 %v1709
    %1732 = vmatprep.subr.mxu0 0.0
    %1733 = vmatpush1.msra.mxu0 %v1708
    %1734 = vmatprep.subr.mxu0 0.0
    %1735 = vmatpush1.msra.mxu0 %v1707
    %1736 = vmatprep.subr.mxu0 0.0
    %1737 = vmatpush1.msra.mxu0 %v1706
    %1738 = vmatprep.subr.mxu0 0.0
    %1739 = vmatpush1.msra.mxu0 %v1705
    %1740 = vmatprep.subr.mxu0 0.0
    %1741 = vmatpush1.msra.mxu0 %v1704
    %1742 = vmatprep.subr.mxu0 0.0
    %1743 = vmatpush1.msra.mxu0 %v1703
    %1744 = vmatprep.subr.mxu0 0.0
    %1745 = vmatpush1.msra.mxu0 %v1702
    %1746 = vmatprep.subr.mxu0 0.0
    %1747 = vmatpush1.msra.mxu0 %v1701
    %1748 = vmatprep.subr.mxu0 0.0
    %1749 = vmatpush1.msra.mxu0 %v1700
    %1750 = vmatprep.subr.mxu0 0.0
    %1751 = vmatpush1.msra.mxu0 %v1699
    %1752 = vmatprep.subr.mxu0 0.0
    %1753 = vmatpush1.msra.mxu0 %v1698
    %1754 = vmatprep.subr.mxu0 0.0
    %1755 = vmatpush2.msra.mxu0 0.0
    %1756 = vmatprep.subr.mxu0 0.0
    %1757 = vmatpush2.msra.mxu0 0.0
    %1758 = vmatprep.subr.mxu0 0.0
    %1759 = vmatpush2.msra.mxu0 0.0
    %1760 = vmatprep.subr.mxu0 0.0
    %1761 = vmatpush2.msra.mxu0 0.0
    %1762 = vmatprep.subr.mxu0 0.0
    %1763 = vmatpush2.msra.mxu0 0.0
    %1764 = vmatprep.subr.mxu0 0.0
    %1765 = vmatpush2.msra.mxu0 0.0
    %1766 = vmatprep.subr.mxu0 0.0
    %1767 = vmatpush2.msra.mxu0 0.0
    %1768 = vmatprep.subr.mxu0 0.0
    %1769 = vmatpush2.msra.mxu0 0.0
    %1770 = vmatprep.subr.mxu0 0.0
    %1771 = vmatpush2.msra.mxu0 0.0
    %1772 = vmatprep.subr.mxu0 0.0
    %1773 = vmatpush2.msra.mxu0 0.0
    %1774 = vmatprep.subr.mxu0 0.0
    %1775 = vmatpush2.msra.mxu0 0.0
    %1776 = vmatprep.subr.mxu0 0.0
    %1777 = vmatpush2.msra.mxu0 0.0
    %1778 = vmatprep.subr.mxu0 0.0
    %1779 = vmatpush2.msra.mxu0 0.0
    %1780 = vmatprep.subr.mxu0 0.0
    %1781 = vmatpush2.msra.mxu0 0.0
    %1782 = vmatprep.subr.mxu0 0.0
    %1783 = vmatpush2.msra.mxu0 0.0
    %1784 = vmatprep.subr.mxu0 0.0
    %1785 = vmatpush2.msra.mxu0 0.0
    %1786 = vmatprep.mubr.f32.mxu0 0.0
    %1787 = vmatmul.mubr.f32.gmra.mxu0 %v1696
    %v1788 = vpop.f32.mrf.mxu0
    %v1789 = vadd.f32 %v1720, %v1788
    %v1790 = vpop.f32.mrf.mxu0
    %1791 = vdwg.mxu0
    %v1792 = vtanh.pop %v1789
    %s1793 = scalar_lea.vmem [#allocation7], 2176
    %v1794 = vld [vmem:[%s1793] sm:$0xff]
    %v1795 = vld [vmem:[%s1793 + $0x8] sm:$0xff]
    %v1796 = vld [vmem:[%s1793 + $0x10] sm:$0xff]
    %v1797 = vld [vmem:[%s1793 + $0x18] sm:$0xff]
    %v1798 = vld [vmem:[%s1793 + $0x20] sm:$0xff]
    %v1799 = vld [vmem:[%s1793 + $0x28] sm:$0xff]
    %v1800 = vld [vmem:[%s1793 + $0x30] sm:$0xff]
    %v1801 = vld [vmem:[%s1793 + $0x38] sm:$0xff]
    %v1802 = vld [vmem:[%s1793 + $0x40] sm:$0xff]
    %v1803 = vld [vmem:[%s1793 + $0x48] sm:$0xff]
    %v1804 = vld [vmem:[%s1793 + $0x50] sm:$0xff]
    %v1805 = vld [vmem:[%s1793 + $0x58] sm:$0xff]
    %v1806 = vld [vmem:[%s1793 + $0x60] sm:$0xff]
    %v1807 = vld [vmem:[%s1793 + $0x68] sm:$0xff]
    %v1808 = vld [vmem:[%s1793 + $0x70] sm:$0xff]
    %v1809 = vld [vmem:[%s1793 + $0x78] sm:$0xff]
    %s1810 = scalar_lea.vmem [#allocation8], 18
    %v1811 = vld [vmem:[%s1810] sm:$0x1]
    %v1813 = vlaneseq
    %v1814 = vshrl.u32 %v1813, 7
    %v1815 = vsub.s32 0, %v1814
    %v1816 = vrot.slane %v1811, %v1815
    %1818 = vmatprep.subr.mxu0 0.0
    %1819 = vmatpush1.msra.mxu0 %v1809
    %1820 = vmatprep.subr.mxu0 0.0
    %1821 = vmatpush1.msra.mxu0 %v1808
    %1822 = vmatprep.subr.mxu0 0.0
    %1823 = vmatpush1.msra.mxu0 %v1807
    %1824 = vmatprep.subr.mxu0 0.0
    %1825 = vmatpush1.msra.mxu0 %v1806
    %1826 = vmatprep.subr.mxu0 0.0
    %1827 = vmatpush1.msra.mxu0 %v1805
    %1828 = vmatprep.subr.mxu0 0.0
    %1829 = vmatpush1.msra.mxu0 %v1804
    %1830 = vmatprep.subr.mxu0 0.0
    %1831 = vmatpush1.msra.mxu0 %v1803
    %1832 = vmatprep.subr.mxu0 0.0
    %1833 = vmatpush1.msra.mxu0 %v1802
    %1834 = vmatprep.subr.mxu0 0.0
    %1835 = vmatpush1.msra.mxu0 %v1801
    %1836 = vmatprep.subr.mxu0 0.0
    %1837 = vmatpush1.msra.mxu0 %v1800
    %1838 = vmatprep.subr.mxu0 0.0
    %1839 = vmatpush1.msra.mxu0 %v1799
    %1840 = vmatprep.subr.mxu0 0.0
    %1841 = vmatpush1.msra.mxu0 %v1798
    %1842 = vmatprep.subr.mxu0 0.0
    %1843 = vmatpush1.msra.mxu0 %v1797
    %1844 = vmatprep.subr.mxu0 0.0
    %1845 = vmatpush1.msra.mxu0 %v1796
    %1846 = vmatprep.subr.mxu0 0.0
    %1847 = vmatpush1.msra.mxu0 %v1795
    %1848 = vmatprep.subr.mxu0 0.0
    %1849 = vmatpush1.msra.mxu0 %v1794
    %1850 = vmatprep.subr.mxu0 0.0
    %1851 = vmatpush2.msra.mxu0 0.0
    %1852 = vmatprep.subr.mxu0 0.0
    %1853 = vmatpush2.msra.mxu0 0.0
    %1854 = vmatprep.subr.mxu0 0.0
    %1855 = vmatpush2.msra.mxu0 0.0
    %1856 = vmatprep.subr.mxu0 0.0
    %1857 = vmatpush2.msra.mxu0 0.0
    %1858 = vmatprep.subr.mxu0 0.0
    %1859 = vmatpush2.msra.mxu0 0.0
    %1860 = vmatprep.subr.mxu0 0.0
    %1861 = vmatpush2.msra.mxu0 0.0
    %1862 = vmatprep.subr.mxu0 0.0
    %1863 = vmatpush2.msra.mxu0 0.0
    %1864 = vmatprep.subr.mxu0 0.0
    %1865 = vmatpush2.msra.mxu0 0.0
    %1866 = vmatprep.subr.mxu0 0.0
    %1867 = vmatpush2.msra.mxu0 0.0
    %1868 = vmatprep.subr.mxu0 0.0
    %1869 = vmatpush2.msra.mxu0 0.0
    %1870 = vmatprep.subr.mxu0 0.0
    %1871 = vmatpush2.msra.mxu0 0.0
    %1872 = vmatprep.subr.mxu0 0.0
    %1873 = vmatpush2.msra.mxu0 0.0
    %1874 = vmatprep.subr.mxu0 0.0
    %1875 = vmatpush2.msra.mxu0 0.0
    %1876 = vmatprep.subr.mxu0 0.0
    %1877 = vmatpush2.msra.mxu0 0.0
    %1878 = vmatprep.subr.mxu0 0.0
    %1879 = vmatpush2.msra.mxu0 0.0
    %1880 = vmatprep.subr.mxu0 0.0
    %1881 = vmatpush2.msra.mxu0 0.0
    %1882 = vmatprep.mubr.f32.mxu0 0.0
    %1883 = vmatmul.mubr.f32.gmra.mxu0 %v1792
    %v1884 = vpop.f32.mrf.mxu0
    %v1885 = vadd.f32 %v1816, %v1884
    %v1886 = vpop.f32.mrf.mxu0
    %1887 = vdwg.mxu0
    %v1888 = vtanh.pop %v1885
    %s1889 = scalar_lea.vmem [#allocation7], 2304
    %v1890 = vld [vmem:[%s1889] sm:$0xff]
    %v1891 = vld [vmem:[%s1889 + $0x8] sm:$0xff]
    %v1892 = vld [vmem:[%s1889 + $0x10] sm:$0xff]
    %v1893 = vld [vmem:[%s1889 + $0x18] sm:$0xff]
    %v1894 = vld [vmem:[%s1889 + $0x20] sm:$0xff]
    %v1895 = vld [vmem:[%s1889 + $0x28] sm:$0xff]
    %v1896 = vld [vmem:[%s1889 + $0x30] sm:$0xff]
    %v1897 = vld [vmem:[%s1889 + $0x38] sm:$0xff]
    %v1898 = vld [vmem:[%s1889 + $0x40] sm:$0xff]
    %v1899 = vld [vmem:[%s1889 + $0x48] sm:$0xff]
    %v1900 = vld [vmem:[%s1889 + $0x50] sm:$0xff]
    %v1901 = vld [vmem:[%s1889 + $0x58] sm:$0xff]
    %v1902 = vld [vmem:[%s1889 + $0x60] sm:$0xff]
    %v1903 = vld [vmem:[%s1889 + $0x68] sm:$0xff]
    %v1904 = vld [vmem:[%s1889 + $0x70] sm:$0xff]
    %v1905 = vld [vmem:[%s1889 + $0x78] sm:$0xff]
    %s1906 = scalar_lea.vmem [#allocation8], 19
    %v1907 = vld [vmem:[%s1906] sm:$0x1]
    %v1909 = vlaneseq
    %v1910 = vshrl.u32 %v1909, 7
    %v1911 = vsub.s32 0, %v1910
    %v1912 = vrot.slane %v1907, %v1911
    %1914 = vmatprep.subr.mxu0 0.0
    %1915 = vmatpush1.msra.mxu0 %v1905
    %1916 = vmatprep.subr.mxu0 0.0
    %1917 = vmatpush1.msra.mxu0 %v1904
    %1918 = vmatprep.subr.mxu0 0.0
    %1919 = vmatpush1.msra.mxu0 %v1903
    %1920 = vmatprep.subr.mxu0 0.0
    %1921 = vmatpush1.msra.mxu0 %v1902
    %1922 = vmatprep.subr.mxu0 0.0
    %1923 = vmatpush1.msra.mxu0 %v1901
    %1924 = vmatprep.subr.mxu0 0.0
    %1925 = vmatpush1.msra.mxu0 %v1900
    %1926 = vmatprep.subr.mxu0 0.0
    %1927 = vmatpush1.msra.mxu0 %v1899
    %1928 = vmatprep.subr.mxu0 0.0
    %1929 = vmatpush1.msra.mxu0 %v1898
    %1930 = vmatprep.subr.mxu0 0.0
    %1931 = vmatpush1.msra.mxu0 %v1897
    %1932 = vmatprep.subr.mxu0 0.0
    %1933 = vmatpush1.msra.mxu0 %v1896
    %1934 = vmatprep.subr.mxu0 0.0
    %1935 = vmatpush1.msra.mxu0 %v1895
    %1936 = vmatprep.subr.mxu0 0.0
    %1937 = vmatpush1.msra.mxu0 %v1894
    %1938 = vmatprep.subr.mxu0 0.0
    %1939 = vmatpush1.msra.mxu0 %v1893
    %1940 = vmatprep.subr.mxu0 0.0
    %1941 = vmatpush1.msra.mxu0 %v1892
    %1942 = vmatprep.subr.mxu0 0.0
    %1943 = vmatpush1.msra.mxu0 %v1891
    %1944 = vmatprep.subr.mxu0 0.0
    %1945 = vmatpush1.msra.mxu0 %v1890
    %1946 = vmatprep.subr.mxu0 0.0
    %1947 = vmatpush2.msra.mxu0 0.0
    %1948 = vmatprep.subr.mxu0 0.0
    %1949 = vmatpush2.msra.mxu0 0.0
    %1950 = vmatprep.subr.mxu0 0.0
    %1951 = vmatpush2.msra.mxu0 0.0
    %1952 = vmatprep.subr.mxu0 0.0
    %1953 = vmatpush2.msra.mxu0 0.0
    %1954 = vmatprep.subr.mxu0 0.0
    %1955 = vmatpush2.msra.mxu0 0.0
    %1956 = vmatprep.subr.mxu0 0.0
    %1957 = vmatpush2.msra.mxu0 0.0
    %1958 = vmatprep.subr.mxu0 0.0
    %1959 = vmatpush2.msra.mxu0 0.0
    %1960 = vmatprep.subr.mxu0 0.0
    %1961 = vmatpush2.msra.mxu0 0.0
    %1962 = vmatprep.subr.mxu0 0.0
    %1963 = vmatpush2.msra.mxu0 0.0
    %1964 = vmatprep.subr.mxu0 0.0
    %1965 = vmatpush2.msra.mxu0 0.0
    %1966 = vmatprep.subr.mxu0 0.0
    %1967 = vmatpush2.msra.mxu0 0.0
    %1968 = vmatprep.subr.mxu0 0.0
    %1969 = vmatpush2.msra.mxu0 0.0
    %1970 = vmatprep.subr.mxu0 0.0
    %1971 = vmatpush2.msra.mxu0 0.0
    %1972 = vmatprep.subr.mxu0 0.0
    %1973 = vmatpush2.msra.mxu0 0.0
    %1974 = vmatprep.subr.mxu0 0.0
    %1975 = vmatpush2.msra.mxu0 0.0
    %1976 = vmatprep.subr.mxu0 0.0
    %1977 = vmatpush2.msra.mxu0 0.0
    %1978 = vmatprep.mubr.f32.mxu0 0.0
    %1979 = vmatmul.mubr.f32.gmra.mxu0 %v1888
    %v1980 = vpop.f32.mrf.mxu0
    %v1981 = vadd.f32 %v1912, %v1980
    %v1982 = vpop.f32.mrf.mxu0
    %1983 = vdwg.mxu0
    %v1984 = vtanh.pop %v1981
    %s1985 = scalar_lea.vmem [#allocation7], 2432
    %v1986 = vld [vmem:[%s1985] sm:$0xff]
    %v1987 = vld [vmem:[%s1985 + $0x8] sm:$0xff]
    %v1988 = vld [vmem:[%s1985 + $0x10] sm:$0xff]
    %v1989 = vld [vmem:[%s1985 + $0x18] sm:$0xff]
    %v1990 = vld [vmem:[%s1985 + $0x20] sm:$0xff]
    %v1991 = vld [vmem:[%s1985 + $0x28] sm:$0xff]
    %v1992 = vld [vmem:[%s1985 + $0x30] sm:$0xff]
    %v1993 = vld [vmem:[%s1985 + $0x38] sm:$0xff]
    %v1994 = vld [vmem:[%s1985 + $0x40] sm:$0xff]
    %v1995 = vld [vmem:[%s1985 + $0x48] sm:$0xff]
    %v1996 = vld [vmem:[%s1985 + $0x50] sm:$0xff]
    %v1997 = vld [vmem:[%s1985 + $0x58] sm:$0xff]
    %v1998 = vld [vmem:[%s1985 + $0x60] sm:$0xff]
    %v1999 = vld [vmem:[%s1985 + $0x68] sm:$0xff]
    %v2000 = vld [vmem:[%s1985 + $0x70] sm:$0xff]
    %v2001 = vld [vmem:[%s1985 + $0x78] sm:$0xff]
    %s2002 = scalar_lea.vmem [#allocation8], 20
    %v2003 = vld [vmem:[%s2002] sm:$0x1]
    %v2005 = vlaneseq
    %v2006 = vshrl.u32 %v2005, 7
    %v2007 = vsub.s32 0, %v2006
    %v2008 = vrot.slane %v2003, %v2007
    %2010 = vmatprep.subr.mxu0 0.0
    %2011 = vmatpush1.msra.mxu0 %v2001
    %2012 = vmatprep.subr.mxu0 0.0
    %2013 = vmatpush1.msra.mxu0 %v2000
    %2014 = vmatprep.subr.mxu0 0.0
    %2015 = vmatpush1.msra.mxu0 %v1999
    %2016 = vmatprep.subr.mxu0 0.0
    %2017 = vmatpush1.msra.mxu0 %v1998
    %2018 = vmatprep.subr.mxu0 0.0
    %2019 = vmatpush1.msra.mxu0 %v1997
    %2020 = vmatprep.subr.mxu0 0.0
    %2021 = vmatpush1.msra.mxu0 %v1996
    %2022 = vmatprep.subr.mxu0 0.0
    %2023 = vmatpush1.msra.mxu0 %v1995
    %2024 = vmatprep.subr.mxu0 0.0
    %2025 = vmatpush1.msra.mxu0 %v1994
    %2026 = vmatprep.subr.mxu0 0.0
    %2027 = vmatpush1.msra.mxu0 %v1993
    %2028 = vmatprep.subr.mxu0 0.0
    %2029 = vmatpush1.msra.mxu0 %v1992
    %2030 = vmatprep.subr.mxu0 0.0
    %2031 = vmatpush1.msra.mxu0 %v1991
    %2032 = vmatprep.subr.mxu0 0.0
    %2033 = vmatpush1.msra.mxu0 %v1990
    %2034 = vmatprep.subr.mxu0 0.0
    %2035 = vmatpush1.msra.mxu0 %v1989
    %2036 = vmatprep.subr.mxu0 0.0
    %2037 = vmatpush1.msra.mxu0 %v1988
    %2038 = vmatprep.subr.mxu0 0.0
    %2039 = vmatpush1.msra.mxu0 %v1987
    %2040 = vmatprep.subr.mxu0 0.0
    %2041 = vmatpush1.msra.mxu0 %v1986
    %2042 = vmatprep.subr.mxu0 0.0
    %2043 = vmatpush2.msra.mxu0 0.0
    %2044 = vmatprep.subr.mxu0 0.0
    %2045 = vmatpush2.msra.mxu0 0.0
    %2046 = vmatprep.subr.mxu0 0.0
    %2047 = vmatpush2.msra.mxu0 0.0
    %2048 = vmatprep.subr.mxu0 0.0
    %2049 = vmatpush2.msra.mxu0 0.0
    %2050 = vmatprep.subr.mxu0 0.0
    %2051 = vmatpush2.msra.mxu0 0.0
    %2052 = vmatprep.subr.mxu0 0.0
    %2053 = vmatpush2.msra.mxu0 0.0
    %2054 = vmatprep.subr.mxu0 0.0
    %2055 = vmatpush2.msra.mxu0 0.0
    %2056 = vmatprep.subr.mxu0 0.0
    %2057 = vmatpush2.msra.mxu0 0.0
    %2058 = vmatprep.subr.mxu0 0.0
    %2059 = vmatpush2.msra.mxu0 0.0
    %2060 = vmatprep.subr.mxu0 0.0
    %2061 = vmatpush2.msra.mxu0 0.0
    %2062 = vmatprep.subr.mxu0 0.0
    %2063 = vmatpush2.msra.mxu0 0.0
    %2064 = vmatprep.subr.mxu0 0.0
    %2065 = vmatpush2.msra.mxu0 0.0
    %2066 = vmatprep.subr.mxu0 0.0
    %2067 = vmatpush2.msra.mxu0 0.0
    %2068 = vmatprep.subr.mxu0 0.0
    %2069 = vmatpush2.msra.mxu0 0.0
    %2070 = vmatprep.subr.mxu0 0.0
    %2071 = vmatpush2.msra.mxu0 0.0
    %2072 = vmatprep.subr.mxu0 0.0
    %2073 = vmatpush2.msra.mxu0 0.0
    %2074 = vmatprep.mubr.f32.mxu0 0.0
    %2075 = vmatmul.mubr.f32.gmra.mxu0 %v1984
    %v2076 = vpop.f32.mrf.mxu0
    %v2077 = vadd.f32 %v2008, %v2076
    %v2078 = vpop.f32.mrf.mxu0
    %2079 = vdwg.mxu0
    %v2080 = vtanh.pop %v2077
    %s2081 = scalar_lea.vmem [#allocation7], 2560
    %v2082 = vld [vmem:[%s2081] sm:$0xff]
    %v2083 = vld [vmem:[%s2081 + $0x8] sm:$0xff]
    %v2084 = vld [vmem:[%s2081 + $0x10] sm:$0xff]
    %v2085 = vld [vmem:[%s2081 + $0x18] sm:$0xff]
    %v2086 = vld [vmem:[%s2081 + $0x20] sm:$0xff]
    %v2087 = vld [vmem:[%s2081 + $0x28] sm:$0xff]
    %v2088 = vld [vmem:[%s2081 + $0x30] sm:$0xff]
    %v2089 = vld [vmem:[%s2081 + $0x38] sm:$0xff]
    %v2090 = vld [vmem:[%s2081 + $0x40] sm:$0xff]
    %v2091 = vld [vmem:[%s2081 + $0x48] sm:$0xff]
    %v2092 = vld [vmem:[%s2081 + $0x50] sm:$0xff]
    %v2093 = vld [vmem:[%s2081 + $0x58] sm:$0xff]
    %v2094 = vld [vmem:[%s2081 + $0x60] sm:$0xff]
    %v2095 = vld [vmem:[%s2081 + $0x68] sm:$0xff]
    %v2096 = vld [vmem:[%s2081 + $0x70] sm:$0xff]
    %v2097 = vld [vmem:[%s2081 + $0x78] sm:$0xff]
    %s2098 = scalar_lea.vmem [#allocation8], 21
    %v2099 = vld [vmem:[%s2098] sm:$0x1]
    %v2101 = vlaneseq
    %v2102 = vshrl.u32 %v2101, 7
    %v2103 = vsub.s32 0, %v2102
    %v2104 = vrot.slane %v2099, %v2103
    %2106 = vmatprep.subr.mxu0 0.0
    %2107 = vmatpush1.msra.mxu0 %v2097
    %2108 = vmatprep.subr.mxu0 0.0
    %2109 = vmatpush1.msra.mxu0 %v2096
    %2110 = vmatprep.subr.mxu0 0.0
    %2111 = vmatpush1.msra.mxu0 %v2095
    %2112 = vmatprep.subr.mxu0 0.0
    %2113 = vmatpush1.msra.mxu0 %v2094
    %2114 = vmatprep.subr.mxu0 0.0
    %2115 = vmatpush1.msra.mxu0 %v2093
    %2116 = vmatprep.subr.mxu0 0.0
    %2117 = vmatpush1.msra.mxu0 %v2092
    %2118 = vmatprep.subr.mxu0 0.0
    %2119 = vmatpush1.msra.mxu0 %v2091
    %2120 = vmatprep.subr.mxu0 0.0
    %2121 = vmatpush1.msra.mxu0 %v2090
    %2122 = vmatprep.subr.mxu0 0.0
    %2123 = vmatpush1.msra.mxu0 %v2089
    %2124 = vmatprep.subr.mxu0 0.0
    %2125 = vmatpush1.msra.mxu0 %v2088
    %2126 = vmatprep.subr.mxu0 0.0
    %2127 = vmatpush1.msra.mxu0 %v2087
    %2128 = vmatprep.subr.mxu0 0.0
    %2129 = vmatpush1.msra.mxu0 %v2086
    %2130 = vmatprep.subr.mxu0 0.0
    %2131 = vmatpush1.msra.mxu0 %v2085
    %2132 = vmatprep.subr.mxu0 0.0
    %2133 = vmatpush1.msra.mxu0 %v2084
    %2134 = vmatprep.subr.mxu0 0.0
    %2135 = vmatpush1.msra.mxu0 %v2083
    %2136 = vmatprep.subr.mxu0 0.0
    %2137 = vmatpush1.msra.mxu0 %v2082
    %2138 = vmatprep.subr.mxu0 0.0
    %2139 = vmatpush2.msra.mxu0 0.0
    %2140 = vmatprep.subr.mxu0 0.0
    %2141 = vmatpush2.msra.mxu0 0.0
    %2142 = vmatprep.subr.mxu0 0.0
    %2143 = vmatpush2.msra.mxu0 0.0
    %2144 = vmatprep.subr.mxu0 0.0
    %2145 = vmatpush2.msra.mxu0 0.0
    %2146 = vmatprep.subr.mxu0 0.0
    %2147 = vmatpush2.msra.mxu0 0.0
    %2148 = vmatprep.subr.mxu0 0.0
    %2149 = vmatpush2.msra.mxu0 0.0
    %2150 = vmatprep.subr.mxu0 0.0
    %2151 = vmatpush2.msra.mxu0 0.0
    %2152 = vmatprep.subr.mxu0 0.0
    %2153 = vmatpush2.msra.mxu0 0.0
    %2154 = vmatprep.subr.mxu0 0.0
    %2155 = vmatpush2.msra.mxu0 0.0
    %2156 = vmatprep.subr.mxu0 0.0
    %2157 = vmatpush2.msra.mxu0 0.0
    %2158 = vmatprep.subr.mxu0 0.0
    %2159 = vmatpush2.msra.mxu0 0.0
    %2160 = vmatprep.subr.mxu0 0.0
    %2161 = vmatpush2.msra.mxu0 0.0
    %2162 = vmatprep.subr.mxu0 0.0
    %2163 = vmatpush2.msra.mxu0 0.0
    %2164 = vmatprep.subr.mxu0 0.0
    %2165 = vmatpush2.msra.mxu0 0.0
    %2166 = vmatprep.subr.mxu0 0.0
    %2167 = vmatpush2.msra.mxu0 0.0
    %2168 = vmatprep.subr.mxu0 0.0
    %2169 = vmatpush2.msra.mxu0 0.0
    %2170 = vmatprep.mubr.f32.mxu0 0.0
    %2171 = vmatmul.mubr.f32.gmra.mxu0 %v2080
    %v2172 = vpop.f32.mrf.mxu0
    %v2173 = vadd.f32 %v2104, %v2172
    %v2174 = vpop.f32.mrf.mxu0
    %2175 = vdwg.mxu0
    %v2176 = vtanh.pop %v2173
    %s2177 = scalar_lea.vmem [#allocation7], 2688
    %v2178 = vld [vmem:[%s2177] sm:$0xff]
    %v2179 = vld [vmem:[%s2177 + $0x8] sm:$0xff]
    %v2180 = vld [vmem:[%s2177 + $0x10] sm:$0xff]
    %v2181 = vld [vmem:[%s2177 + $0x18] sm:$0xff]
    %v2182 = vld [vmem:[%s2177 + $0x20] sm:$0xff]
    %v2183 = vld [vmem:[%s2177 + $0x28] sm:$0xff]
    %v2184 = vld [vmem:[%s2177 + $0x30] sm:$0xff]
    %v2185 = vld [vmem:[%s2177 + $0x38] sm:$0xff]
    %v2186 = vld [vmem:[%s2177 + $0x40] sm:$0xff]
    %v2187 = vld [vmem:[%s2177 + $0x48] sm:$0xff]
    %v2188 = vld [vmem:[%s2177 + $0x50] sm:$0xff]
    %v2189 = vld [vmem:[%s2177 + $0x58] sm:$0xff]
    %v2190 = vld [vmem:[%s2177 + $0x60] sm:$0xff]
    %v2191 = vld [vmem:[%s2177 + $0x68] sm:$0xff]
    %v2192 = vld [vmem:[%s2177 + $0x70] sm:$0xff]
    %v2193 = vld [vmem:[%s2177 + $0x78] sm:$0xff]
    %s2194 = scalar_lea.vmem [#allocation8], 22
    %v2195 = vld [vmem:[%s2194] sm:$0x1]
    %v2197 = vlaneseq
    %v2198 = vshrl.u32 %v2197, 7
    %v2199 = vsub.s32 0, %v2198
    %v2200 = vrot.slane %v2195, %v2199
    %2202 = vmatprep.subr.mxu0 0.0
    %2203 = vmatpush1.msra.mxu0 %v2193
    %2204 = vmatprep.subr.mxu0 0.0
    %2205 = vmatpush1.msra.mxu0 %v2192
    %2206 = vmatprep.subr.mxu0 0.0
    %2207 = vmatpush1.msra.mxu0 %v2191
    %2208 = vmatprep.subr.mxu0 0.0
    %2209 = vmatpush1.msra.mxu0 %v2190
    %2210 = vmatprep.subr.mxu0 0.0
    %2211 = vmatpush1.msra.mxu0 %v2189
    %2212 = vmatprep.subr.mxu0 0.0
    %2213 = vmatpush1.msra.mxu0 %v2188
    %2214 = vmatprep.subr.mxu0 0.0
    %2215 = vmatpush1.msra.mxu0 %v2187
    %2216 = vmatprep.subr.mxu0 0.0
    %2217 = vmatpush1.msra.mxu0 %v2186
    %2218 = vmatprep.subr.mxu0 0.0
    %2219 = vmatpush1.msra.mxu0 %v2185
    %2220 = vmatprep.subr.mxu0 0.0
    %2221 = vmatpush1.msra.mxu0 %v2184
    %2222 = vmatprep.subr.mxu0 0.0
    %2223 = vmatpush1.msra.mxu0 %v2183
    %2224 = vmatprep.subr.mxu0 0.0
    %2225 = vmatpush1.msra.mxu0 %v2182
    %2226 = vmatprep.subr.mxu0 0.0
    %2227 = vmatpush1.msra.mxu0 %v2181
    %2228 = vmatprep.subr.mxu0 0.0
    %2229 = vmatpush1.msra.mxu0 %v2180
    %2230 = vmatprep.subr.mxu0 0.0
    %2231 = vmatpush1.msra.mxu0 %v2179
    %2232 = vmatprep.subr.mxu0 0.0
    %2233 = vmatpush1.msra.mxu0 %v2178
    %2234 = vmatprep.subr.mxu0 0.0
    %2235 = vmatpush2.msra.mxu0 0.0
    %2236 = vmatprep.subr.mxu0 0.0
    %2237 = vmatpush2.msra.mxu0 0.0
    %2238 = vmatprep.subr.mxu0 0.0
    %2239 = vmatpush2.msra.mxu0 0.0
    %2240 = vmatprep.subr.mxu0 0.0
    %2241 = vmatpush2.msra.mxu0 0.0
    %2242 = vmatprep.subr.mxu0 0.0
    %2243 = vmatpush2.msra.mxu0 0.0
    %2244 = vmatprep.subr.mxu0 0.0
    %2245 = vmatpush2.msra.mxu0 0.0
    %2246 = vmatprep.subr.mxu0 0.0
    %2247 = vmatpush2.msra.mxu0 0.0
    %2248 = vmatprep.subr.mxu0 0.0
    %2249 = vmatpush2.msra.mxu0 0.0
    %2250 = vmatprep.subr.mxu0 0.0
    %2251 = vmatpush2.msra.mxu0 0.0
    %2252 = vmatprep.subr.mxu0 0.0
    %2253 = vmatpush2.msra.mxu0 0.0
    %2254 = vmatprep.subr.mxu0 0.0
    %2255 = vmatpush2.msra.mxu0 0.0
    %2256 = vmatprep.subr.mxu0 0.0
    %2257 = vmatpush2.msra.mxu0 0.0
    %2258 = vmatprep.subr.mxu0 0.0
    %2259 = vmatpush2.msra.mxu0 0.0
    %2260 = vmatprep.subr.mxu0 0.0
    %2261 = vmatpush2.msra.mxu0 0.0
    %2262 = vmatprep.subr.mxu0 0.0
    %2263 = vmatpush2.msra.mxu0 0.0
    %2264 = vmatprep.subr.mxu0 0.0
    %2265 = vmatpush2.msra.mxu0 0.0
    %2266 = vmatprep.mubr.f32.mxu0 0.0
    %2267 = vmatmul.mubr.f32.gmra.mxu0 %v2176
    %v2268 = vpop.f32.mrf.mxu0
    %v2269 = vadd.f32 %v2200, %v2268
    %v2270 = vpop.f32.mrf.mxu0
    %2271 = vdwg.mxu0
    %v2272 = vtanh.pop %v2269
    %s2273 = scalar_lea.vmem [#allocation7], 2816
    %v2274 = vld [vmem:[%s2273] sm:$0xff]
    %v2275 = vld [vmem:[%s2273 + $0x8] sm:$0xff]
    %v2276 = vld [vmem:[%s2273 + $0x10] sm:$0xff]
    %v2277 = vld [vmem:[%s2273 + $0x18] sm:$0xff]
    %v2278 = vld [vmem:[%s2273 + $0x20] sm:$0xff]
    %v2279 = vld [vmem:[%s2273 + $0x28] sm:$0xff]
    %v2280 = vld [vmem:[%s2273 + $0x30] sm:$0xff]
    %v2281 = vld [vmem:[%s2273 + $0x38] sm:$0xff]
    %v2282 = vld [vmem:[%s2273 + $0x40] sm:$0xff]
    %v2283 = vld [vmem:[%s2273 + $0x48] sm:$0xff]
    %v2284 = vld [vmem:[%s2273 + $0x50] sm:$0xff]
    %v2285 = vld [vmem:[%s2273 + $0x58] sm:$0xff]
    %v2286 = vld [vmem:[%s2273 + $0x60] sm:$0xff]
    %v2287 = vld [vmem:[%s2273 + $0x68] sm:$0xff]
    %v2288 = vld [vmem:[%s2273 + $0x70] sm:$0xff]
    %v2289 = vld [vmem:[%s2273 + $0x78] sm:$0xff]
    %s2290 = scalar_lea.vmem [#allocation8], 23
    %v2291 = vld [vmem:[%s2290] sm:$0x1]
    %v2293 = vlaneseq
    %v2294 = vshrl.u32 %v2293, 7
    %v2295 = vsub.s32 0, %v2294
    %v2296 = vrot.slane %v2291, %v2295
    %2298 = vmatprep.subr.mxu0 0.0
    %2299 = vmatpush1.msra.mxu0 %v2289
    %2300 = vmatprep.subr.mxu0 0.0
    %2301 = vmatpush1.msra.mxu0 %v2288
    %2302 = vmatprep.subr.mxu0 0.0
    %2303 = vmatpush1.msra.mxu0 %v2287
    %2304 = vmatprep.subr.mxu0 0.0
    %2305 = vmatpush1.msra.mxu0 %v2286
    %2306 = vmatprep.subr.mxu0 0.0
    %2307 = vmatpush1.msra.mxu0 %v2285
    %2308 = vmatprep.subr.mxu0 0.0
    %2309 = vmatpush1.msra.mxu0 %v2284
    %2310 = vmatprep.subr.mxu0 0.0
    %2311 = vmatpush1.msra.mxu0 %v2283
    %2312 = vmatprep.subr.mxu0 0.0
    %2313 = vmatpush1.msra.mxu0 %v2282
    %2314 = vmatprep.subr.mxu0 0.0
    %2315 = vmatpush1.msra.mxu0 %v2281
    %2316 = vmatprep.subr.mxu0 0.0
    %2317 = vmatpush1.msra.mxu0 %v2280
    %2318 = vmatprep.subr.mxu0 0.0
    %2319 = vmatpush1.msra.mxu0 %v2279
    %2320 = vmatprep.subr.mxu0 0.0
    %2321 = vmatpush1.msra.mxu0 %v2278
    %2322 = vmatprep.subr.mxu0 0.0
    %2323 = vmatpush1.msra.mxu0 %v2277
    %2324 = vmatprep.subr.mxu0 0.0
    %2325 = vmatpush1.msra.mxu0 %v2276
    %2326 = vmatprep.subr.mxu0 0.0
    %2327 = vmatpush1.msra.mxu0 %v2275
    %2328 = vmatprep.subr.mxu0 0.0
    %2329 = vmatpush1.msra.mxu0 %v2274
    %2330 = vmatprep.subr.mxu0 0.0
    %2331 = vmatpush2.msra.mxu0 0.0
    %2332 = vmatprep.subr.mxu0 0.0
    %2333 = vmatpush2.msra.mxu0 0.0
    %2334 = vmatprep.subr.mxu0 0.0
    %2335 = vmatpush2.msra.mxu0 0.0
    %2336 = vmatprep.subr.mxu0 0.0
    %2337 = vmatpush2.msra.mxu0 0.0
    %2338 = vmatprep.subr.mxu0 0.0
    %2339 = vmatpush2.msra.mxu0 0.0
    %2340 = vmatprep.subr.mxu0 0.0
    %2341 = vmatpush2.msra.mxu0 0.0
    %2342 = vmatprep.subr.mxu0 0.0
    %2343 = vmatpush2.msra.mxu0 0.0
    %2344 = vmatprep.subr.mxu0 0.0
    %2345 = vmatpush2.msra.mxu0 0.0
    %2346 = vmatprep.subr.mxu0 0.0
    %2347 = vmatpush2.msra.mxu0 0.0
    %2348 = vmatprep.subr.mxu0 0.0
    %2349 = vmatpush2.msra.mxu0 0.0
    %2350 = vmatprep.subr.mxu0 0.0
    %2351 = vmatpush2.msra.mxu0 0.0
    %2352 = vmatprep.subr.mxu0 0.0
    %2353 = vmatpush2.msra.mxu0 0.0
    %2354 = vmatprep.subr.mxu0 0.0
    %2355 = vmatpush2.msra.mxu0 0.0
    %2356 = vmatprep.subr.mxu0 0.0
    %2357 = vmatpush2.msra.mxu0 0.0
    %2358 = vmatprep.subr.mxu0 0.0
    %2359 = vmatpush2.msra.mxu0 0.0
    %2360 = vmatprep.subr.mxu0 0.0
    %2361 = vmatpush2.msra.mxu0 0.0
    %2362 = vmatprep.mubr.f32.mxu0 0.0
    %2363 = vmatmul.mubr.f32.gmra.mxu0 %v2272
    %v2364 = vpop.f32.mrf.mxu0
    %v2365 = vadd.f32 %v2296, %v2364
    %v2366 = vpop.f32.mrf.mxu0
    %2367 = vdwg.mxu0
    %v2368 = vtanh.pop %v2365
    %s2369 = scalar_lea.vmem [#allocation7], 2944
    %v2370 = vld [vmem:[%s2369] sm:$0xff]
    %v2371 = vld [vmem:[%s2369 + $0x8] sm:$0xff]
    %v2372 = vld [vmem:[%s2369 + $0x10] sm:$0xff]
    %v2373 = vld [vmem:[%s2369 + $0x18] sm:$0xff]
    %v2374 = vld [vmem:[%s2369 + $0x20] sm:$0xff]
    %v2375 = vld [vmem:[%s2369 + $0x28] sm:$0xff]
    %v2376 = vld [vmem:[%s2369 + $0x30] sm:$0xff]
    %v2377 = vld [vmem:[%s2369 + $0x38] sm:$0xff]
    %v2378 = vld [vmem:[%s2369 + $0x40] sm:$0xff]
    %v2379 = vld [vmem:[%s2369 + $0x48] sm:$0xff]
    %v2380 = vld [vmem:[%s2369 + $0x50] sm:$0xff]
    %v2381 = vld [vmem:[%s2369 + $0x58] sm:$0xff]
    %v2382 = vld [vmem:[%s2369 + $0x60] sm:$0xff]
    %v2383 = vld [vmem:[%s2369 + $0x68] sm:$0xff]
    %v2384 = vld [vmem:[%s2369 + $0x70] sm:$0xff]
    %v2385 = vld [vmem:[%s2369 + $0x78] sm:$0xff]
    %s2386 = scalar_lea.vmem [#allocation8], 24
    %v2387 = vld [vmem:[%s2386] sm:$0x1]
    %v2389 = vlaneseq
    %v2390 = vshrl.u32 %v2389, 7
    %v2391 = vsub.s32 0, %v2390
    %v2392 = vrot.slane %v2387, %v2391
    %2394 = vmatprep.subr.mxu0 0.0
    %2395 = vmatpush1.msra.mxu0 %v2385
    %2396 = vmatprep.subr.mxu0 0.0
    %2397 = vmatpush1.msra.mxu0 %v2384
    %2398 = vmatprep.subr.mxu0 0.0
    %2399 = vmatpush1.msra.mxu0 %v2383
    %2400 = vmatprep.subr.mxu0 0.0
    %2401 = vmatpush1.msra.mxu0 %v2382
    %2402 = vmatprep.subr.mxu0 0.0
    %2403 = vmatpush1.msra.mxu0 %v2381
    %2404 = vmatprep.subr.mxu0 0.0
    %2405 = vmatpush1.msra.mxu0 %v2380
    %2406 = vmatprep.subr.mxu0 0.0
    %2407 = vmatpush1.msra.mxu0 %v2379
    %2408 = vmatprep.subr.mxu0 0.0
    %2409 = vmatpush1.msra.mxu0 %v2378
    %2410 = vmatprep.subr.mxu0 0.0
    %2411 = vmatpush1.msra.mxu0 %v2377
    %2412 = vmatprep.subr.mxu0 0.0
    %2413 = vmatpush1.msra.mxu0 %v2376
    %2414 = vmatprep.subr.mxu0 0.0
    %2415 = vmatpush1.msra.mxu0 %v2375
    %2416 = vmatprep.subr.mxu0 0.0
    %2417 = vmatpush1.msra.mxu0 %v2374
    %2418 = vmatprep.subr.mxu0 0.0
    %2419 = vmatpush1.msra.mxu0 %v2373
    %2420 = vmatprep.subr.mxu0 0.0
    %2421 = vmatpush1.msra.mxu0 %v2372
    %2422 = vmatprep.subr.mxu0 0.0
    %2423 = vmatpush1.msra.mxu0 %v2371
    %2424 = vmatprep.subr.mxu0 0.0
    %2425 = vmatpush1.msra.mxu0 %v2370
    %2426 = vmatprep.subr.mxu0 0.0
    %2427 = vmatpush2.msra.mxu0 0.0
    %2428 = vmatprep.subr.mxu0 0.0
    %2429 = vmatpush2.msra.mxu0 0.0
    %2430 = vmatprep.subr.mxu0 0.0
    %2431 = vmatpush2.msra.mxu0 0.0
    %2432 = vmatprep.subr.mxu0 0.0
    %2433 = vmatpush2.msra.mxu0 0.0
    %2434 = vmatprep.subr.mxu0 0.0
    %2435 = vmatpush2.msra.mxu0 0.0
    %2436 = vmatprep.subr.mxu0 0.0
    %2437 = vmatpush2.msra.mxu0 0.0
    %2438 = vmatprep.subr.mxu0 0.0
    %2439 = vmatpush2.msra.mxu0 0.0
    %2440 = vmatprep.subr.mxu0 0.0
    %2441 = vmatpush2.msra.mxu0 0.0
    %2442 = vmatprep.subr.mxu0 0.0
    %2443 = vmatpush2.msra.mxu0 0.0
    %2444 = vmatprep.subr.mxu0 0.0
    %2445 = vmatpush2.msra.mxu0 0.0
    %2446 = vmatprep.subr.mxu0 0.0
    %2447 = vmatpush2.msra.mxu0 0.0
    %2448 = vmatprep.subr.mxu0 0.0
    %2449 = vmatpush2.msra.mxu0 0.0
    %2450 = vmatprep.subr.mxu0 0.0
    %2451 = vmatpush2.msra.mxu0 0.0
    %2452 = vmatprep.subr.mxu0 0.0
    %2453 = vmatpush2.msra.mxu0 0.0
    %2454 = vmatprep.subr.mxu0 0.0
    %2455 = vmatpush2.msra.mxu0 0.0
    %2456 = vmatprep.subr.mxu0 0.0
    %2457 = vmatpush2.msra.mxu0 0.0
    %2458 = vmatprep.mubr.f32.mxu0 0.0
    %2459 = vmatmul.mubr.f32.gmra.mxu0 %v2368
    %v2460 = vpop.f32.mrf.mxu0
    %v2461 = vadd.f32 %v2392, %v2460
    %v2462 = vpop.f32.mrf.mxu0
    %2463 = vdwg.mxu0
    %v2464 = vtanh.pop %v2461
    %s2465 = scalar_lea.vmem [#allocation7], 3072
    %v2466 = vld [vmem:[%s2465] sm:$0xff]
    %v2467 = vld [vmem:[%s2465 + $0x8] sm:$0xff]
    %v2468 = vld [vmem:[%s2465 + $0x10] sm:$0xff]
    %v2469 = vld [vmem:[%s2465 + $0x18] sm:$0xff]
    %v2470 = vld [vmem:[%s2465 + $0x20] sm:$0xff]
    %v2471 = vld [vmem:[%s2465 + $0x28] sm:$0xff]
    %v2472 = vld [vmem:[%s2465 + $0x30] sm:$0xff]
    %v2473 = vld [vmem:[%s2465 + $0x38] sm:$0xff]
    %v2474 = vld [vmem:[%s2465 + $0x40] sm:$0xff]
    %v2475 = vld [vmem:[%s2465 + $0x48] sm:$0xff]
    %v2476 = vld [vmem:[%s2465 + $0x50] sm:$0xff]
    %v2477 = vld [vmem:[%s2465 + $0x58] sm:$0xff]
    %v2478 = vld [vmem:[%s2465 + $0x60] sm:$0xff]
    %v2479 = vld [vmem:[%s2465 + $0x68] sm:$0xff]
    %v2480 = vld [vmem:[%s2465 + $0x70] sm:$0xff]
    %v2481 = vld [vmem:[%s2465 + $0x78] sm:$0xff]
    %s2482 = scalar_lea.vmem [#allocation8], 25
    %v2483 = vld [vmem:[%s2482] sm:$0x1]
    %v2485 = vlaneseq
    %v2486 = vshrl.u32 %v2485, 7
    %v2487 = vsub.s32 0, %v2486
    %v2488 = vrot.slane %v2483, %v2487
    %2490 = vmatprep.subr.mxu0 0.0
    %2491 = vmatpush1.msra.mxu0 %v2481
    %2492 = vmatprep.subr.mxu0 0.0
    %2493 = vmatpush1.msra.mxu0 %v2480
    %2494 = vmatprep.subr.mxu0 0.0
    %2495 = vmatpush1.msra.mxu0 %v2479
    %2496 = vmatprep.subr.mxu0 0.0
    %2497 = vmatpush1.msra.mxu0 %v2478
    %2498 = vmatprep.subr.mxu0 0.0
    %2499 = vmatpush1.msra.mxu0 %v2477
    %2500 = vmatprep.subr.mxu0 0.0
    %2501 = vmatpush1.msra.mxu0 %v2476
    %2502 = vmatprep.subr.mxu0 0.0
    %2503 = vmatpush1.msra.mxu0 %v2475
    %2504 = vmatprep.subr.mxu0 0.0
    %2505 = vmatpush1.msra.mxu0 %v2474
    %2506 = vmatprep.subr.mxu0 0.0
    %2507 = vmatpush1.msra.mxu0 %v2473
    %2508 = vmatprep.subr.mxu0 0.0
    %2509 = vmatpush1.msra.mxu0 %v2472
    %2510 = vmatprep.subr.mxu0 0.0
    %2511 = vmatpush1.msra.mxu0 %v2471
    %2512 = vmatprep.subr.mxu0 0.0
    %2513 = vmatpush1.msra.mxu0 %v2470
    %2514 = vmatprep.subr.mxu0 0.0
    %2515 = vmatpush1.msra.mxu0 %v2469
    %2516 = vmatprep.subr.mxu0 0.0
    %2517 = vmatpush1.msra.mxu0 %v2468
    %2518 = vmatprep.subr.mxu0 0.0
    %2519 = vmatpush1.msra.mxu0 %v2467
    %2520 = vmatprep.subr.mxu0 0.0
    %2521 = vmatpush1.msra.mxu0 %v2466
    %2522 = vmatprep.subr.mxu0 0.0
    %2523 = vmatpush2.msra.mxu0 0.0
    %2524 = vmatprep.subr.mxu0 0.0
    %2525 = vmatpush2.msra.mxu0 0.0
    %2526 = vmatprep.subr.mxu0 0.0
    %2527 = vmatpush2.msra.mxu0 0.0
    %2528 = vmatprep.subr.mxu0 0.0
    %2529 = vmatpush2.msra.mxu0 0.0
    %2530 = vmatprep.subr.mxu0 0.0
    %2531 = vmatpush2.msra.mxu0 0.0
    %2532 = vmatprep.subr.mxu0 0.0
    %2533 = vmatpush2.msra.mxu0 0.0
    %2534 = vmatprep.subr.mxu0 0.0
    %2535 = vmatpush2.msra.mxu0 0.0
    %2536 = vmatprep.subr.mxu0 0.0
    %2537 = vmatpush2.msra.mxu0 0.0
    %2538 = vmatprep.subr.mxu0 0.0
    %2539 = vmatpush2.msra.mxu0 0.0
    %2540 = vmatprep.subr.mxu0 0.0
    %2541 = vmatpush2.msra.mxu0 0.0
    %2542 = vmatprep.subr.mxu0 0.0
    %2543 = vmatpush2.msra.mxu0 0.0
    %2544 = vmatprep.subr.mxu0 0.0
    %2545 = vmatpush2.msra.mxu0 0.0
    %2546 = vmatprep.subr.mxu0 0.0
    %2547 = vmatpush2.msra.mxu0 0.0
    %2548 = vmatprep.subr.mxu0 0.0
    %2549 = vmatpush2.msra.mxu0 0.0
    %2550 = vmatprep.subr.mxu0 0.0
    %2551 = vmatpush2.msra.mxu0 0.0
    %2552 = vmatprep.subr.mxu0 0.0
    %2553 = vmatpush2.msra.mxu0 0.0
    %2554 = vmatprep.mubr.f32.mxu0 0.0
    %2555 = vmatmul.mubr.f32.gmra.mxu0 %v2464
    %v2556 = vpop.f32.mrf.mxu0
    %v2557 = vadd.f32 %v2488, %v2556
    %v2558 = vpop.f32.mrf.mxu0
    %2559 = vdwg.mxu0
    %v2560 = vtanh.pop %v2557
    %s2561 = scalar_lea.vmem [#allocation7], 3200
    %v2562 = vld [vmem:[%s2561] sm:$0xff]
    %v2563 = vld [vmem:[%s2561 + $0x8] sm:$0xff]
    %v2564 = vld [vmem:[%s2561 + $0x10] sm:$0xff]
    %v2565 = vld [vmem:[%s2561 + $0x18] sm:$0xff]
    %v2566 = vld [vmem:[%s2561 + $0x20] sm:$0xff]
    %v2567 = vld [vmem:[%s2561 + $0x28] sm:$0xff]
    %v2568 = vld [vmem:[%s2561 + $0x30] sm:$0xff]
    %v2569 = vld [vmem:[%s2561 + $0x38] sm:$0xff]
    %v2570 = vld [vmem:[%s2561 + $0x40] sm:$0xff]
    %v2571 = vld [vmem:[%s2561 + $0x48] sm:$0xff]
    %v2572 = vld [vmem:[%s2561 + $0x50] sm:$0xff]
    %v2573 = vld [vmem:[%s2561 + $0x58] sm:$0xff]
    %v2574 = vld [vmem:[%s2561 + $0x60] sm:$0xff]
    %v2575 = vld [vmem:[%s2561 + $0x68] sm:$0xff]
    %v2576 = vld [vmem:[%s2561 + $0x70] sm:$0xff]
    %v2577 = vld [vmem:[%s2561 + $0x78] sm:$0xff]
    %s2578 = scalar_lea.vmem [#allocation8], 26
    %v2579 = vld [vmem:[%s2578] sm:$0x1]
    %v2581 = vlaneseq
    %v2582 = vshrl.u32 %v2581, 7
    %v2583 = vsub.s32 0, %v2582
    %v2584 = vrot.slane %v2579, %v2583
    %2586 = vmatprep.subr.mxu0 0.0
    %2587 = vmatpush1.msra.mxu0 %v2577
    %2588 = vmatprep.subr.mxu0 0.0
    %2589 = vmatpush1.msra.mxu0 %v2576
    %2590 = vmatprep.subr.mxu0 0.0
    %2591 = vmatpush1.msra.mxu0 %v2575
    %2592 = vmatprep.subr.mxu0 0.0
    %2593 = vmatpush1.msra.mxu0 %v2574
    %2594 = vmatprep.subr.mxu0 0.0
    %2595 = vmatpush1.msra.mxu0 %v2573
    %2596 = vmatprep.subr.mxu0 0.0
    %2597 = vmatpush1.msra.mxu0 %v2572
    %2598 = vmatprep.subr.mxu0 0.0
    %2599 = vmatpush1.msra.mxu0 %v2571
    %2600 = vmatprep.subr.mxu0 0.0
    %2601 = vmatpush1.msra.mxu0 %v2570
    %2602 = vmatprep.subr.mxu0 0.0
    %2603 = vmatpush1.msra.mxu0 %v2569
    %2604 = vmatprep.subr.mxu0 0.0
    %2605 = vmatpush1.msra.mxu0 %v2568
    %2606 = vmatprep.subr.mxu0 0.0
    %2607 = vmatpush1.msra.mxu0 %v2567
    %2608 = vmatprep.subr.mxu0 0.0
    %2609 = vmatpush1.msra.mxu0 %v2566
    %2610 = vmatprep.subr.mxu0 0.0
    %2611 = vmatpush1.msra.mxu0 %v2565
    %2612 = vmatprep.subr.mxu0 0.0
    %2613 = vmatpush1.msra.mxu0 %v2564
    %2614 = vmatprep.subr.mxu0 0.0
    %2615 = vmatpush1.msra.mxu0 %v2563
    %2616 = vmatprep.subr.mxu0 0.0
    %2617 = vmatpush1.msra.mxu0 %v2562
    %2618 = vmatprep.subr.mxu0 0.0
    %2619 = vmatpush2.msra.mxu0 0.0
    %2620 = vmatprep.subr.mxu0 0.0
    %2621 = vmatpush2.msra.mxu0 0.0
    %2622 = vmatprep.subr.mxu0 0.0
    %2623 = vmatpush2.msra.mxu0 0.0
    %2624 = vmatprep.subr.mxu0 0.0
    %2625 = vmatpush2.msra.mxu0 0.0
    %2626 = vmatprep.subr.mxu0 0.0
    %2627 = vmatpush2.msra.mxu0 0.0
    %2628 = vmatprep.subr.mxu0 0.0
    %2629 = vmatpush2.msra.mxu0 0.0
    %2630 = vmatprep.subr.mxu0 0.0
    %2631 = vmatpush2.msra.mxu0 0.0
    %2632 = vmatprep.subr.mxu0 0.0
    %2633 = vmatpush2.msra.mxu0 0.0
    %2634 = vmatprep.subr.mxu0 0.0
    %2635 = vmatpush2.msra.mxu0 0.0
    %2636 = vmatprep.subr.mxu0 0.0
    %2637 = vmatpush2.msra.mxu0 0.0
    %2638 = vmatprep.subr.mxu0 0.0
    %2639 = vmatpush2.msra.mxu0 0.0
    %2640 = vmatprep.subr.mxu0 0.0
    %2641 = vmatpush2.msra.mxu0 0.0
    %2642 = vmatprep.subr.mxu0 0.0
    %2643 = vmatpush2.msra.mxu0 0.0
    %2644 = vmatprep.subr.mxu0 0.0
    %2645 = vmatpush2.msra.mxu0 0.0
    %2646 = vmatprep.subr.mxu0 0.0
    %2647 = vmatpush2.msra.mxu0 0.0
    %2648 = vmatprep.subr.mxu0 0.0
    %2649 = vmatpush2.msra.mxu0 0.0
    %2650 = vmatprep.mubr.f32.mxu0 0.0
    %2651 = vmatmul.mubr.f32.gmra.mxu0 %v2560
    %v2652 = vpop.f32.mrf.mxu0
    %v2653 = vadd.f32 %v2584, %v2652
    %v2654 = vpop.f32.mrf.mxu0
    %2655 = vdwg.mxu0
    %v2656 = vtanh.pop %v2653
    %s2657 = scalar_lea.vmem [#allocation7], 3328
    %v2658 = vld [vmem:[%s2657] sm:$0xff]
    %v2659 = vld [vmem:[%s2657 + $0x8] sm:$0xff]
    %v2660 = vld [vmem:[%s2657 + $0x10] sm:$0xff]
    %v2661 = vld [vmem:[%s2657 + $0x18] sm:$0xff]
    %v2662 = vld [vmem:[%s2657 + $0x20] sm:$0xff]
    %v2663 = vld [vmem:[%s2657 + $0x28] sm:$0xff]
    %v2664 = vld [vmem:[%s2657 + $0x30] sm:$0xff]
    %v2665 = vld [vmem:[%s2657 + $0x38] sm:$0xff]
    %v2666 = vld [vmem:[%s2657 + $0x40] sm:$0xff]
    %v2667 = vld [vmem:[%s2657 + $0x48] sm:$0xff]
    %v2668 = vld [vmem:[%s2657 + $0x50] sm:$0xff]
    %v2669 = vld [vmem:[%s2657 + $0x58] sm:$0xff]
    %v2670 = vld [vmem:[%s2657 + $0x60] sm:$0xff]
    %v2671 = vld [vmem:[%s2657 + $0x68] sm:$0xff]
    %v2672 = vld [vmem:[%s2657 + $0x70] sm:$0xff]
    %v2673 = vld [vmem:[%s2657 + $0x78] sm:$0xff]
    %s2674 = scalar_lea.vmem [#allocation8], 27
    %v2675 = vld [vmem:[%s2674] sm:$0x1]
    %v2677 = vlaneseq
    %v2678 = vshrl.u32 %v2677, 7
    %v2679 = vsub.s32 0, %v2678
    %v2680 = vrot.slane %v2675, %v2679
    %2682 = vmatprep.subr.mxu0 0.0
    %2683 = vmatpush1.msra.mxu0 %v2673
    %2684 = vmatprep.subr.mxu0 0.0
    %2685 = vmatpush1.msra.mxu0 %v2672
    %2686 = vmatprep.subr.mxu0 0.0
    %2687 = vmatpush1.msra.mxu0 %v2671
    %2688 = vmatprep.subr.mxu0 0.0
    %2689 = vmatpush1.msra.mxu0 %v2670
    %2690 = vmatprep.subr.mxu0 0.0
    %2691 = vmatpush1.msra.mxu0 %v2669
    %2692 = vmatprep.subr.mxu0 0.0
    %2693 = vmatpush1.msra.mxu0 %v2668
    %2694 = vmatprep.subr.mxu0 0.0
    %2695 = vmatpush1.msra.mxu0 %v2667
    %2696 = vmatprep.subr.mxu0 0.0
    %2697 = vmatpush1.msra.mxu0 %v2666
    %2698 = vmatprep.subr.mxu0 0.0
    %2699 = vmatpush1.msra.mxu0 %v2665
    %2700 = vmatprep.subr.mxu0 0.0
    %2701 = vmatpush1.msra.mxu0 %v2664
    %2702 = vmatprep.subr.mxu0 0.0
    %2703 = vmatpush1.msra.mxu0 %v2663
    %2704 = vmatprep.subr.mxu0 0.0
    %2705 = vmatpush1.msra.mxu0 %v2662
    %2706 = vmatprep.subr.mxu0 0.0
    %2707 = vmatpush1.msra.mxu0 %v2661
    %2708 = vmatprep.subr.mxu0 0.0
    %2709 = vmatpush1.msra.mxu0 %v2660
    %2710 = vmatprep.subr.mxu0 0.0
    %2711 = vmatpush1.msra.mxu0 %v2659
    %2712 = vmatprep.subr.mxu0 0.0
    %2713 = vmatpush1.msra.mxu0 %v2658
    %2714 = vmatprep.subr.mxu0 0.0
    %2715 = vmatpush2.msra.mxu0 0.0
    %2716 = vmatprep.subr.mxu0 0.0
    %2717 = vmatpush2.msra.mxu0 0.0
    %2718 = vmatprep.subr.mxu0 0.0
    %2719 = vmatpush2.msra.mxu0 0.0
    %2720 = vmatprep.subr.mxu0 0.0
    %2721 = vmatpush2.msra.mxu0 0.0
    %2722 = vmatprep.subr.mxu0 0.0
    %2723 = vmatpush2.msra.mxu0 0.0
    %2724 = vmatprep.subr.mxu0 0.0
    %2725 = vmatpush2.msra.mxu0 0.0
    %2726 = vmatprep.subr.mxu0 0.0
    %2727 = vmatpush2.msra.mxu0 0.0
    %2728 = vmatprep.subr.mxu0 0.0
    %2729 = vmatpush2.msra.mxu0 0.0
    %2730 = vmatprep.subr.mxu0 0.0
    %2731 = vmatpush2.msra.mxu0 0.0
    %2732 = vmatprep.subr.mxu0 0.0
    %2733 = vmatpush2.msra.mxu0 0.0
    %2734 = vmatprep.subr.mxu0 0.0
    %2735 = vmatpush2.msra.mxu0 0.0
    %2736 = vmatprep.subr.mxu0 0.0
    %2737 = vmatpush2.msra.mxu0 0.0
    %2738 = vmatprep.subr.mxu0 0.0
    %2739 = vmatpush2.msra.mxu0 0.0
    %2740 = vmatprep.subr.mxu0 0.0
    %2741 = vmatpush2.msra.mxu0 0.0
    %2742 = vmatprep.subr.mxu0 0.0
    %2743 = vmatpush2.msra.mxu0 0.0
    %2744 = vmatprep.subr.mxu0 0.0
    %2745 = vmatpush2.msra.mxu0 0.0
    %2746 = vmatprep.mubr.f32.mxu0 0.0
    %2747 = vmatmul.mubr.f32.gmra.mxu0 %v2656
    %v2748 = vpop.f32.mrf.mxu0
    %v2749 = vadd.f32 %v2680, %v2748
    %v2750 = vpop.f32.mrf.mxu0
    %2751 = vdwg.mxu0
    %v2752 = vtanh.pop %v2749
    %s2753 = scalar_lea.vmem [#allocation7], 3456
    %v2754 = vld [vmem:[%s2753] sm:$0xff]
    %v2755 = vld [vmem:[%s2753 + $0x8] sm:$0xff]
    %v2756 = vld [vmem:[%s2753 + $0x10] sm:$0xff]
    %v2757 = vld [vmem:[%s2753 + $0x18] sm:$0xff]
    %v2758 = vld [vmem:[%s2753 + $0x20] sm:$0xff]
    %v2759 = vld [vmem:[%s2753 + $0x28] sm:$0xff]
    %v2760 = vld [vmem:[%s2753 + $0x30] sm:$0xff]
    %v2761 = vld [vmem:[%s2753 + $0x38] sm:$0xff]
    %v2762 = vld [vmem:[%s2753 + $0x40] sm:$0xff]
    %v2763 = vld [vmem:[%s2753 + $0x48] sm:$0xff]
    %v2764 = vld [vmem:[%s2753 + $0x50] sm:$0xff]
    %v2765 = vld [vmem:[%s2753 + $0x58] sm:$0xff]
    %v2766 = vld [vmem:[%s2753 + $0x60] sm:$0xff]
    %v2767 = vld [vmem:[%s2753 + $0x68] sm:$0xff]
    %v2768 = vld [vmem:[%s2753 + $0x70] sm:$0xff]
    %v2769 = vld [vmem:[%s2753 + $0x78] sm:$0xff]
    %s2770 = scalar_lea.vmem [#allocation8], 28
    %v2771 = vld [vmem:[%s2770] sm:$0x1]
    %v2773 = vlaneseq
    %v2774 = vshrl.u32 %v2773, 7
    %v2775 = vsub.s32 0, %v2774
    %v2776 = vrot.slane %v2771, %v2775
    %2778 = vmatprep.subr.mxu0 0.0
    %2779 = vmatpush1.msra.mxu0 %v2769
    %2780 = vmatprep.subr.mxu0 0.0
    %2781 = vmatpush1.msra.mxu0 %v2768
    %2782 = vmatprep.subr.mxu0 0.0
    %2783 = vmatpush1.msra.mxu0 %v2767
    %2784 = vmatprep.subr.mxu0 0.0
    %2785 = vmatpush1.msra.mxu0 %v2766
    %2786 = vmatprep.subr.mxu0 0.0
    %2787 = vmatpush1.msra.mxu0 %v2765
    %2788 = vmatprep.subr.mxu0 0.0
    %2789 = vmatpush1.msra.mxu0 %v2764
    %2790 = vmatprep.subr.mxu0 0.0
    %2791 = vmatpush1.msra.mxu0 %v2763
    %2792 = vmatprep.subr.mxu0 0.0
    %2793 = vmatpush1.msra.mxu0 %v2762
    %2794 = vmatprep.subr.mxu0 0.0
    %2795 = vmatpush1.msra.mxu0 %v2761
    %2796 = vmatprep.subr.mxu0 0.0
    %2797 = vmatpush1.msra.mxu0 %v2760
    %2798 = vmatprep.subr.mxu0 0.0
    %2799 = vmatpush1.msra.mxu0 %v2759
    %2800 = vmatprep.subr.mxu0 0.0
    %2801 = vmatpush1.msra.mxu0 %v2758
    %2802 = vmatprep.subr.mxu0 0.0
    %2803 = vmatpush1.msra.mxu0 %v2757
    %2804 = vmatprep.subr.mxu0 0.0
    %2805 = vmatpush1.msra.mxu0 %v2756
    %2806 = vmatprep.subr.mxu0 0.0
    %2807 = vmatpush1.msra.mxu0 %v2755
    %2808 = vmatprep.subr.mxu0 0.0
    %2809 = vmatpush1.msra.mxu0 %v2754
    %2810 = vmatprep.subr.mxu0 0.0
    %2811 = vmatpush2.msra.mxu0 0.0
    %2812 = vmatprep.subr.mxu0 0.0
    %2813 = vmatpush2.msra.mxu0 0.0
    %2814 = vmatprep.subr.mxu0 0.0
    %2815 = vmatpush2.msra.mxu0 0.0
    %2816 = vmatprep.subr.mxu0 0.0
    %2817 = vmatpush2.msra.mxu0 0.0
    %2818 = vmatprep.subr.mxu0 0.0
    %2819 = vmatpush2.msra.mxu0 0.0
    %2820 = vmatprep.subr.mxu0 0.0
    %2821 = vmatpush2.msra.mxu0 0.0
    %2822 = vmatprep.subr.mxu0 0.0
    %2823 = vmatpush2.msra.mxu0 0.0
    %2824 = vmatprep.subr.mxu0 0.0
    %2825 = vmatpush2.msra.mxu0 0.0
    %2826 = vmatprep.subr.mxu0 0.0
    %2827 = vmatpush2.msra.mxu0 0.0
    %2828 = vmatprep.subr.mxu0 0.0
    %2829 = vmatpush2.msra.mxu0 0.0
    %2830 = vmatprep.subr.mxu0 0.0
    %2831 = vmatpush2.msra.mxu0 0.0
    %2832 = vmatprep.subr.mxu0 0.0
    %2833 = vmatpush2.msra.mxu0 0.0
    %2834 = vmatprep.subr.mxu0 0.0
    %2835 = vmatpush2.msra.mxu0 0.0
    %2836 = vmatprep.subr.mxu0 0.0
    %2837 = vmatpush2.msra.mxu0 0.0
    %2838 = vmatprep.subr.mxu0 0.0
    %2839 = vmatpush2.msra.mxu0 0.0
    %2840 = vmatprep.subr.mxu0 0.0
    %2841 = vmatpush2.msra.mxu0 0.0
    %2842 = vmatprep.mubr.f32.mxu0 0.0
    %2843 = vmatmul.mubr.f32.gmra.mxu0 %v2752
    %v2844 = vpop.f32.mrf.mxu0
    %v2845 = vadd.f32 %v2776, %v2844
    %v2846 = vpop.f32.mrf.mxu0
    %2847 = vdwg.mxu0
    %v2848 = vtanh.pop %v2845
    %s2849 = scalar_lea.vmem [#allocation7], 3584
    %v2850 = vld [vmem:[%s2849] sm:$0xff]
    %v2851 = vld [vmem:[%s2849 + $0x8] sm:$0xff]
    %v2852 = vld [vmem:[%s2849 + $0x10] sm:$0xff]
    %v2853 = vld [vmem:[%s2849 + $0x18] sm:$0xff]
    %v2854 = vld [vmem:[%s2849 + $0x20] sm:$0xff]
    %v2855 = vld [vmem:[%s2849 + $0x28] sm:$0xff]
    %v2856 = vld [vmem:[%s2849 + $0x30] sm:$0xff]
    %v2857 = vld [vmem:[%s2849 + $0x38] sm:$0xff]
    %v2858 = vld [vmem:[%s2849 + $0x40] sm:$0xff]
    %v2859 = vld [vmem:[%s2849 + $0x48] sm:$0xff]
    %v2860 = vld [vmem:[%s2849 + $0x50] sm:$0xff]
    %v2861 = vld [vmem:[%s2849 + $0x58] sm:$0xff]
    %v2862 = vld [vmem:[%s2849 + $0x60] sm:$0xff]
    %v2863 = vld [vmem:[%s2849 + $0x68] sm:$0xff]
    %v2864 = vld [vmem:[%s2849 + $0x70] sm:$0xff]
    %v2865 = vld [vmem:[%s2849 + $0x78] sm:$0xff]
    %s2866 = scalar_lea.vmem [#allocation8], 29
    %v2867 = vld [vmem:[%s2866] sm:$0x1]
    %v2869 = vlaneseq
    %v2870 = vshrl.u32 %v2869, 7
    %v2871 = vsub.s32 0, %v2870
    %v2872 = vrot.slane %v2867, %v2871
    %2874 = vmatprep.subr.mxu0 0.0
    %2875 = vmatpush1.msra.mxu0 %v2865
    %2876 = vmatprep.subr.mxu0 0.0
    %2877 = vmatpush1.msra.mxu0 %v2864
    %2878 = vmatprep.subr.mxu0 0.0
    %2879 = vmatpush1.msra.mxu0 %v2863
    %2880 = vmatprep.subr.mxu0 0.0
    %2881 = vmatpush1.msra.mxu0 %v2862
    %2882 = vmatprep.subr.mxu0 0.0
    %2883 = vmatpush1.msra.mxu0 %v2861
    %2884 = vmatprep.subr.mxu0 0.0
    %2885 = vmatpush1.msra.mxu0 %v2860
    %2886 = vmatprep.subr.mxu0 0.0
    %2887 = vmatpush1.msra.mxu0 %v2859
    %2888 = vmatprep.subr.mxu0 0.0
    %2889 = vmatpush1.msra.mxu0 %v2858
    %2890 = vmatprep.subr.mxu0 0.0
    %2891 = vmatpush1.msra.mxu0 %v2857
    %2892 = vmatprep.subr.mxu0 0.0
    %2893 = vmatpush1.msra.mxu0 %v2856
    %2894 = vmatprep.subr.mxu0 0.0
    %2895 = vmatpush1.msra.mxu0 %v2855
    %2896 = vmatprep.subr.mxu0 0.0
    %2897 = vmatpush1.msra.mxu0 %v2854
    %2898 = vmatprep.subr.mxu0 0.0
    %2899 = vmatpush1.msra.mxu0 %v2853
    %2900 = vmatprep.subr.mxu0 0.0
    %2901 = vmatpush1.msra.mxu0 %v2852
    %2902 = vmatprep.subr.mxu0 0.0
    %2903 = vmatpush1.msra.mxu0 %v2851
    %2904 = vmatprep.subr.mxu0 0.0
    %2905 = vmatpush1.msra.mxu0 %v2850
    %2906 = vmatprep.subr.mxu0 0.0
    %2907 = vmatpush2.msra.mxu0 0.0
    %2908 = vmatprep.subr.mxu0 0.0
    %2909 = vmatpush2.msra.mxu0 0.0
    %2910 = vmatprep.subr.mxu0 0.0
    %2911 = vmatpush2.msra.mxu0 0.0
    %2912 = vmatprep.subr.mxu0 0.0
    %2913 = vmatpush2.msra.mxu0 0.0
    %2914 = vmatprep.subr.mxu0 0.0
    %2915 = vmatpush2.msra.mxu0 0.0
    %2916 = vmatprep.subr.mxu0 0.0
    %2917 = vmatpush2.msra.mxu0 0.0
    %2918 = vmatprep.subr.mxu0 0.0
    %2919 = vmatpush2.msra.mxu0 0.0
    %2920 = vmatprep.subr.mxu0 0.0
    %2921 = vmatpush2.msra.mxu0 0.0
    %2922 = vmatprep.subr.mxu0 0.0
    %2923 = vmatpush2.msra.mxu0 0.0
    %2924 = vmatprep.subr.mxu0 0.0
    %2925 = vmatpush2.msra.mxu0 0.0
    %2926 = vmatprep.subr.mxu0 0.0
    %2927 = vmatpush2.msra.mxu0 0.0
    %2928 = vmatprep.subr.mxu0 0.0
    %2929 = vmatpush2.msra.mxu0 0.0
    %2930 = vmatprep.subr.mxu0 0.0
    %2931 = vmatpush2.msra.mxu0 0.0
    %2932 = vmatprep.subr.mxu0 0.0
    %2933 = vmatpush2.msra.mxu0 0.0
    %2934 = vmatprep.subr.mxu0 0.0
    %2935 = vmatpush2.msra.mxu0 0.0
    %2936 = vmatprep.subr.mxu0 0.0
    %2937 = vmatpush2.msra.mxu0 0.0
    %2938 = vmatprep.mubr.f32.mxu0 0.0
    %2939 = vmatmul.mubr.f32.gmra.mxu0 %v2848
    %v2940 = vpop.f32.mrf.mxu0
    %v2941 = vadd.f32 %v2872, %v2940
    %v2942 = vpop.f32.mrf.mxu0
    %2943 = vdwg.mxu0
    %v2944 = vtanh.pop %v2941
    %s2945 = scalar_lea.vmem [#allocation7], 3712
    %v2946 = vld [vmem:[%s2945] sm:$0xff]
    %v2947 = vld [vmem:[%s2945 + $0x8] sm:$0xff]
    %v2948 = vld [vmem:[%s2945 + $0x10] sm:$0xff]
    %v2949 = vld [vmem:[%s2945 + $0x18] sm:$0xff]
    %v2950 = vld [vmem:[%s2945 + $0x20] sm:$0xff]
    %v2951 = vld [vmem:[%s2945 + $0x28] sm:$0xff]
    %v2952 = vld [vmem:[%s2945 + $0x30] sm:$0xff]
    %v2953 = vld [vmem:[%s2945 + $0x38] sm:$0xff]
    %v2954 = vld [vmem:[%s2945 + $0x40] sm:$0xff]
    %v2955 = vld [vmem:[%s2945 + $0x48] sm:$0xff]
    %v2956 = vld [vmem:[%s2945 + $0x50] sm:$0xff]
    %v2957 = vld [vmem:[%s2945 + $0x58] sm:$0xff]
    %v2958 = vld [vmem:[%s2945 + $0x60] sm:$0xff]
    %v2959 = vld [vmem:[%s2945 + $0x68] sm:$0xff]
    %v2960 = vld [vmem:[%s2945 + $0x70] sm:$0xff]
    %v2961 = vld [vmem:[%s2945 + $0x78] sm:$0xff]
    %s2962 = scalar_lea.vmem [#allocation8], 30
    %v2963 = vld [vmem:[%s2962] sm:$0x1]
    %v2965 = vlaneseq
    %v2966 = vshrl.u32 %v2965, 7
    %v2967 = vsub.s32 0, %v2966
    %v2968 = vrot.slane %v2963, %v2967
    %2970 = vmatprep.subr.mxu0 0.0
    %2971 = vmatpush1.msra.mxu0 %v2961
    %2972 = vmatprep.subr.mxu0 0.0
    %2973 = vmatpush1.msra.mxu0 %v2960
    %2974 = vmatprep.subr.mxu0 0.0
    %2975 = vmatpush1.msra.mxu0 %v2959
    %2976 = vmatprep.subr.mxu0 0.0
    %2977 = vmatpush1.msra.mxu0 %v2958
    %2978 = vmatprep.subr.mxu0 0.0
    %2979 = vmatpush1.msra.mxu0 %v2957
    %2980 = vmatprep.subr.mxu0 0.0
    %2981 = vmatpush1.msra.mxu0 %v2956
    %2982 = vmatprep.subr.mxu0 0.0
    %2983 = vmatpush1.msra.mxu0 %v2955
    %2984 = vmatprep.subr.mxu0 0.0
    %2985 = vmatpush1.msra.mxu0 %v2954
    %2986 = vmatprep.subr.mxu0 0.0
    %2987 = vmatpush1.msra.mxu0 %v2953
    %2988 = vmatprep.subr.mxu0 0.0
    %2989 = vmatpush1.msra.mxu0 %v2952
    %2990 = vmatprep.subr.mxu0 0.0
    %2991 = vmatpush1.msra.mxu0 %v2951
    %2992 = vmatprep.subr.mxu0 0.0
    %2993 = vmatpush1.msra.mxu0 %v2950
    %2994 = vmatprep.subr.mxu0 0.0
    %2995 = vmatpush1.msra.mxu0 %v2949
    %2996 = vmatprep.subr.mxu0 0.0
    %2997 = vmatpush1.msra.mxu0 %v2948
    %2998 = vmatprep.subr.mxu0 0.0
    %2999 = vmatpush1.msra.mxu0 %v2947
    %3000 = vmatprep.subr.mxu0 0.0
    %3001 = vmatpush1.msra.mxu0 %v2946
    %3002 = vmatprep.subr.mxu0 0.0
    %3003 = vmatpush2.msra.mxu0 0.0
    %3004 = vmatprep.subr.mxu0 0.0
    %3005 = vmatpush2.msra.mxu0 0.0
    %3006 = vmatprep.subr.mxu0 0.0
    %3007 = vmatpush2.msra.mxu0 0.0
    %3008 = vmatprep.subr.mxu0 0.0
    %3009 = vmatpush2.msra.mxu0 0.0
    %3010 = vmatprep.subr.mxu0 0.0
    %3011 = vmatpush2.msra.mxu0 0.0
    %3012 = vmatprep.subr.mxu0 0.0
    %3013 = vmatpush2.msra.mxu0 0.0
    %3014 = vmatprep.subr.mxu0 0.0
    %3015 = vmatpush2.msra.mxu0 0.0
    %3016 = vmatprep.subr.mxu0 0.0
    %3017 = vmatpush2.msra.mxu0 0.0
    %3018 = vmatprep.subr.mxu0 0.0
    %3019 = vmatpush2.msra.mxu0 0.0
    %3020 = vmatprep.subr.mxu0 0.0
    %3021 = vmatpush2.msra.mxu0 0.0
    %3022 = vmatprep.subr.mxu0 0.0
    %3023 = vmatpush2.msra.mxu0 0.0
    %3024 = vmatprep.subr.mxu0 0.0
    %3025 = vmatpush2.msra.mxu0 0.0
    %3026 = vmatprep.subr.mxu0 0.0
    %3027 = vmatpush2.msra.mxu0 0.0
    %3028 = vmatprep.subr.mxu0 0.0
    %3029 = vmatpush2.msra.mxu0 0.0
    %3030 = vmatprep.subr.mxu0 0.0
    %3031 = vmatpush2.msra.mxu0 0.0
    %3032 = vmatprep.subr.mxu0 0.0
    %3033 = vmatpush2.msra.mxu0 0.0
    %3034 = vmatprep.mubr.f32.mxu0 0.0
    %3035 = vmatmul.mubr.f32.gmra.mxu0 %v2944
    %v3036 = vpop.f32.mrf.mxu0
    %v3037 = vadd.f32 %v2968, %v3036
    %v3038 = vpop.f32.mrf.mxu0
    %3039 = vdwg.mxu0
    %3040 = vst [vmem:[#allocation10] sm:$0xff] %v3037
    // Predicated region
    $region34: #{tpu_custom_call.1} parent=1 // pred_check
      _
    $region35: #{tpu_custom_call.1} parent=1 // pred_check_branch
      %3042 = sbr.rel (0) target = $region37
    $region36: #{tpu_custom_call.1} parent=1 // pred_region
      %s3044 = ssub.s32 128, 128
      %3045 = vsyncadd [#allocation4], %s3044
      %s3047 = sshll.u32 [#allocation10], 4
      %s3048 = int_to_ptr.vmem [resolvable:$true] %s3047
      %3050 = dma.vmem_to_hbm [thread:$0]  %s3048, 128, %s4, [#allocation4]
    $region37: #{tpu_custom_call.1} parent=1 // pred_fallthru
      _
    // Predicated region
    $region38: #{tpu_custom_call.1} parent=1 // pred_check
      _
    $region39: #{tpu_custom_call.1} parent=1 // pred_check_branch
      %3052 = sbr.rel (0) target = $region41
    $region40: #{tpu_custom_call.1} parent=1 // pred_region
      %3053 = dma.done [#allocation4], 128
    $region41: #{tpu_custom_call.1} parent=1 // pred_fallthru
      _
    %3054 = vsyncpa [#allocation3], 1
    %3055 = vsyncpa [#allocation6], 1
    %3056 = vsyncpa [#allocation9], 1
    %3057 = vsyncpa [#allocation4], 1

</llo_original>
